<compile_context>
chip_gen: v7x
topology: tpu7x:2x2x1
jax: 0.10.0
libtpu: 0.0.40
codegen_flags: <defaults>
</compile_context>

<pallas_src>
import jax
import jax.numpy as jnp
from jax.experimental import pallas as pl
from jax.experimental.pallas import tpu as pltpu


def _round_up(x, m):
    return (x + m - 1) // m * m


# ----------------------------------------------------------------------------
# Kernel 1: char CNN (K shifted-slice taps, K accumulating dots, in-kernel max pool)
# ----------------------------------------------------------------------------
def char_cnn_kernel(x_ref, w_ref, b_ref, o_ref):
    # x_ref: (Tw, Lw+2P, Cc)  zero-padded char embeddings for Tw words
    # w_ref: (K, Cc, Cc)      conv taps
    # b_ref: (1, Cc)
    # o_ref: (Tw, Cc)         max-pooled char feature per word
    Tw, Lp, Cc = x_ref.shape
    K = w_ref.shape[0]
    Lw = Lp - (K - 1)

    x = x_ref[...]                                    # one VMEM read of the padded block
    acc = jnp.zeros((Tw * Lw, Cc), jnp.float32)
    for k in range(K):                                # K static taps, unrolled
        xk = x[:, k:k + Lw, :].reshape(Tw * Lw, Cc)
        acc = acc + jnp.dot(xk, w_ref[k], preferred_element_type=jnp.float32)
    acc = acc + b_ref[...]
    o_ref[...] = jnp.max(acc.reshape(Tw, Lw, Cc), axis=1)


def char_cnn(char_emb, conv_w, conv_b):
    # char_emb: (BS, Lw, Cc)  ->  (BS, Cc)
    BS, Lw, Cc = char_emb.shape
    K = conv_w.shape[0]
    P = (K - 1) // 2

    Tw = min(512, _round_up(BS, 8))                   # big word tile -> few grid steps
    BS_pad = _round_up(BS, Tw)

    # pad word count (grid tiling) and char positions (conv padding); no im2col copy.
    x = jnp.pad(char_emb, ((0, BS_pad - BS), (P, P), (0, 0)))

    out = pl.pallas_call(
        char_cnn_kernel,
        out_shape=jax.ShapeDtypeStruct((BS_pad, Cc), jnp.float32),
        grid_spec=pltpu.PrefetchScalarGridSpec(
            num_scalar_prefetch=0,
            grid=(BS_pad // Tw,),
            in_specs=[
                pl.BlockSpec((Tw, Lw + 2 * P, Cc), lambda i: (i, 0, 0)),
                pl.BlockSpec((K, Cc, Cc), lambda i: (0, 0, 0)),
                pl.BlockSpec((1, Cc), lambda i: (0, 0)),
            ],
            out_specs=pl.BlockSpec((Tw, Cc), lambda i: (i, 0)),
        ),
        compiler_params=pltpu.CompilerParams(
            dimension_semantics=("parallel",)),
    )(x, conv_w, conv_b)
    return out[:BS]


# ----------------------------------------------------------------------------
# Kernel 2: fused bidirectional LSTM recurrence, time-chunked grid,
#           backward reversal via index maps, per-direction state scratch.
# ----------------------------------------------------------------------------
def lstm_kernel(gx_ref, len_ref, whh_ref, o_ref, h_sc, c_sc):
    # gx_ref:  (1, Tt, B, 4H) precomputed x @ W_ih + b for direction d, time-chunk j
    #                         (for d=1 this is the chunk at reversed position)
    # len_ref: (B, 1)         float lengths (constant block, DMA'd once)
    # whh_ref: (1, H, 4H)     recurrent weights of direction d
    # o_ref:   (1, Tt, B, H)  hidden outputs, written at original time positions
    # h_sc/c_sc: (2, B, H)    explicit per-direction state scratch
    d = pl.program_id(0)
    j = pl.program_id(1)
    nt = pl.num_programs(1)
    _, Tt, B, G = gx_ref.shape
    H = G // 4
    S_total = nt * Tt

    @pl.when(j == 0)
    def _():
        h_sc[d] = jnp.zeros((B, H), jnp.float32)
        c_sc[d] = jnp.zeros((B, H), jnp.float32)

    lens = len_ref[...]                         # (B, 1)
    whh = whh_ref[0]                            # (H, 4H), hoisted out of the time loop

    def step(s, carry):
        h, c = carry
        # forward walks the chunk 0..Tt-1; backward walks it Tt-1..0
        s_eff = jnp.where(d == 0, s, Tt - 1 - s)
        t_pos = j * Tt + s                      # position in this direction's order
        t_orig = jnp.where(d == 0, t_pos, S_total - 1 - t_pos)

        gates = gx_ref[0, s_eff] + jnp.dot(h, whh,
                                           preferred_element_type=jnp.float32)
        # PyTorch gate order: i, f, g, o
        i_g = jax.nn.sigmoid(gates[:, 0:H])
        f_g = jax.nn.sigmoid(gates[:, H:2 * H])
        g_g = jnp.tanh(gates[:, 2 * H:3 * H])
        o_g = jax.nn.sigmoid(gates[:, 3 * H:4 * H])
        c_cand = f_g * c + i_g * g_g
        h_cand = o_g * jnp.tanh(c_cand)

        m = (lens > t_orig.astype(jnp.float32)).astype(jnp.float32)   # (B, 1)
        c_new = m * c_cand + (1.0 - m) * c
        h_new = m * h_cand + (1.0 - m) * h
        # padded steps emit 0 (pad_packed_sequence); valid steps emit h_new
        o_ref[0, s_eff] = h_new * m
        return h_new, c_new

    h_f, c_f = jax.lax.fori_loop(0, Tt, step, (h_sc[d], c_sc[d]))
    h_sc[d] = h_f
    c_sc[d] = c_f


def run_bilstm(gx, len_col, whh, Tt):
    # gx: (2, S_pad, B, 4H)  len_col: (B, 1)  whh: (2, H, 4H)  ->  (2, S_pad, B, H)
    _, S_pad, B, G = gx.shape
    H = whh.shape[1]
    nt = S_pad // Tt

    # forward reads/writes chunk j; backward reads/writes chunk nt-1-j
    def chunk_map_in(d, t):
        return (d, d * (nt - 1 - t) + (1 - d) * t, 0, 0)

    return pl.pallas_call(
        lstm_kernel,
        out_shape=jax.ShapeDtypeStruct((2, S_pad, B, H), jnp.float32),
        grid_spec=pltpu.PrefetchScalarGridSpec(
            num_scalar_prefetch=0,
            grid=(2, nt),
            in_specs=[
                pl.BlockSpec((1, Tt, B, G), chunk_map_in),
                pl.BlockSpec((B, 1), lambda d, t: (0, 0)),
                pl.BlockSpec((1, H, G), lambda d, t: (d, 0, 0)),
            ],
            out_specs=pl.BlockSpec((1, Tt, B, H), chunk_map_in),
            scratch_shapes=[pltpu.VMEM((2, B, H), jnp.float32),
                            pltpu.VMEM((2, B, H), jnp.float32)],
        ),
        compiler_params=pltpu.CompilerParams(
            # direction axis is independent (per-direction scratch); time is sequential
            dimension_semantics=("parallel", "arbitrary")),
    )(gx, len_col, whh)


# ----------------------------------------------------------------------------
# Kernel 3: CRF negative log-likelihood, batch-on-lanes recursion,
#           transitions/start/end as SMEM scalars, per-tile partial losses.
# ----------------------------------------------------------------------------
def crf_kernel(trans_ref, start_ref, end_ref, e_ref, tag_ref, len_ref, o_ref):
    # trans_ref: SMEM (C, C)   start_ref/end_ref: SMEM (C,)
    # e_ref:   (S, C, Tb)  emissions, batch on lanes
    # tag_ref: (S, C, Tb)  one-hot gold tags, batch on lanes
    # len_ref: (1, Tb)     float lengths
    # o_ref:   (1, 1, 1)   per-batch-tile NLL partial
    S, C, Tb = e_ref.shape

    # hoist SMEM scalars once (loop-invariant scalar operands)
    trans = [[trans_ref[i, j] for j in range(C)] for i in range(C)]
    start = [start_ref[c] for c in range(C)]
    end = [end_ref[c] for c in range(C)]

    lens = len_ref[...]                               # (1, Tb)
    valid = (lens > 0.0).astype(jnp.float32)          # excludes padded / empty rows

    e0 = e_ref[0]                                     # (C, Tb)
    tag0 = tag_ref[0]
    alpha0 = tuple(start[c] + e0[c:c + 1, :] for c in range(C))
    prev0 = tuple(tag0[c:c + 1, :] for c in range(C))
    gold0 = alpha0[0] * prev0[0]
    for c in range(1, C):
        gold0 = gold0 + alpha0[c] * prev0[c]

    def body(t, carry):
        alpha, gold, prev = carry                     # tuples of (1, Tb) rows
        e_t = e_ref[t]                                # (C, Tb)
        tag_t = tag_ref[t]
        m = (lens > t.astype(jnp.float32)).astype(jnp.float32)    # (1, Tb)
        mb = m > 0.0

        # forward recursion: alpha'[j] = logsumexp_i(alpha[i] + trans[i,j]) + e[j]
        # (max-shift covers alpha + trans; all ops are full-lane VPU/EUP)
        new_alpha = []
        for j in range(C):
            terms = [alpha[i] + trans[i][j] for i in range(C)]
            mx = terms[0]
            for tm in terms[1:]:
                mx = jnp.maximum(mx, tm)
            ssum = jnp.exp(terms[0] - mx)
            for tm in terms[1:]:
                ssum = ssum + jnp.exp(tm - mx)
            new_alpha.append(mx + jnp.log(ssum) + e_t[j:j + 1, :])
        alpha = tuple(jnp.where(mb, new_alpha[c], alpha[c]) for c in range(C))

        # gold path score: transition prev->tag_t plus emission at tag_t
        tr = jnp.zeros_like(gold)
        for i in range(C):
            for j in range(C):
                tr = tr + trans[i][j] * prev[i] * tag_t[j:j + 1, :]
        em = jnp.zeros_like(gold)
        for j in range(C):
            em = em + e_t[j:j + 1, :] * tag_t[j:j + 1, :]
        gold = gold + m * (tr + em)
        prev = tuple(jnp.where(mb, tag_t[c:c + 1, :], prev[c]) for c in range(C))
        return alpha, gold, prev

    alpha, gold, prev = jax.lax.fori_loop(1, S, body, (alpha0, gold0, prev0))

    # log partition with end scores
    final = [alpha[c] + end[c] for c in range(C)]
    mx = final[0]
    for f in final[1:]:
        mx = jnp.maximum(mx, f)
    ssum = jnp.exp(final[0] - mx)
    for f in final[1:]:
        ssum = ssum + jnp.exp(f - mx)
    logz = mx + jnp.log(ssum)                         # (1, Tb)
    for c in range(C):
        gold = gold + end[c] * prev[c]

    nll = (logz - gold) * valid                       # (1, Tb)
    o_ref[0] = jnp.sum(nll, axis=-1, keepdims=True)   # per-tile partial


def crf_loss(emit, tags_scb, len_row, params):
    # emit: (S, C, Bp)  tags_scb: (S, C, Bp)  len_row: (1, Bp)  ->  scalar NLL
    S, C, Bp = emit.shape
    # batch sits on the lane axis: tile it only at lane-aligned multiples
    Tb = 128 if (Bp % 128 == 0) else Bp
    ntiles = Bp // Tb

    partial = pl.pallas_call(
        crf_kernel,
        out_shape=jax.ShapeDtypeStruct((ntiles, 1, 1), jnp.float32),
        grid_spec=pltpu.PrefetchScalarGridSpec(
            num_scalar_prefetch=0,
            grid=(ntiles,),
            in_specs=[
                pl.BlockSpec(memory_space=pltpu.MemorySpace.SMEM),   # trans (C, C)
                pl.BlockSpec(memory_space=pltpu.MemorySpace.SMEM),   # start (C,)
                pl.BlockSpec(memory_space=pltpu.MemorySpace.SMEM),   # end   (C,)
                pl.BlockSpec((S, C, Tb), lambda b: (0, 0, b)),
                pl.BlockSpec((S, C, Tb), lambda b: (0, 0, b)),
                pl.BlockSpec((1, Tb), lambda b: (0, b)),
            ],
            out_specs=pl.BlockSpec((1, 1, 1), lambda b: (b, 0, 0)),
        ),
        compiler_params=pltpu.CompilerParams(
            dimension_semantics=("parallel",)),       # independent per-tile partials
    )(params["trans"], params["start"].reshape(C), params["end"].reshape(C),
      emit, tags_scb, len_row)
    return jnp.sum(partial)


# ----------------------------------------------------------------------------
# Glue: embedding lookups, hoisted projections, parameter init
# ----------------------------------------------------------------------------
@jax.jit
def model_forward(params, word_ids, char_ids, lengths, tags):
    B, S = word_ids.shape
    Lw = char_ids.shape[2]
    C = params["trans"].shape[0]

    # --- CNN char features ---
    char_emb = jnp.take(params["char_emb"], char_ids.reshape(B * S, Lw), axis=0)
    char_feat = char_cnn(char_emb, params["conv_w"], params["conv_b"]).reshape(B, S, -1)

    # --- word embedding + concat ---
    word_feat = jnp.take(params["word_emb"], word_ids, axis=0)
    x = jnp.concatenate([char_feat, word_feat], axis=-1)          # (B, S, Cc+Dw)

    # pad batch to a sublane multiple and time to a multiple of the LSTM chunk
    B_pad = _round_up(B, 8)
    Tt = min(32, _round_up(S, 8))
    S_pad = _round_up(S, Tt)
    x = jnp.pad(x, ((0, B_pad - B), (0, S_pad - S), (0, 0)))
    lengths_f = jnp.pad(lengths, (0, B_pad - B)).astype(jnp.float32)
    tags_p = jnp.pad(tags, ((0, B_pad - B), (0, 0)))

    # --- BiLSTM: input projection hoisted to XLA GEMMs; both directions read x in
    #     original order (backward reversal lives in the kernel's index maps) ---
    gx_f = jnp.einsum("bsd,dg->sbg", x, params["w_ih_f"]) + params["b_f"]
    gx_b = jnp.einsum("bsd,dg->sbg", x, params["w_ih_b"]) + params["b_b"]
    gx = jnp.stack([gx_f, gx_b], axis=0)                          # (2, S_pad, B_pad, 4H)
    whh = jnp.stack([params["w_hh_f"], params["w_hh_b"]], axis=0)  # (2, H, 4H)

    h_dirs = run_bilstm(gx, lengths_f[:, None], whh, Tt)          # (2, S_pad, B_pad, H)
    h_tm = jnp.concatenate([h_dirs[0], h_dirs[1]], axis=-1)[:S]   # (S, B_pad, 2H)

    # --- CRF: lane-dense emission projection (one XLA GEMM), recursion in Pallas ---
    emit = jnp.einsum("sbh,hc->scb", h_tm, params["we"]) + params["be"].reshape(1, C, 1)
    tags_scb = jnp.transpose(jax.nn.one_hot(tags_p, C, dtype=jnp.float32), (1, 2, 0))
    return crf_loss(emit, tags_scb, lengths_f[None, :], params)


def init_params(key, *, char_vocab=30, word_vocab=50, Cc=32, Dw=16, H=32,
                K=5, C=4):
    ks = jax.random.split(key, 16)
    Din = Cc + Dw
    n = lambda k, s: (0.1 * jax.random.normal(k, s)).astype(jnp.float32)
    return {
        "char_emb": n(ks[0], (char_vocab, Cc)),
        "conv_w":   n(ks[1], (K, Cc, Cc)),
        "conv_b":   n(ks[2], (1, Cc)),
        "word_emb": n(ks[3], (word_vocab, Dw)),
        "w_ih_f":   n(ks[4], (Din, 4 * H)),
        "w_hh_f":   n(ks[5], (H, 4 * H)),
        "b_f":      n(ks[6], (1, 4 * H)),
        "w_ih_b":   n(ks[7], (Din, 4 * H)),
        "w_hh_b":   n(ks[8], (H, 4 * H)),
        "b_b":      n(ks[9], (1, 4 * H)),
        "we":       n(ks[10], (2 * H, C)),
        "be":       n(ks[11], (1, C)),
        "trans":    n(ks[12], (C, C)),
        "start":    n(ks[13], (1, C)),
        "end":      n(ks[14], (1, C)),
    }


if __name__ == "__main__":
    key = jax.random.PRNGKey(0)
    pkey, dkey = jax.random.split(key)

    B, S, Lw, C = 2, 8, 8, 4
    params = init_params(pkey)

    k1, k2, k3 = jax.random.split(dkey, 3)
    lengths = jnp.array([8, 5], dtype=jnp.int32)                  # sorted descending
    word_ids = jax.random.randint(k1, (B, S), 1, 50).astype(jnp.int32)
    word_ids = jnp.where(jnp.arange(S)[None, :] < lengths[:, None], word_ids, 0)
    char_ids = jax.random.randint(k2, (B, S, Lw), 1, 30).astype(jnp.int32)
    tags = jax.random.randint(k3, (B, S), 0, C).astype(jnp.int32)

    loss = model_forward(params, word_ids, char_ids, lengths, tags)
    loss = jax.block_until_ready(loss)
    assert bool(jnp.isfinite(loss)), "non-finite CRF loss"
    print("KERNEL_OK")
</pallas_src>

<mosaic_0001>
module attributes {stable_mosaic.version = 11 : i64} {
  func.func @char_cnn_kernel(%arg0: i32, %arg1: memref<16x12x32xf32, #tpu.memory_space<vmem>>, %arg2: memref<5x32x32xf32, #tpu.memory_space<vmem>>, %arg3: memref<1x32xf32, #tpu.memory_space<vmem>>, %arg4: memref<16x32xf32, #tpu.memory_space<vmem>>) attributes {dimension_semantics = [#tpu.dimension_semantics<parallel>], iteration_bounds = array<i64: 1>, scalar_prefetch = 0 : i64, scratch_operands = 0 : i64, tpu.core_type = #tpu.core_type<tc>, window_params = [{transform_indices = @transform_0, window_bounds = array<i64: 16, 12, 32>}, {pipeline_mode = #tpu.pipeline_mode<synchronous>, transform_indices = @transform_1, window_bounds = array<i64: 5, 32, 32>}, {pipeline_mode = #tpu.pipeline_mode<synchronous>, transform_indices = @transform_2, window_bounds = array<i64: 1, 32>}, {transform_indices = @transform_3, window_bounds = array<i64: 16, 32>}]} {
    %c0 = arith.constant 0 : index
    %c0_0 = arith.constant 0 : index
    %c0_1 = arith.constant 0 : index
    %0 = vector.load %arg1[%c0, %c0_0, %c0_1] : memref<16x12x32xf32, #tpu.memory_space<vmem>>, vector<16x12x32xf32>
    %cst = arith.constant 0.000000e+00 : f32
    %1 = vector.broadcast %cst : f32 to vector<128x32xf32>
    %2 = vector.extract_strided_slice %0 {offsets = [0, 0, 0], sizes = [16, 8, 32], strides = [1, 1, 1]} : vector<16x12x32xf32> to vector<16x8x32xf32>
    %3 = vector.shape_cast %2 : vector<16x8x32xf32> to vector<128x32xf32>
    %c0_2 = arith.constant 0 : index
    %c0_3 = arith.constant 0 : index
    %c0_4 = arith.constant 0 : index
    %4 = vector.load %arg2[%c0_2, %c0_3, %c0_4] : memref<5x32x32xf32, #tpu.memory_space<vmem>>, vector<1x32x32xf32>
    %5 = vector.shape_cast %4 : vector<1x32x32xf32> to vector<32x32xf32>
    %cst_5 = arith.constant dense<0.000000e+00> : vector<128x32xf32>
    %6 = tpu.matmul %3, %5, %cst_5 {dimension_numbers = #tpu.dot_dimension_numbers<[1], [0], [0], [1], [0, 0, 1, 1], [], []>} : vector<128x32xf32>, vector<32x32xf32>, vector<128x32xf32> -> vector<128x32xf32>
    %7 = arith.addf %1, %6 : vector<128x32xf32>
    %8 = vector.extract_strided_slice %0 {offsets = [0, 1, 0], sizes = [16, 8, 32], strides = [1, 1, 1]} : vector<16x12x32xf32> to vector<16x8x32xf32>
    %9 = vector.shape_cast %8 : vector<16x8x32xf32> to vector<128x32xf32>
    %c1 = arith.constant 1 : index
    %c0_6 = arith.constant 0 : index
    %c0_7 = arith.constant 0 : index
    %10 = vector.load %arg2[%c1, %c0_6, %c0_7] : memref<5x32x32xf32, #tpu.memory_space<vmem>>, vector<1x32x32xf32>
    %11 = vector.shape_cast %10 : vector<1x32x32xf32> to vector<32x32xf32>
    %cst_8 = arith.constant dense<0.000000e+00> : vector<128x32xf32>
    %12 = tpu.matmul %9, %11, %cst_8 {dimension_numbers = #tpu.dot_dimension_numbers<[1], [0], [0], [1], [0, 0, 1, 1], [], []>} : vector<128x32xf32>, vector<32x32xf32>, vector<128x32xf32> -> vector<128x32xf32>
    %13 = arith.addf %7, %12 : vector<128x32xf32>
    %14 = vector.extract_strided_slice %0 {offsets = [0, 2, 0], sizes = [16, 8, 32], strides = [1, 1, 1]} : vector<16x12x32xf32> to vector<16x8x32xf32>
    %15 = vector.shape_cast %14 : vector<16x8x32xf32> to vector<128x32xf32>
    %c2 = arith.constant 2 : index
    %c0_9 = arith.constant 0 : index
    %c0_10 = arith.constant 0 : index
    %16 = vector.load %arg2[%c2, %c0_9, %c0_10] : memref<5x32x32xf32, #tpu.memory_space<vmem>>, vector<1x32x32xf32>
    %17 = vector.shape_cast %16 : vector<1x32x32xf32> to vector<32x32xf32>
    %cst_11 = arith.constant dense<0.000000e+00> : vector<128x32xf32>
    %18 = tpu.matmul %15, %17, %cst_11 {dimension_numbers = #tpu.dot_dimension_numbers<[1], [0], [0], [1], [0, 0, 1, 1], [], []>} : vector<128x32xf32>, vector<32x32xf32>, vector<128x32xf32> -> vector<128x32xf32>
    %19 = arith.addf %13, %18 : vector<128x32xf32>
    %20 = vector.extract_strided_slice %0 {offsets = [0, 3, 0], sizes = [16, 8, 32], strides = [1, 1, 1]} : vector<16x12x32xf32> to vector<16x8x32xf32>
    %21 = vector.shape_cast %20 : vector<16x8x32xf32> to vector<128x32xf32>
    %c3 = arith.constant 3 : index
    %c0_12 = arith.constant 0 : index
    %c0_13 = arith.constant 0 : index
    %22 = vector.load %arg2[%c3, %c0_12, %c0_13] : memref<5x32x32xf32, #tpu.memory_space<vmem>>, vector<1x32x32xf32>
    %23 = vector.shape_cast %22 : vector<1x32x32xf32> to vector<32x32xf32>
    %cst_14 = arith.constant dense<0.000000e+00> : vector<128x32xf32>
    %24 = tpu.matmul %21, %23, %cst_14 {dimension_numbers = #tpu.dot_dimension_numbers<[1], [0], [0], [1], [0, 0, 1, 1], [], []>} : vector<128x32xf32>, vector<32x32xf32>, vector<128x32xf32> -> vector<128x32xf32>
    %25 = arith.addf %19, %24 : vector<128x32xf32>
    %26 = vector.extract_strided_slice %0 {offsets = [0, 4, 0], sizes = [16, 8, 32], strides = [1, 1, 1]} : vector<16x12x32xf32> to vector<16x8x32xf32>
    %27 = vector.shape_cast %26 : vector<16x8x32xf32> to vector<128x32xf32>
    %c4 = arith.constant 4 : index
    %c0_15 = arith.constant 0 : index
    %c0_16 = arith.constant 0 : index
    %28 = vector.load %arg2[%c4, %c0_15, %c0_16] : memref<5x32x32xf32, #tpu.memory_space<vmem>>, vector<1x32x32xf32>
    %29 = vector.shape_cast %28 : vector<1x32x32xf32> to vector<32x32xf32>
    %cst_17 = arith.constant dense<0.000000e+00> : vector<128x32xf32>
    %30 = tpu.matmul %27, %29, %cst_17 {dimension_numbers = #tpu.dot_dimension_numbers<[1], [0], [0], [1], [0, 0, 1, 1], [], []>} : vector<128x32xf32>, vector<32x32xf32>, vector<128x32xf32> -> vector<128x32xf32>
    %31 = arith.addf %25, %30 : vector<128x32xf32>
    %c0_18 = arith.constant 0 : index
    %c0_19 = arith.constant 0 : index
    %32 = vector.load %arg3[%c0_18, %c0_19] : memref<1x32xf32, #tpu.memory_space<vmem>>, vector<1x32xf32>
    %33 = vector.broadcast %32 : vector<1x32xf32> to vector<128x32xf32>
    %34 = arith.addf %31, %33 : vector<128x32xf32>
    %35 = vector.shape_cast %34 : vector<128x32xf32> to vector<16x8x32xf32>
    %cst_20 = arith.constant dense<0xFF800000> : vector<16x32xf32>
    %36 = vector.multi_reduction <maximumf>, %35, %cst_20 [1] : vector<16x8x32xf32> to vector<16x32xf32>
    %c0_21 = arith.constant 0 : index
    %c0_22 = arith.constant 0 : index
    %37 = vector.load %arg4[%c0_21, %c0_22] : memref<16x32xf32, #tpu.memory_space<vmem>>, vector<16x32xf32>
    tpu.vector_store %arg4[%c0_21, %c0_22], %36 {strides = array<i32>} : memref<16x32xf32, #tpu.memory_space<vmem>>, vector<16x32xf32>,
    return
  }
  func.func @transform_0(%arg0: i32) -> (i32, i32, i32) {
    %c0_i32 = arith.constant 0 : i32
    %c0_i32_0 = arith.constant 0 : i32
    %c0_i32_1 = arith.constant 0 : i32
    return %arg0, %c0_i32, %c0_i32_0 : i32, i32, i32
  }
  func.func @transform_1(%arg0: i32) -> (i32, i32, i32) {
    %c0_i32 = arith.constant 0 : i32
    %c0_i32_0 = arith.constant 0 : i32
    %c0_i32_1 = arith.constant 0 : i32
    %c0_i32_2 = arith.constant 0 : i32
    return %c0_i32, %c0_i32_0, %c0_i32_1 : i32, i32, i32
  }
  func.func @transform_2(%arg0: i32) -> (i32, i32) {
    %c0_i32 = arith.constant 0 : i32
    %c0_i32_0 = arith.constant 0 : i32
    %c0_i32_1 = arith.constant 0 : i32
    return %c0_i32, %c0_i32_0 : i32, i32
  }
  func.func @transform_3(%arg0: i32) -> (i32, i32) {
    %c0_i32 = arith.constant 0 : i32
    %c0_i32_0 = arith.constant 0 : i32
    return %arg0, %c0_i32 : i32, i32
  }
}

module attributes {stable_mosaic.version = 11 : i64} {
  func.func @lstm_kernel(%arg0: i32, %arg1: i32, %arg2: memref<1x8x8x128xf32, #tpu.memory_space<vmem>>, %arg3: memref<8x1xf32, #tpu.memory_space<vmem>>, %arg4: memref<1x32x128xf32, #tpu.memory_space<vmem>>, %arg5: memref<1x8x8x32xf32, #tpu.memory_space<vmem>>, %arg6: memref<2x8x32xf32, #tpu.memory_space<vmem>>, %arg7: memref<2x8x32xf32, #tpu.memory_space<vmem>>) attributes {dimension_semantics = [#tpu.dimension_semantics<parallel>, #tpu.dimension_semantics<arbitrary>], iteration_bounds = array<i64: 2, 1>, scalar_prefetch = 0 : i64, scratch_operands = 2 : i64, tpu.core_type = #tpu.core_type<tc>, window_params = [{transform_indices = @transform_0, window_bounds = array<i64: 1, 8, 8, 128>}, {pipeline_mode = #tpu.pipeline_mode<synchronous>, transform_indices = @transform_1, window_bounds = array<i64: 8, 1>}, {transform_indices = @transform_2, window_bounds = array<i64: 1, 32, 128>}, {transform_indices = @transform_3, window_bounds = array<i64: 1, 8, 8, 32>}]} {
    %c0_i32 = arith.constant 0 : i32
    %0 = arith.cmpi eq, %arg1, %c0_i32 : i32
    %1 = arith.extui %0 : i1 to i32
    %c0_i32_0 = arith.constant 0 : i32
    %2 = arith.cmpi ne, %1, %c0_i32_0 : i32
    scf.if %2 {
      %cst = arith.constant 0.000000e+00 : f32
      %22 = vector.broadcast %cst : f32 to vector<8x32xf32>
      %23 = arith.index_cast %arg0 : i32 to index
      %c0_15 = arith.constant 0 : index
      %c0_16 = arith.constant 0 : index
      %24 = vector.load %arg6[%23, %c0_15, %c0_16] : memref<2x8x32xf32, #tpu.memory_space<vmem>>, vector<1x8x32xf32>
      %25 = vector.shape_cast %24 : vector<1x8x32xf32> to vector<8x32xf32>
      %26 = vector.shape_cast %22 : vector<8x32xf32> to vector<1x8x32xf32>
      tpu.vector_store %arg6[%23, %c0_15, %c0_16], %26 {strides = array<i32>} : memref<2x8x32xf32, #tpu.memory_space<vmem>>, vector<1x8x32xf32>,
      %cst_17 = arith.constant 0.000000e+00 : f32
      %27 = vector.broadcast %cst_17 : f32 to vector<8x32xf32>
      %28 = arith.index_cast %arg0 : i32 to index
      %c0_18 = arith.constant 0 : index
      %c0_19 = arith.constant 0 : index
      %29 = vector.load %arg7[%28, %c0_18, %c0_19] : memref<2x8x32xf32, #tpu.memory_space<vmem>>, vector<1x8x32xf32>
      %30 = vector.shape_cast %29 : vector<1x8x32xf32> to vector<8x32xf32>
      %31 = vector.shape_cast %27 : vector<8x32xf32> to vector<1x8x32xf32>
      tpu.vector_store %arg7[%28, %c0_18, %c0_19], %31 {strides = array<i32>} : memref<2x8x32xf32, #tpu.memory_space<vmem>>, vector<1x8x32xf32>,
    } else {
    }
    %c0 = arith.constant 0 : index
    %c0_1 = arith.constant 0 : index
    %3 = vector.load %arg3[%c0, %c0_1] : memref<8x1xf32, #tpu.memory_space<vmem>>, vector<8x1xf32>
    %c0_2 = arith.constant 0 : index
    %c0_3 = arith.constant 0 : index
    %c0_4 = arith.constant 0 : index
    %4 = vector.load %arg4[%c0_2, %c0_3, %c0_4] : memref<1x32x128xf32, #tpu.memory_space<vmem>>, vector<1x32x128xf32>
    %5 = vector.shape_cast %4 : vector<1x32x128xf32> to vector<32x128xf32>
    %6 = arith.index_cast %arg0 : i32 to index
    %c0_5 = arith.constant 0 : index
    %c0_6 = arith.constant 0 : index
    %7 = vector.load %arg6[%6, %c0_5, %c0_6] : memref<2x8x32xf32, #tpu.memory_space<vmem>>, vector<1x8x32xf32>
    %8 = vector.shape_cast %7 : vector<1x8x32xf32> to vector<8x32xf32>
    %9 = arith.index_cast %arg0 : i32 to index
    %c0_7 = arith.constant 0 : index
    %c0_8 = arith.constant 0 : index
    %10 = vector.load %arg7[%9, %c0_7, %c0_8] : memref<2x8x32xf32, #tpu.memory_space<vmem>>, vector<1x8x32xf32>
    %11 = vector.shape_cast %10 : vector<1x8x32xf32> to vector<8x32xf32>
    %c0_i32_9 = arith.constant 0 : i32
    %c8_i32 = arith.constant 8 : i32
    %12 = arith.addi %c0_i32_9, %c8_i32 : i32
    %c1_i32 = arith.constant 1 : i32
    %13:2 = scf.for %arg8 = %c0_i32_9 to %12 step %c1_i32 iter_args(%arg9 = %8, %arg10 = %11) -> (vector<8x32xf32>, vector<8x32xf32>)  : i32 {
      %c0_i32_15 = arith.constant 0 : i32
      %22 = arith.cmpi eq, %arg0, %c0_i32_15 : i32
      %c7_i32 = arith.constant 7 : i32
      %23 = arith.subi %c7_i32, %arg8 : i32
      %24 = arith.select %22, %arg8, %23 : i32
      %c8_i32_16 = arith.constant 8 : i32
      %25 = arith.muli %arg1, %c8_i32_16 : i32
      %26 = arith.addi %25, %arg8 : i32
      %c0_i32_17 = arith.constant 0 : i32
      %27 = arith.cmpi eq, %arg0, %c0_i32_17 : i32
      %c7_i32_18 = arith.constant 7 : i32
      %28 = arith.subi %c7_i32_18, %26 : i32
      %29 = arith.select %27, %26, %28 : i32
      %c0_19 = arith.constant 0 : index
      %30 = arith.index_cast %24 : i32 to index
      %c0_20 = arith.constant 0 : index
      %c0_21 = arith.constant 0 : index
      %31 = vector.load %arg2[%c0_19, %30, %c0_20, %c0_21] : memref<1x8x8x128xf32, #tpu.memory_space<vmem>>, vector<1x1x8x128xf32>
      %32 = vector.shape_cast %31 : vector<1x1x8x128xf32> to vector<8x128xf32>
      %cst = arith.constant dense<0.000000e+00> : vector<8x128xf32>
      %33 = tpu.matmul %arg9, %5, %cst {dimension_numbers = #tpu.dot_dimension_numbers<[1], [0], [0], [1], [0, 0, 1, 1], [], []>} : vector<8x32xf32>, vector<32x128xf32>, vector<8x128xf32> -> vector<8x128xf32>
      %34 = arith.addf %32, %33 : vector<8x128xf32>
      %35 = vector.extract_strided_slice %34 {offsets = [0, 0], sizes = [8, 32], strides = [1, 1]} : vector<8x128xf32> to vector<8x32xf32>
      %36 = arith.negf %35 : vector<8x32xf32>
      %37 = math.exp %36 : vector<8x32xf32>
      %cst_22 = arith.constant 1.000000e+00 : f32
      %38 = vector.broadcast %cst_22 : f32 to vector<8x32xf32>
      %39 = arith.addf %38, %37 : vector<8x32xf32>
      %40 = arith.divf %38, %39 : vector<8x32xf32>
      %41 = vector.extract_strided_slice %34 {offsets = [0, 32], sizes = [8, 32], strides = [1, 1]} : vector<8x128xf32> to vector<8x32xf32>
      %42 = arith.negf %41 : vector<8x32xf32>
      %43 = math.exp %42 : vector<8x32xf32>
      %cst_23 = arith.constant 1.000000e+00 : f32
      %44 = vector.broadcast %cst_23 : f32 to vector<8x32xf32>
      %45 = arith.addf %44, %43 : vector<8x32xf32>
      %46 = arith.divf %44, %45 : vector<8x32xf32>
      %47 = vector.extract_strided_slice %34 {offsets = [0, 64], sizes = [8, 32], strides = [1, 1]} : vector<8x128xf32> to vector<8x32xf32>
      %48 = math.tanh %47 : vector<8x32xf32>
      %49 = vector.extract_strided_slice %34 {offsets = [0, 96], sizes = [8, 32], strides = [1, 1]} : vector<8x128xf32> to vector<8x32xf32>
      %50 = arith.negf %49 : vector<8x32xf32>
      %51 = math.exp %50 : vector<8x32xf32>
      %cst_24 = arith.constant 1.000000e+00 : f32
      %52 = vector.broadcast %cst_24 : f32 to vector<8x32xf32>
      %53 = arith.addf %52, %51 : vector<8x32xf32>
      %54 = arith.divf %52, %53 : vector<8x32xf32>
      %55 = arith.mulf %46, %arg10 : vector<8x32xf32>
      %56 = arith.mulf %40, %48 : vector<8x32xf32>
      %57 = arith.addf %55, %56 : vector<8x32xf32>
      %58 = math.tanh %57 : vector<8x32xf32>
      %59 = arith.mulf %54, %58 : vector<8x32xf32>
      %60 = arith.sitofp %29 : i32 to f32
      %61 = vector.broadcast %60 : f32 to vector<8x1xf32>
      %62 = arith.cmpf ogt, %3, %61 : vector<8x1xf32>
      %63 = arith.extui %62 : vector<8x1xi1> to vector<8x1xi32>
      %64 = arith.sitofp %63 : vector<8x1xi32> to vector<8x1xf32>
      %65 = vector.broadcast %64 : vector<8x1xf32> to vector<8x32xf32>
      %66 = arith.mulf %65, %57 : vector<8x32xf32>
      %cst_25 = arith.constant 1.000000e+00 : f32
      %67 = vector.broadcast %cst_25 : f32 to vector<8x1xf32>
      %68 = arith.subf %67, %64 : vector<8x1xf32>
      %69 = vector.broadcast %68 : vector<8x1xf32> to vector<8x32xf32>
      %70 = arith.mulf %69, %arg10 : vector<8x32xf32>
      %71 = arith.addf %66, %70 : vector<8x32xf32>
      %72 = vector.broadcast %64 : vector<8x1xf32> to vector<8x32xf32>
      %73 = arith.mulf %72, %59 : vector<8x32xf32>
      %cst_26 = arith.constant 1.000000e+00 : f32
      %74 = vector.broadcast %cst_26 : f32 to vector<8x1xf32>
      %75 = arith.subf %74, %64 : vector<8x1xf32>
      %76 = vector.broadcast %75 : vector<8x1xf32> to vector<8x32xf32>
      %77 = arith.mulf %76, %arg9 : vector<8x32xf32>
      %78 = arith.addf %73, %77 : vector<8x32xf32>
      %79 = vector.broadcast %64 : vector<8x1xf32> to vector<8x32xf32>
      %80 = arith.mulf %78, %79 : vector<8x32xf32>
      %c0_27 = arith.constant 0 : index
      %81 = arith.index_cast %24 : i32 to index
      %c0_28 = arith.constant 0 : index
      %c0_29 = arith.constant 0 : index
      %82 = vector.load %arg5[%c0_27, %81, %c0_28, %c0_29] : memref<1x8x8x32xf32, #tpu.memory_space<vmem>>, vector<1x1x8x32xf32>
      %83 = vector.shape_cast %82 : vector<1x1x8x32xf32> to vector<8x32xf32>
      %84 = vector.shape_cast %80 : vector<8x32xf32> to vector<1x1x8x32xf32>
      tpu.vector_store %arg5[%c0_27, %81, %c0_28, %c0_29], %84 {strides = array<i32>} : memref<1x8x8x32xf32, #tpu.memory_space<vmem>>, vector<1x1x8x32xf32>,
      scf.yield %78, %71 : vector<8x32xf32>, vector<8x32xf32>
    }
    %c8_i32_10 = arith.constant 8 : i32
    %14 = arith.index_cast %arg0 : i32 to index
    %c0_11 = arith.constant 0 : index
    %c0_12 = arith.constant 0 : index
    %15 = vector.load %arg6[%14, %c0_11, %c0_12] : memref<2x8x32xf32, #tpu.memory_space<vmem>>, vector<1x8x32xf32>
    %16 = vector.shape_cast %15 : vector<1x8x32xf32> to vector<8x32xf32>
    %17 = vector.shape_cast %13#0 : vector<8x32xf32> to vector<1x8x32xf32>
    tpu.vector_store %arg6[%14, %c0_11, %c0_12], %17 {strides = array<i32>} : memref<2x8x32xf32, #tpu.memory_space<vmem>>, vector<1x8x32xf32>,
    %18 = arith.index_cast %arg0 : i32 to index
    %c0_13 = arith.constant 0 : index
    %c0_14 = arith.constant 0 : index
    %19 = vector.load %arg7[%18, %c0_13, %c0_14] : memref<2x8x32xf32, #tpu.memory_space<vmem>>, vector<1x8x32xf32>
    %20 = vector.shape_cast %19 : vector<1x8x32xf32> to vector<8x32xf32>
    %21 = vector.shape_cast %13#1 : vector<8x32xf32> to vector<1x8x32xf32>
    tpu.vector_store %arg7[%18, %c0_13, %c0_14], %21 {strides = array<i32>} : memref<2x8x32xf32, #tpu.memory_space<vmem>>, vector<1x8x32xf32>,
    return
  }
  func.func @transform_0(%arg0: i32, %arg1: i32) -> (i32, i32, i32, i32) {
    %c0_i32 = arith.constant 0 : i32
    %0 = arith.subi %c0_i32, %arg1 : i32
    %1 = arith.muli %arg0, %0 : i32
    %c1_i32 = arith.constant 1 : i32
    %2 = arith.subi %c1_i32, %arg0 : i32
    %3 = arith.muli %2, %arg1 : i32
    %4 = arith.addi %1, %3 : i32
    %c0_i32_0 = arith.constant 0 : i32
    %c0_i32_1 = arith.constant 0 : i32
    %c0_i32_2 = arith.constant 0 : i32
    return %arg0, %4, %c0_i32_0, %c0_i32_1 : i32, i32, i32, i32
  }
  func.func @transform_1(%arg0: i32, %arg1: i32) -> (i32, i32) {
    %c0_i32 = arith.constant 0 : i32
    %c0_i32_0 = arith.constant 0 : i32
    %c0_i32_1 = arith.constant 0 : i32
    return %c0_i32, %c0_i32_0 : i32, i32
  }
  func.func @transform_2(%arg0: i32, %arg1: i32) -> (i32, i32, i32) {
    %c0_i32 = arith.constant 0 : i32
    %c0_i32_0 = arith.constant 0 : i32
    %c0_i32_1 = arith.constant 0 : i32
    return %arg0, %c0_i32, %c0_i32_0 : i32, i32, i32
  }
  func.func @transform_3(%arg0: i32, %arg1: i32) -> (i32, i32, i32, i32) {
    %c0_i32 = arith.constant 0 : i32
    %0 = arith.subi %c0_i32, %arg1 : i32
    %1 = arith.muli %arg0, %0 : i32
    %c1_i32 = arith.constant 1 : i32
    %2 = arith.subi %c1_i32, %arg0 : i32
    %3 = arith.muli %2, %arg1 : i32
    %4 = arith.addi %1, %3 : i32
    %c0_i32_0 = arith.constant 0 : i32
    %c0_i32_1 = arith.constant 0 : i32
    %c0_i32_2 = arith.constant 0 : i32
    return %arg0, %4, %c0_i32_0, %c0_i32_1 : i32, i32, i32, i32
  }
}

module attributes {stable_mosaic.version = 11 : i64} {
  func.func @crf_kernel(%arg0: i32, %arg1: memref<4x4xf32, #tpu.memory_space<smem>>, %arg2: memref<4xf32, #tpu.memory_space<smem>>, %arg3: memref<4xf32, #tpu.memory_space<smem>>, %arg4: memref<8x4x8xf32, #tpu.memory_space<vmem>>, %arg5: memref<8x4x8xf32, #tpu.memory_space<vmem>>, %arg6: memref<1x8xf32, #tpu.memory_space<vmem>>, %arg7: memref<1x1x1xf32, #tpu.memory_space<vmem>>) attributes {dimension_semantics = [#tpu.dimension_semantics<parallel>], iteration_bounds = array<i64: 1>, scalar_prefetch = 0 : i64, scratch_operands = 0 : i64, tpu.core_type = #tpu.core_type<tc>, window_params = [{transform_indices = @transform_0, window_bounds = array<i64: 4, 4>}, {transform_indices = @transform_1, window_bounds = array<i64: 4>}, {transform_indices = @transform_2, window_bounds = array<i64: 4>}, {transform_indices = @transform_3, window_bounds = array<i64: 8, 4, 8>}, {transform_indices = @transform_4, window_bounds = array<i64: 8, 4, 8>}, {transform_indices = @transform_5, window_bounds = array<i64: 1, 8>}, {transform_indices = @transform_6, window_bounds = array<i64: 1, 1, 1>}]} {
    %c0 = arith.constant 0 : index
    %c0_0 = arith.constant 0 : index
    %0 = memref.load %arg1[%c0, %c0_0] : memref<4x4xf32, #tpu.memory_space<smem>>
    %c0_1 = arith.constant 0 : index
    %c1 = arith.constant 1 : index
    %1 = memref.load %arg1[%c0_1, %c1] : memref<4x4xf32, #tpu.memory_space<smem>>
    %c0_2 = arith.constant 0 : index
    %c2 = arith.constant 2 : index
    %2 = memref.load %arg1[%c0_2, %c2] : memref<4x4xf32, #tpu.memory_space<smem>>
    %c0_3 = arith.constant 0 : index
    %c3 = arith.constant 3 : index
    %3 = memref.load %arg1[%c0_3, %c3] : memref<4x4xf32, #tpu.memory_space<smem>>
    %c1_4 = arith.constant 1 : index
    %c0_5 = arith.constant 0 : index
    %4 = memref.load %arg1[%c1_4, %c0_5] : memref<4x4xf32, #tpu.memory_space<smem>>
    %c1_6 = arith.constant 1 : index
    %c1_7 = arith.constant 1 : index
    %5 = memref.load %arg1[%c1_6, %c1_7] : memref<4x4xf32, #tpu.memory_space<smem>>
    %c1_8 = arith.constant 1 : index
    %c2_9 = arith.constant 2 : index
    %6 = memref.load %arg1[%c1_8, %c2_9] : memref<4x4xf32, #tpu.memory_space<smem>>
    %c1_10 = arith.constant 1 : index
    %c3_11 = arith.constant 3 : index
    %7 = memref.load %arg1[%c1_10, %c3_11] : memref<4x4xf32, #tpu.memory_space<smem>>
    %c2_12 = arith.constant 2 : index
    %c0_13 = arith.constant 0 : index
    %8 = memref.load %arg1[%c2_12, %c0_13] : memref<4x4xf32, #tpu.memory_space<smem>>
    %c2_14 = arith.constant 2 : index
    %c1_15 = arith.constant 1 : index
    %9 = memref.load %arg1[%c2_14, %c1_15] : memref<4x4xf32, #tpu.memory_space<smem>>
    %c2_16 = arith.constant 2 : index
    %c2_17 = arith.constant 2 : index
    %10 = memref.load %arg1[%c2_16, %c2_17] : memref<4x4xf32, #tpu.memory_space<smem>>
    %c2_18 = arith.constant 2 : index
    %c3_19 = arith.constant 3 : index
    %11 = memref.load %arg1[%c2_18, %c3_19] : memref<4x4xf32, #tpu.memory_space<smem>>
    %c3_20 = arith.constant 3 : index
    %c0_21 = arith.constant 0 : index
    %12 = memref.load %arg1[%c3_20, %c0_21] : memref<4x4xf32, #tpu.memory_space<smem>>
    %c3_22 = arith.constant 3 : index
    %c1_23 = arith.constant 1 : index
    %13 = memref.load %arg1[%c3_22, %c1_23] : memref<4x4xf32, #tpu.memory_space<smem>>
    %c3_24 = arith.constant 3 : index
    %c2_25 = arith.constant 2 : index
    %14 = memref.load %arg1[%c3_24, %c2_25] : memref<4x4xf32, #tpu.memory_space<smem>>
    %c3_26 = arith.constant 3 : index
    %c3_27 = arith.constant 3 : index
    %15 = memref.load %arg1[%c3_26, %c3_27] : memref<4x4xf32, #tpu.memory_space<smem>>
    %c0_28 = arith.constant 0 : index
    %16 = memref.load %arg2[%c0_28] : memref<4xf32, #tpu.memory_space<smem>>
    %c1_29 = arith.constant 1 : index
    %17 = memref.load %arg2[%c1_29] : memref<4xf32, #tpu.memory_space<smem>>
    %c2_30 = arith.constant 2 : index
    %18 = memref.load %arg2[%c2_30] : memref<4xf32, #tpu.memory_space<smem>>
    %c3_31 = arith.constant 3 : index
    %19 = memref.load %arg2[%c3_31] : memref<4xf32, #tpu.memory_space<smem>>
    %c0_32 = arith.constant 0 : index
    %20 = memref.load %arg3[%c0_32] : memref<4xf32, #tpu.memory_space<smem>>
    %c1_33 = arith.constant 1 : index
    %21 = memref.load %arg3[%c1_33] : memref<4xf32, #tpu.memory_space<smem>>
    %c2_34 = arith.constant 2 : index
    %22 = memref.load %arg3[%c2_34] : memref<4xf32, #tpu.memory_space<smem>>
    %c3_35 = arith.constant 3 : index
    %23 = memref.load %arg3[%c3_35] : memref<4xf32, #tpu.memory_space<smem>>
    %c0_36 = arith.constant 0 : index
    %c0_37 = arith.constant 0 : index
    %24 = vector.load %arg6[%c0_36, %c0_37] : memref<1x8xf32, #tpu.memory_space<vmem>>, vector<1x8xf32>
    %cst = arith.constant 0.000000e+00 : f32
    %25 = vector.broadcast %cst : f32 to vector<1x8xf32>
    %26 = arith.cmpf ogt, %24, %25 : vector<1x8xf32>
    %27 = arith.extui %26 : vector<1x8xi1> to vector<1x8xi32>
    %28 = arith.sitofp %27 : vector<1x8xi32> to vector<1x8xf32>
    %c0_38 = arith.constant 0 : index
    %c0_39 = arith.constant 0 : index
    %c0_40 = arith.constant 0 : index
    %29 = vector.load %arg4[%c0_38, %c0_39, %c0_40] : memref<8x4x8xf32, #tpu.memory_space<vmem>>, vector<1x4x8xf32>
    %30 = vector.shape_cast %29 : vector<1x4x8xf32> to vector<4x8xf32>
    %c0_41 = arith.constant 0 : index
    %c0_42 = arith.constant 0 : index
    %c0_43 = arith.constant 0 : index
    %31 = vector.load %arg5[%c0_41, %c0_42, %c0_43] : memref<8x4x8xf32, #tpu.memory_space<vmem>>, vector<1x4x8xf32>
    %32 = vector.shape_cast %31 : vector<1x4x8xf32> to vector<4x8xf32>
    %33 = vector.extract_strided_slice %30 {offsets = [0, 0], sizes = [1, 8], strides = [1, 1]} : vector<4x8xf32> to vector<1x8xf32>
    %34 = vector.broadcast %16 : f32 to vector<1x8xf32>
    %35 = arith.addf %34, %33 : vector<1x8xf32>
    %36 = vector.extract_strided_slice %30 {offsets = [1, 0], sizes = [1, 8], strides = [1, 1]} : vector<4x8xf32> to vector<1x8xf32>
    %37 = vector.broadcast %17 : f32 to vector<1x8xf32>
    %38 = arith.addf %37, %36 : vector<1x8xf32>
    %39 = vector.extract_strided_slice %30 {offsets = [2, 0], sizes = [1, 8], strides = [1, 1]} : vector<4x8xf32> to vector<1x8xf32>
    %40 = vector.broadcast %18 : f32 to vector<1x8xf32>
    %41 = arith.addf %40, %39 : vector<1x8xf32>
    %42 = vector.extract_strided_slice %30 {offsets = [3, 0], sizes = [1, 8], strides = [1, 1]} : vector<4x8xf32> to vector<1x8xf32>
    %43 = vector.broadcast %19 : f32 to vector<1x8xf32>
    %44 = arith.addf %43, %42 : vector<1x8xf32>
    %45 = vector.extract_strided_slice %32 {offsets = [0, 0], sizes = [1, 8], strides = [1, 1]} : vector<4x8xf32> to vector<1x8xf32>
    %46 = vector.extract_strided_slice %32 {offsets = [1, 0], sizes = [1, 8], strides = [1, 1]} : vector<4x8xf32> to vector<1x8xf32>
    %47 = vector.extract_strided_slice %32 {offsets = [2, 0], sizes = [1, 8], strides = [1, 1]} : vector<4x8xf32> to vector<1x8xf32>
    %48 = vector.extract_strided_slice %32 {offsets = [3, 0], sizes = [1, 8], strides = [1, 1]} : vector<4x8xf32> to vector<1x8xf32>
    %49 = arith.mulf %35, %45 : vector<1x8xf32>
    %50 = arith.mulf %38, %46 : vector<1x8xf32>
    %51 = arith.addf %49, %50 : vector<1x8xf32>
    %52 = arith.mulf %41, %47 : vector<1x8xf32>
    %53 = arith.addf %51, %52 : vector<1x8xf32>
    %54 = arith.mulf %44, %48 : vector<1x8xf32>
    %55 = arith.addf %53, %54 : vector<1x8xf32>
    %c1_i32 = arith.constant 1 : i32
    %c7_i32 = arith.constant 7 : i32
    %56 = arith.addi %c1_i32, %c7_i32 : i32
    %c1_i32_44 = arith.constant 1 : i32
    %57:9 = scf.for %arg8 = %c1_i32 to %56 step %c1_i32_44 iter_args(%arg9 = %35, %arg10 = %38, %arg11 = %41, %arg12 = %44, %arg13 = %55, %arg14 = %45, %arg15 = %46, %arg16 = %47, %arg17 = %48) -> (vector<1x8xf32>, vector<1x8xf32>, vector<1x8xf32>, vector<1x8xf32>, vector<1x8xf32>, vector<1x8xf32>, vector<1x8xf32>, vector<1x8xf32>, vector<1x8xf32>)  : i32 {
      %101 = arith.index_cast %arg8 : i32 to index
      %c0_50 = arith.constant 0 : index
      %c0_51 = arith.constant 0 : index
      %102 = vector.load %arg4[%101, %c0_50, %c0_51] : memref<8x4x8xf32, #tpu.memory_space<vmem>>, vector<1x4x8xf32>
      %103 = vector.shape_cast %102 : vector<1x4x8xf32> to vector<4x8xf32>
      %104 = arith.index_cast %arg8 : i32 to index
      %c0_52 = arith.constant 0 : index
      %c0_53 = arith.constant 0 : index
      %105 = vector.load %arg5[%104, %c0_52, %c0_53] : memref<8x4x8xf32, #tpu.memory_space<vmem>>, vector<1x4x8xf32>
      %106 = vector.shape_cast %105 : vector<1x4x8xf32> to vector<4x8xf32>
      %107 = arith.sitofp %arg8 : i32 to f32
      %108 = vector.broadcast %107 : f32 to vector<1x8xf32>
      %109 = arith.cmpf ogt, %24, %108 : vector<1x8xf32>
      %110 = arith.extui %109 : vector<1x8xi1> to vector<1x8xi32>
      %111 = arith.sitofp %110 : vector<1x8xi32> to vector<1x8xf32>
      %cst_54 = arith.constant 0.000000e+00 : f32
      %112 = vector.broadcast %cst_54 : f32 to vector<1x8xf32>
      %113 = arith.cmpf ogt, %111, %112 : vector<1x8xf32>
      %114 = vector.broadcast %0 : f32 to vector<1x8xf32>
      %115 = arith.addf %arg9, %114 : vector<1x8xf32>
      %116 = vector.broadcast %4 : f32 to vector<1x8xf32>
      %117 = arith.addf %arg10, %116 : vector<1x8xf32>
      %118 = vector.broadcast %8 : f32 to vector<1x8xf32>
      %119 = arith.addf %arg11, %118 : vector<1x8xf32>
      %120 = vector.broadcast %12 : f32 to vector<1x8xf32>
      %121 = arith.addf %arg12, %120 : vector<1x8xf32>
      %122 = arith.maximumf %115, %117 : vector<1x8xf32>
      %123 = arith.maximumf %122, %119 : vector<1x8xf32>
      %124 = arith.maximumf %123, %121 : vector<1x8xf32>
      %125 = arith.subf %115, %124 : vector<1x8xf32>
      %126 = math.exp %125 : vector<1x8xf32>
      %127 = arith.subf %117, %124 : vector<1x8xf32>
      %128 = math.exp %127 : vector<1x8xf32>
      %129 = arith.addf %126, %128 : vector<1x8xf32>
      %130 = arith.subf %119, %124 : vector<1x8xf32>
      %131 = math.exp %130 : vector<1x8xf32>
      %132 = arith.addf %129, %131 : vector<1x8xf32>
      %133 = arith.subf %121, %124 : vector<1x8xf32>
      %134 = math.exp %133 : vector<1x8xf32>
      %135 = arith.addf %132, %134 : vector<1x8xf32>
      %136 = math.log %135 : vector<1x8xf32>
      %137 = arith.addf %124, %136 : vector<1x8xf32>
      %138 = vector.extract_strided_slice %103 {offsets = [0, 0], sizes = [1, 8], strides = [1, 1]} : vector<4x8xf32> to vector<1x8xf32>
      %139 = arith.addf %137, %138 : vector<1x8xf32>
      %140 = vector.broadcast %1 : f32 to vector<1x8xf32>
      %141 = arith.addf %arg9, %140 : vector<1x8xf32>
      %142 = vector.broadcast %5 : f32 to vector<1x8xf32>
      %143 = arith.addf %arg10, %142 : vector<1x8xf32>
      %144 = vector.broadcast %9 : f32 to vector<1x8xf32>
      %145 = arith.addf %arg11, %144 : vector<1x8xf32>
      %146 = vector.broadcast %13 : f32 to vector<1x8xf32>
      %147 = arith.addf %arg12, %146 : vector<1x8xf32>
      %148 = arith.maximumf %141, %143 : vector<1x8xf32>
      %149 = arith.maximumf %148, %145 : vector<1x8xf32>
      %150 = arith.maximumf %149, %147 : vector<1x8xf32>
      %151 = arith.subf %141, %150 : vector<1x8xf32>
      %152 = math.exp %151 : vector<1x8xf32>
      %153 = arith.subf %143, %150 : vector<1x8xf32>
      %154 = math.exp %153 : vector<1x8xf32>
      %155 = arith.addf %152, %154 : vector<1x8xf32>
      %156 = arith.subf %145, %150 : vector<1x8xf32>
      %157 = math.exp %156 : vector<1x8xf32>
      %158 = arith.addf %155, %157 : vector<1x8xf32>
      %159 = arith.subf %147, %150 : vector<1x8xf32>
      %160 = math.exp %159 : vector<1x8xf32>
      %161 = arith.addf %158, %160 : vector<1x8xf32>
      %162 = math.log %161 : vector<1x8xf32>
      %163 = arith.addf %150, %162 : vector<1x8xf32>
      %164 = vector.extract_strided_slice %103 {offsets = [1, 0], sizes = [1, 8], strides = [1, 1]} : vector<4x8xf32> to vector<1x8xf32>
      %165 = arith.addf %163, %164 : vector<1x8xf32>
      %166 = vector.broadcast %2 : f32 to vector<1x8xf32>
      %167 = arith.addf %arg9, %166 : vector<1x8xf32>
      %168 = vector.broadcast %6 : f32 to vector<1x8xf32>
      %169 = arith.addf %arg10, %168 : vector<1x8xf32>
      %170 = vector.broadcast %10 : f32 to vector<1x8xf32>
      %171 = arith.addf %arg11, %170 : vector<1x8xf32>
      %172 = vector.broadcast %14 : f32 to vector<1x8xf32>
      %173 = arith.addf %arg12, %172 : vector<1x8xf32>
      %174 = arith.maximumf %167, %169 : vector<1x8xf32>
      %175 = arith.maximumf %174, %171 : vector<1x8xf32>
      %176 = arith.maximumf %175, %173 : vector<1x8xf32>
      %177 = arith.subf %167, %176 : vector<1x8xf32>
      %178 = math.exp %177 : vector<1x8xf32>
      %179 = arith.subf %169, %176 : vector<1x8xf32>
      %180 = math.exp %179 : vector<1x8xf32>
      %181 = arith.addf %178, %180 : vector<1x8xf32>
      %182 = arith.subf %171, %176 : vector<1x8xf32>
      %183 = math.exp %182 : vector<1x8xf32>
      %184 = arith.addf %181, %183 : vector<1x8xf32>
      %185 = arith.subf %173, %176 : vector<1x8xf32>
      %186 = math.exp %185 : vector<1x8xf32>
      %187 = arith.addf %184, %186 : vector<1x8xf32>
      %188 = math.log %187 : vector<1x8xf32>
      %189 = arith.addf %176, %188 : vector<1x8xf32>
      %190 = vector.extract_strided_slice %103 {offsets = [2, 0], sizes = [1, 8], strides = [1, 1]} : vector<4x8xf32> to vector<1x8xf32>
      %191 = arith.addf %189, %190 : vector<1x8xf32>
      %192 = vector.broadcast %3 : f32 to vector<1x8xf32>
      %193 = arith.addf %arg9, %192 : vector<1x8xf32>
      %194 = vector.broadcast %7 : f32 to vector<1x8xf32>
      %195 = arith.addf %arg10, %194 : vector<1x8xf32>
      %196 = vector.broadcast %11 : f32 to vector<1x8xf32>
      %197 = arith.addf %arg11, %196 : vector<1x8xf32>
      %198 = vector.broadcast %15 : f32 to vector<1x8xf32>
      %199 = arith.addf %arg12, %198 : vector<1x8xf32>
      %200 = arith.maximumf %193, %195 : vector<1x8xf32>
      %201 = arith.maximumf %200, %197 : vector<1x8xf32>
      %202 = arith.maximumf %201, %199 : vector<1x8xf32>
      %203 = arith.subf %193, %202 : vector<1x8xf32>
      %204 = math.exp %203 : vector<1x8xf32>
      %205 = arith.subf %195, %202 : vector<1x8xf32>
      %206 = math.exp %205 : vector<1x8xf32>
      %207 = arith.addf %204, %206 : vector<1x8xf32>
      %208 = arith.subf %197, %202 : vector<1x8xf32>
      %209 = math.exp %208 : vector<1x8xf32>
      %210 = arith.addf %207, %209 : vector<1x8xf32>
      %211 = arith.subf %199, %202 : vector<1x8xf32>
      %212 = math.exp %211 : vector<1x8xf32>
      %213 = arith.addf %210, %212 : vector<1x8xf32>
      %214 = math.log %213 : vector<1x8xf32>
      %215 = arith.addf %202, %214 : vector<1x8xf32>
      %216 = vector.extract_strided_slice %103 {offsets = [3, 0], sizes = [1, 8], strides = [1, 1]} : vector<4x8xf32> to vector<1x8xf32>
      %217 = arith.addf %215, %216 : vector<1x8xf32>
      %218 = arith.select %113, %139, %arg9 : vector<1x8xi1>, vector<1x8xf32>
      %219 = arith.select %113, %165, %arg10 : vector<1x8xi1>, vector<1x8xf32>
      %220 = arith.select %113, %191, %arg11 : vector<1x8xi1>, vector<1x8xf32>
      %221 = arith.select %113, %217, %arg12 : vector<1x8xi1>, vector<1x8xf32>
      %cst_55 = arith.constant 0.000000e+00 : f32
      %222 = vector.broadcast %cst_55 : f32 to vector<1x8xf32>
      %223 = vector.broadcast %0 : f32 to vector<1x8xf32>
      %224 = arith.mulf %223, %arg14 : vector<1x8xf32>
      %225 = vector.extract_strided_slice %106 {offsets = [0, 0], sizes = [1, 8], strides = [1, 1]} : vector<4x8xf32> to vector<1x8xf32>
      %226 = arith.mulf %224, %225 : vector<1x8xf32>
      %227 = arith.addf %222, %226 : vector<1x8xf32>
      %228 = vector.broadcast %1 : f32 to vector<1x8xf32>
      %229 = arith.mulf %228, %arg14 : vector<1x8xf32>
      %230 = vector.extract_strided_slice %106 {offsets = [1, 0], sizes = [1, 8], strides = [1, 1]} : vector<4x8xf32> to vector<1x8xf32>
      %231 = arith.mulf %229, %230 : vector<1x8xf32>
      %232 = arith.addf %227, %231 : vector<1x8xf32>
      %233 = vector.broadcast %2 : f32 to vector<1x8xf32>
      %234 = arith.mulf %233, %arg14 : vector<1x8xf32>
      %235 = vector.extract_strided_slice %106 {offsets = [2, 0], sizes = [1, 8], strides = [1, 1]} : vector<4x8xf32> to vector<1x8xf32>
      %236 = arith.mulf %234, %235 : vector<1x8xf32>
      %237 = arith.addf %232, %236 : vector<1x8xf32>
      %238 = vector.broadcast %3 : f32 to vector<1x8xf32>
      %239 = arith.mulf %238, %arg14 : vector<1x8xf32>
      %240 = vector.extract_strided_slice %106 {offsets = [3, 0], sizes = [1, 8], strides = [1, 1]} : vector<4x8xf32> to vector<1x8xf32>
      %241 = arith.mulf %239, %240 : vector<1x8xf32>
      %242 = arith.addf %237, %241 : vector<1x8xf32>
      %243 = vector.broadcast %4 : f32 to vector<1x8xf32>
      %244 = arith.mulf %243, %arg15 : vector<1x8xf32>
      %245 = vector.extract_strided_slice %106 {offsets = [0, 0], sizes = [1, 8], strides = [1, 1]} : vector<4x8xf32> to vector<1x8xf32>
      %246 = arith.mulf %244, %245 : vector<1x8xf32>
      %247 = arith.addf %242, %246 : vector<1x8xf32>
      %248 = vector.broadcast %5 : f32 to vector<1x8xf32>
      %249 = arith.mulf %248, %arg15 : vector<1x8xf32>
      %250 = vector.extract_strided_slice %106 {offsets = [1, 0], sizes = [1, 8], strides = [1, 1]} : vector<4x8xf32> to vector<1x8xf32>
      %251 = arith.mulf %249, %250 : vector<1x8xf32>
      %252 = arith.addf %247, %251 : vector<1x8xf32>
      %253 = vector.broadcast %6 : f32 to vector<1x8xf32>
      %254 = arith.mulf %253, %arg15 : vector<1x8xf32>
      %255 = vector.extract_strided_slice %106 {offsets = [2, 0], sizes = [1, 8], strides = [1, 1]} : vector<4x8xf32> to vector<1x8xf32>
      %256 = arith.mulf %254, %255 : vector<1x8xf32>
      %257 = arith.addf %252, %256 : vector<1x8xf32>
      %258 = vector.broadcast %7 : f32 to vector<1x8xf32>
      %259 = arith.mulf %258, %arg15 : vector<1x8xf32>
      %260 = vector.extract_strided_slice %106 {offsets = [3, 0], sizes = [1, 8], strides = [1, 1]} : vector<4x8xf32> to vector<1x8xf32>
      %261 = arith.mulf %259, %260 : vector<1x8xf32>
      %262 = arith.addf %257, %261 : vector<1x8xf32>
      %263 = vector.broadcast %8 : f32 to vector<1x8xf32>
      %264 = arith.mulf %263, %arg16 : vector<1x8xf32>
      %265 = vector.extract_strided_slice %106 {offsets = [0, 0], sizes = [1, 8], strides = [1, 1]} : vector<4x8xf32> to vector<1x8xf32>
      %266 = arith.mulf %264, %265 : vector<1x8xf32>
      %267 = arith.addf %262, %266 : vector<1x8xf32>
      %268 = vector.broadcast %9 : f32 to vector<1x8xf32>
      %269 = arith.mulf %268, %arg16 : vector<1x8xf32>
      %270 = vector.extract_strided_slice %106 {offsets = [1, 0], sizes = [1, 8], strides = [1, 1]} : vector<4x8xf32> to vector<1x8xf32>
      %271 = arith.mulf %269, %270 : vector<1x8xf32>
      %272 = arith.addf %267, %271 : vector<1x8xf32>
      %273 = vector.broadcast %10 : f32 to vector<1x8xf32>
      %274 = arith.mulf %273, %arg16 : vector<1x8xf32>
      %275 = vector.extract_strided_slice %106 {offsets = [2, 0], sizes = [1, 8], strides = [1, 1]} : vector<4x8xf32> to vector<1x8xf32>
      %276 = arith.mulf %274, %275 : vector<1x8xf32>
      %277 = arith.addf %272, %276 : vector<1x8xf32>
      %278 = vector.broadcast %11 : f32 to vector<1x8xf32>
      %279 = arith.mulf %278, %arg16 : vector<1x8xf32>
      %280 = vector.extract_strided_slice %106 {offsets = [3, 0], sizes = [1, 8], strides = [1, 1]} : vector<4x8xf32> to vector<1x8xf32>
      %281 = arith.mulf %279, %280 : vector<1x8xf32>
      %282 = arith.addf %277, %281 : vector<1x8xf32>
      %283 = vector.broadcast %12 : f32 to vector<1x8xf32>
      %284 = arith.mulf %283, %arg17 : vector<1x8xf32>
      %285 = vector.extract_strided_slice %106 {offsets = [0, 0], sizes = [1, 8], strides = [1, 1]} : vector<4x8xf32> to vector<1x8xf32>
      %286 = arith.mulf %284, %285 : vector<1x8xf32>
      %287 = arith.addf %282, %286 : vector<1x8xf32>
      %288 = vector.broadcast %13 : f32 to vector<1x8xf32>
      %289 = arith.mulf %288, %arg17 : vector<1x8xf32>
      %290 = vector.extract_strided_slice %106 {offsets = [1, 0], sizes = [1, 8], strides = [1, 1]} : vector<4x8xf32> to vector<1x8xf32>
      %291 = arith.mulf %289, %290 : vector<1x8xf32>
      %292 = arith.addf %287, %291 : vector<1x8xf32>
      %293 = vector.broadcast %14 : f32 to vector<1x8xf32>
      %294 = arith.mulf %293, %arg17 : vector<1x8xf32>
      %295 = vector.extract_strided_slice %106 {offsets = [2, 0], sizes = [1, 8], strides = [1, 1]} : vector<4x8xf32> to vector<1x8xf32>
      %296 = arith.mulf %294, %295 : vector<1x8xf32>
      %297 = arith.addf %292, %296 : vector<1x8xf32>
      %298 = vector.broadcast %15 : f32 to vector<1x8xf32>
      %299 = arith.mulf %298, %arg17 : vector<1x8xf32>
      %300 = vector.extract_strided_slice %106 {offsets = [3, 0], sizes = [1, 8], strides = [1, 1]} : vector<4x8xf32> to vector<1x8xf32>
      %301 = arith.mulf %299, %300 : vector<1x8xf32>
      %302 = arith.addf %297, %301 : vector<1x8xf32>
      %cst_56 = arith.constant 0.000000e+00 : f32
      %303 = vector.broadcast %cst_56 : f32 to vector<1x8xf32>
      %304 = vector.extract_strided_slice %103 {offsets = [0, 0], sizes = [1, 8], strides = [1, 1]} : vector<4x8xf32> to vector<1x8xf32>
      %305 = vector.extract_strided_slice %106 {offsets = [0, 0], sizes = [1, 8], strides = [1, 1]} : vector<4x8xf32> to vector<1x8xf32>
      %306 = arith.mulf %304, %305 : vector<1x8xf32>
      %307 = arith.addf %303, %306 : vector<1x8xf32>
      %308 = vector.extract_strided_slice %103 {offsets = [1, 0], sizes = [1, 8], strides = [1, 1]} : vector<4x8xf32> to vector<1x8xf32>
      %309 = vector.extract_strided_slice %106 {offsets = [1, 0], sizes = [1, 8], strides = [1, 1]} : vector<4x8xf32> to vector<1x8xf32>
      %310 = arith.mulf %308, %309 : vector<1x8xf32>
      %311 = arith.addf %307, %310 : vector<1x8xf32>
      %312 = vector.extract_strided_slice %103 {offsets = [2, 0], sizes = [1, 8], strides = [1, 1]} : vector<4x8xf32> to vector<1x8xf32>
      %313 = vector.extract_strided_slice %106 {offsets = [2, 0], sizes = [1, 8], strides = [1, 1]} : vector<4x8xf32> to vector<1x8xf32>
      %314 = arith.mulf %312, %313 : vector<1x8xf32>
      %315 = arith.addf %311, %314 : vector<1x8xf32>
      %316 = vector.extract_strided_slice %103 {offsets = [3, 0], sizes = [1, 8], strides = [1, 1]} : vector<4x8xf32> to vector<1x8xf32>
      %317 = vector.extract_strided_slice %106 {offsets = [3, 0], sizes = [1, 8], strides = [1, 1]} : vector<4x8xf32> to vector<1x8xf32>
      %318 = arith.mulf %316, %317 : vector<1x8xf32>
      %319 = arith.addf %315, %318 : vector<1x8xf32>
      %320 = arith.addf %302, %319 : vector<1x8xf32>
      %321 = arith.mulf %111, %320 : vector<1x8xf32>
      %322 = arith.addf %arg13, %321 : vector<1x8xf32>
      %323 = vector.extract_strided_slice %106 {offsets = [0, 0], sizes = [1, 8], strides = [1, 1]} : vector<4x8xf32> to vector<1x8xf32>
      %324 = arith.select %113, %323, %arg14 : vector<1x8xi1>, vector<1x8xf32>
      %325 = vector.extract_strided_slice %106 {offsets = [1, 0], sizes = [1, 8], strides = [1, 1]} : vector<4x8xf32> to vector<1x8xf32>
      %326 = arith.select %113, %325, %arg15 : vector<1x8xi1>, vector<1x8xf32>
      %327 = vector.extract_strided_slice %106 {offsets = [2, 0], sizes = [1, 8], strides = [1, 1]} : vector<4x8xf32> to vector<1x8xf32>
      %328 = arith.select %113, %327, %arg16 : vector<1x8xi1>, vector<1x8xf32>
      %329 = vector.extract_strided_slice %106 {offsets = [3, 0], sizes = [1, 8], strides = [1, 1]} : vector<4x8xf32> to vector<1x8xf32>
      %330 = arith.select %113, %329, %arg17 : vector<1x8xi1>, vector<1x8xf32>
      scf.yield %218, %219, %220, %221, %322, %324, %326, %328, %330 : vector<1x8xf32>, vector<1x8xf32>, vector<1x8xf32>, vector<1x8xf32>, vector<1x8xf32>, vector<1x8xf32>, vector<1x8xf32>, vector<1x8xf32>, vector<1x8xf32>
    }
    %c7_i32_45 = arith.constant 7 : i32
    %58 = vector.broadcast %20 : f32 to vector<1x8xf32>
    %59 = arith.addf %57#0, %58 : vector<1x8xf32>
    %60 = vector.broadcast %21 : f32 to vector<1x8xf32>
    %61 = arith.addf %57#1, %60 : vector<1x8xf32>
    %62 = vector.broadcast %22 : f32 to vector<1x8xf32>
    %63 = arith.addf %57#2, %62 : vector<1x8xf32>
    %64 = vector.broadcast %23 : f32 to vector<1x8xf32>
    %65 = arith.addf %57#3, %64 : vector<1x8xf32>
    %66 = arith.maximumf %59, %61 : vector<1x8xf32>
    %67 = arith.maximumf %66, %63 : vector<1x8xf32>
    %68 = arith.maximumf %67, %65 : vector<1x8xf32>
    %69 = arith.subf %59, %68 : vector<1x8xf32>
    %70 = math.exp %69 : vector<1x8xf32>
    %71 = arith.subf %61, %68 : vector<1x8xf32>
    %72 = math.exp %71 : vector<1x8xf32>
    %73 = arith.addf %70, %72 : vector<1x8xf32>
    %74 = arith.subf %63, %68 : vector<1x8xf32>
    %75 = math.exp %74 : vector<1x8xf32>
    %76 = arith.addf %73, %75 : vector<1x8xf32>
    %77 = arith.subf %65, %68 : vector<1x8xf32>
    %78 = math.exp %77 : vector<1x8xf32>
    %79 = arith.addf %76, %78 : vector<1x8xf32>
    %80 = math.log %79 : vector<1x8xf32>
    %81 = arith.addf %68, %80 : vector<1x8xf32>
    %82 = vector.broadcast %20 : f32 to vector<1x8xf32>
    %83 = arith.mulf %82, %57#5 : vector<1x8xf32>
    %84 = arith.addf %57#4, %83 : vector<1x8xf32>
    %85 = vector.broadcast %21 : f32 to vector<1x8xf32>
    %86 = arith.mulf %85, %57#6 : vector<1x8xf32>
    %87 = arith.addf %84, %86 : vector<1x8xf32>
    %88 = vector.broadcast %22 : f32 to vector<1x8xf32>
    %89 = arith.mulf %88, %57#7 : vector<1x8xf32>
    %90 = arith.addf %87, %89 : vector<1x8xf32>
    %91 = vector.broadcast %23 : f32 to vector<1x8xf32>
    %92 = arith.mulf %91, %57#8 : vector<1x8xf32>
    %93 = arith.addf %90, %92 : vector<1x8xf32>
    %94 = arith.subf %81, %93 : vector<1x8xf32>
    %95 = arith.mulf %94, %28 : vector<1x8xf32>
    %cst_46 = arith.constant dense<0.000000e+00> : vector<1xf32>
    %96 = vector.multi_reduction <add>, %95, %cst_46 [1] : vector<1x8xf32> to vector<1xf32>
    %97 = vector.shape_cast %96 : vector<1xf32> to vector<1x1xf32>
    %c0_47 = arith.constant 0 : index
    %c0_48 = arith.constant 0 : index
    %c0_49 = arith.constant 0 : index
    %98 = vector.load %arg7[%c0_47, %c0_48, %c0_49] : memref<1x1x1xf32, #tpu.memory_space<vmem>>, vector<1x1x1xf32>
    %99 = vector.shape_cast %98 : vector<1x1x1xf32> to vector<1x1xf32>
    %100 = vector.shape_cast %97 : vector<1x1xf32> to vector<1x1x1xf32>
    tpu.vector_store %arg7[%c0_47, %c0_48, %c0_49], %100 {strides = array<i32>} : memref<1x1x1xf32, #tpu.memory_space<vmem>>, vector<1x1x1xf32>,
    return
  }
  func.func @transform_0(%arg0: i32) -> (i32, i32) {
    %c0_i32 = arith.constant 0 : i32
    %c0_i32_0 = arith.constant 0 : i32
    %c0_i32_1 = arith.constant 0 : i32
    return %c0_i32, %c0_i32_0 : i32, i32
  }
  func.func @transform_1(%arg0: i32) -> i32 {
    %c0_i32 = arith.constant 0 : i32
    %c0_i32_0 = arith.constant 0 : i32
    return %c0_i32 : i32
  }
  func.func @transform_2(%arg0: i32) -> i32 {
    %c0_i32 = arith.constant 0 : i32
    %c0_i32_0 = arith.constant 0 : i32
    return %c0_i32 : i32
  }
  func.func @transform_3(%arg0: i32) -> (i32, i32, i32) {
    %c0_i32 = arith.constant 0 : i32
    %c0_i32_0 = arith.constant 0 : i32
    %c0_i32_1 = arith.constant 0 : i32
    return %c0_i32, %c0_i32_0, %arg0 : i32, i32, i32
  }
  func.func @transform_4(%arg0: i32) -> (i32, i32, i32) {
    %c0_i32 = arith.constant 0 : i32
    %c0_i32_0 = arith.constant 0 : i32
    %c0_i32_1 = arith.constant 0 : i32
    return %c0_i32, %c0_i32_0, %arg0 : i32, i32, i32
  }
  func.func @transform_5(%arg0: i32) -> (i32, i32) {
    %c0_i32 = arith.constant 0 : i32
    %c0_i32_0 = arith.constant 0 : i32
    return %c0_i32, %arg0 : i32, i32
  }
  func.func @transform_6(%arg0: i32) -> (i32, i32, i32) {
    %c0_i32 = arith.constant 0 : i32
    %c0_i32_0 = arith.constant 0 : i32
    %c0_i32_1 = arith.constant 0 : i32
    return %arg0, %c0_i32, %c0_i32_0 : i32, i32, i32
  }
}

</mosaic_0001>

<llo_original>
// kernel: model_forward.3
$region0: #{model_forward.3}
  #allocation0 [shape = 'u32[]', space=smem, size = 0x4, offset = 0x4, fixed_abs, tag = 'smem constant byte address 0x4 - core index']
  #allocation1 [shape = 'u32[144,128]{1,0:T(1,128)}', space=vmem, size = 0x12000, scoped, tag = 'internal scratch']
  %s0 = inlined_call_operand.vmem [shape: f32[16,12,32], index: 0, kind: input, shape index: {}]
  %s1 = inlined_call_operand.vmem [shape: f32[5,32,32], index: 1, kind: input, shape index: {}]
  %s2 = inlined_call_operand.vmem [shape: f32[1,32], index: 2, kind: input, shape index: {}]
  %s3 = inlined_call_operand.vmem [shape: f32[16,32], index: 3, kind: output, shape index: {}]
  %s4 = sld [smem:[#allocation0]]
  $region22: #{model_forward.3} parent=0
    _
  %s6 = ssub.s32 1, %s4
  %s7 = scalar_select 0, %s6, %s4
  // Predicated region
  $region2: #{model_forward.3} parent=0 // pred_check
    _
  $region3: #{model_forward.3} parent=0 // pred_check_branch
    %9 = sbr.rel (0) target = $region5
  $region4: #{model_forward.3} parent=0 // pred_region
    _
  $region5: #{model_forward.3} parent=0 // pred_fallthru
    _
  // Predicated region
  $region6: #{model_forward.3} parent=0 // pred_check
    _
  $region7: #{model_forward.3} parent=0 // pred_check_branch
    %11 = sbr.rel (0) target = $region9
  $region8: #{model_forward.3} parent=0 // pred_region
    _
  $region9: #{model_forward.3} parent=0 // pred_fallthru
    _
  // Predicated region
  $region10: #{model_forward.3} parent=0 // pred_check
    _
  $region11: #{model_forward.3} parent=0 // pred_check_branch
    %13 = sbr.rel (0) target = $region13
  $region12: #{model_forward.3} parent=0 // pred_region
    _
  $region13: #{model_forward.3} parent=0 // pred_fallthru
    _
  %v14 = vld [vmem:[%s0] sm:$0xff]
  %v15 = vld [vmem:[%s0 + $0x8] sm:$0xf]
  %v16 = vld [vmem:[%s0 + $0x10] sm:$0xff]
  %v17 = vld [vmem:[%s0 + $0x18] sm:$0xf]
  %v18 = vld [vmem:[%s0 + $0x20] sm:$0xff]
  %v19 = vld [vmem:[%s0 + $0x28] sm:$0xf]
  %v20 = vld [vmem:[%s0 + $0x30] sm:$0xff]
  %v21 = vld [vmem:[%s0 + $0x38] sm:$0xf]
  %v22 = vld [vmem:[%s0 + $0x40] sm:$0xff]
  %v23 = vld [vmem:[%s0 + $0x48] sm:$0xf]
  %v24 = vld [vmem:[%s0 + $0x50] sm:$0xff]
  %v25 = vld [vmem:[%s0 + $0x58] sm:$0xf]
  %v26 = vld [vmem:[%s0 + $0x60] sm:$0xff]
  %v27 = vld [vmem:[%s0 + $0x68] sm:$0xf]
  %v28 = vld [vmem:[%s0 + $0x70] sm:$0xff]
  %v29 = vld [vmem:[%s0 + $0x78] sm:$0xf]
  %v30 = vld [vmem:[%s0 + $0x80] sm:$0xff]
  %v31 = vld [vmem:[%s0 + $0x88] sm:$0xf]
  %v32 = vld [vmem:[%s0 + $0x90] sm:$0xff]
  %v33 = vld [vmem:[%s0 + $0x98] sm:$0xf]
  %v34 = vld [vmem:[%s0 + $0xa0] sm:$0xff]
  %v35 = vld [vmem:[%s0 + $0xa8] sm:$0xf]
  %v36 = vld [vmem:[%s0 + $0xb0] sm:$0xff]
  %v37 = vld [vmem:[%s0 + $0xb8] sm:$0xf]
  %v38 = vld [vmem:[%s0 + $0xc0] sm:$0xff]
  %v39 = vld [vmem:[%s0 + $0xc8] sm:$0xf]
  %v40 = vld [vmem:[%s0 + $0xd0] sm:$0xff]
  %v41 = vld [vmem:[%s0 + $0xd8] sm:$0xf]
  %v42 = vld [vmem:[%s0 + $0xe0] sm:$0xff]
  %v43 = vld [vmem:[%s0 + $0xe8] sm:$0xf]
  %v44 = vld [vmem:[%s0 + $0xf0] sm:$0xff]
  %v45 = vld [vmem:[%s0 + $0xf8] sm:$0xf]
  %v46 = vld [vmem:[%s1] sm:$0xff]
  %v47 = vld [vmem:[%s1 + $0x8] sm:$0xff]
  %v48 = vld [vmem:[%s1 + $0x10] sm:$0xff]
  %v49 = vld [vmem:[%s1 + $0x18] sm:$0xff]
  %vm82 = vcmask 1046528
  %v83 = vrot.slane %v14, 1
  %v84 = vrot.slane %v15, 1
  %v85 = vsel %vm82, %v83, %v84
  %v86 = vrot.slane %v16, 1
  %v87 = vrot.slane %v17, 1
  %v88 = vsel %vm82, %v86, %v87
  %v89 = vrot.slane %v18, 1
  %v90 = vrot.slane %v19, 1
  %v91 = vsel %vm82, %v89, %v90
  %v92 = vrot.slane %v20, 1
  %v93 = vrot.slane %v21, 1
  %v94 = vsel %vm82, %v92, %v93
  %v95 = vrot.slane %v22, 1
  %v96 = vrot.slane %v23, 1
  %v97 = vsel %vm82, %v95, %v96
  %v98 = vrot.slane %v24, 1
  %v99 = vrot.slane %v25, 1
  %v100 = vsel %vm82, %v98, %v99
  %v101 = vrot.slane %v26, 1
  %v102 = vrot.slane %v27, 1
  %v103 = vsel %vm82, %v101, %v102
  %v104 = vrot.slane %v28, 1
  %v105 = vrot.slane %v29, 1
  %v106 = vsel %vm82, %v104, %v105
  %v107 = vrot.slane %v30, 1
  %v108 = vrot.slane %v31, 1
  %v109 = vsel %vm82, %v107, %v108
  %v110 = vrot.slane %v32, 1
  %v111 = vrot.slane %v33, 1
  %v112 = vsel %vm82, %v110, %v111
  %v113 = vrot.slane %v34, 1
  %v114 = vrot.slane %v35, 1
  %v115 = vsel %vm82, %v113, %v114
  %v116 = vrot.slane %v36, 1
  %v117 = vrot.slane %v37, 1
  %v118 = vsel %vm82, %v116, %v117
  %v119 = vrot.slane %v38, 1
  %v120 = vrot.slane %v39, 1
  %v121 = vsel %vm82, %v119, %v120
  %v122 = vrot.slane %v40, 1
  %v123 = vrot.slane %v41, 1
  %v124 = vsel %vm82, %v122, %v123
  %v125 = vrot.slane %v42, 1
  %v126 = vrot.slane %v43, 1
  %v127 = vsel %vm82, %v125, %v126
  %v128 = vrot.slane %v44, 1
  %v129 = vrot.slane %v45, 1
  %v130 = vsel %vm82, %v128, %v129
  %s131 = scalar_lea.vmem %s1, 32
  %v132 = vld [vmem:[%s131] sm:$0xff]
  %v133 = vld [vmem:[%s131 + $0x8] sm:$0xff]
  %v134 = vld [vmem:[%s131 + $0x10] sm:$0xff]
  %v135 = vld [vmem:[%s131 + $0x18] sm:$0xff]
  %vm136 = vcmask 261120
  %v137 = vsel %vm136, %v85, 0
  %v139 = vsel %vm136, %v88, 0
  %v141 = vsel %vm136, %v91, 0
  %v143 = vsel %vm136, %v94, 0
  %v145 = vsel %vm136, %v97, 0
  %v147 = vsel %vm136, %v100, 0
  %v149 = vsel %vm136, %v103, 0
  %v151 = vsel %vm136, %v106, 0
  %v153 = vsel %vm136, %v109, 0
  %v155 = vsel %vm136, %v112, 0
  %v157 = vsel %vm136, %v115, 0
  %v159 = vsel %vm136, %v118, 0
  %v161 = vsel %vm136, %v121, 0
  %v163 = vsel %vm136, %v124, 0
  %v165 = vsel %vm136, %v127, 0
  %v167 = vsel %vm136, %v130, 0
  %169 = vmatprep.subr.mxu0 0.0
  %170 = vmatpush1.msra.mxu0 %v132
  %171 = vmatprep.subr.mxu0 0.0
  %172 = vmatpush1.msra.mxu0 %v133
  %173 = vmatprep.subr.mxu0 0.0
  %174 = vmatpush1.msra.mxu0 %v134
  %175 = vmatprep.subr.mxu0 0.0
  %176 = vmatpush1.msra.mxu0 %v135
  %177 = vmatprep.subr.mxu0 0.0
  %178 = vmatpush1.msra.mxu0 0.0
  %179 = vmatprep.subr.mxu0 0.0
  %180 = vmatpush1.msra.mxu0 0.0
  %181 = vmatprep.subr.mxu0 0.0
  %182 = vmatpush1.msra.mxu0 0.0
  %183 = vmatprep.subr.mxu0 0.0
  %184 = vmatpush1.msra.mxu0 0.0
  %185 = vmatprep.subr.mxu0 0.0
  %186 = vmatpush1.msra.mxu0 0.0
  %187 = vmatprep.subr.mxu0 0.0
  %188 = vmatpush1.msra.mxu0 0.0
  %189 = vmatprep.subr.mxu0 0.0
  %190 = vmatpush1.msra.mxu0 0.0
  %191 = vmatprep.subr.mxu0 0.0
  %192 = vmatpush1.msra.mxu0 0.0
  %193 = vmatprep.subr.mxu0 0.0
  %194 = vmatpush1.msra.mxu0 0.0
  %195 = vmatprep.subr.mxu0 0.0
  %196 = vmatpush1.msra.mxu0 0.0
  %197 = vmatprep.subr.mxu0 0.0
  %198 = vmatpush1.msra.mxu0 0.0
  %199 = vmatprep.subr.mxu0 0.0
  %200 = vmatpush1.msra.mxu0 0.0
  %201 = vmatprep.subr.mxu0 0.0
  %202 = vmatpush1.msra.mxu0 0.0
  %203 = vmatprep.subr.mxu0 0.0
  %204 = vmatpush1.msra.mxu0 0.0
  %205 = vmatprep.subr.mxu0 0.0
  %206 = vmatpush1.msra.mxu0 0.0
  %207 = vmatprep.subr.mxu0 0.0
  %208 = vmatpush1.msra.mxu0 0.0
  %209 = vmatprep.subr.mxu0 0.0
  %210 = vmatpush1.msra.mxu0 0.0
  %211 = vmatprep.subr.mxu0 0.0
  %212 = vmatpush1.msra.mxu0 0.0
  %213 = vmatprep.subr.mxu0 0.0
  %214 = vmatpush1.msra.mxu0 0.0
  %215 = vmatprep.subr.mxu0 0.0
  %216 = vmatpush1.msra.mxu0 0.0
  %217 = vmatprep.subr.mxu0 0.0
  %218 = vmatpush1.msra.mxu0 0.0
  %219 = vmatprep.subr.mxu0 0.0
  %220 = vmatpush1.msra.mxu0 0.0
  %221 = vmatprep.subr.mxu0 0.0
  %222 = vmatpush1.msra.mxu0 0.0
  %223 = vmatprep.subr.mxu0 0.0
  %224 = vmatpush1.msra.mxu0 0.0
  %225 = vmatprep.subr.mxu0 0.0
  %226 = vmatpush1.msra.mxu0 0.0
  %227 = vmatprep.subr.mxu0 0.0
  %228 = vmatpush1.msra.mxu0 0.0
  %229 = vmatprep.subr.mxu0 0.0
  %230 = vmatpush1.msra.mxu0 0.0
  %231 = vmatprep.subr.mxu0 0.0
  %232 = vmatpush1.msra.mxu0 0.0
  %233 = vmatprep.mubr.f32.mxu0 0.0
  %234 = vmatmul.mubr.f32.gmra.mrb[0].mxu0 %v137
  %v235 = vpop.f32.mrb[0].mxu0
  %v236 = vadd.f32 0.0, %v235
  %v237 = vpop.f32.mrb[0].mxu0
  %238 = vmatprep.mubr.f32.mxu0 0.0
  %239 = vmatmul.mubr.f32.gmra.mrb[0].mxu0 %v139
  %v240 = vpop.f32.mrb[0].mxu0
  %v241 = vadd.f32 0.0, %v240
  %v242 = vpop.f32.mrb[0].mxu0
  %243 = vmatprep.mubr.f32.mxu0 0.0
  %244 = vmatmul.mubr.f32.gmra.mrb[0].mxu0 %v141
  %v245 = vpop.f32.mrb[0].mxu0
  %v246 = vadd.f32 0.0, %v245
  %v247 = vpop.f32.mrb[0].mxu0
  %248 = vmatprep.mubr.f32.mxu0 0.0
  %249 = vmatmul.mubr.f32.gmra.mrb[0].mxu0 %v143
  %v250 = vpop.f32.mrb[0].mxu0
  %v251 = vadd.f32 0.0, %v250
  %v252 = vpop.f32.mrb[0].mxu0
  %253 = vmatprep.mubr.f32.mxu0 0.0
  %254 = vmatmul.mubr.f32.gmra.mrb[0].mxu0 %v145
  %v255 = vpop.f32.mrb[0].mxu0
  %v256 = vadd.f32 0.0, %v255
  %v257 = vpop.f32.mrb[0].mxu0
  %258 = vmatprep.mubr.f32.mxu0 0.0
  %259 = vmatmul.mubr.f32.gmra.mrb[0].mxu0 %v147
  %v260 = vpop.f32.mrb[0].mxu0
  %v261 = vadd.f32 0.0, %v260
  %v262 = vpop.f32.mrb[0].mxu0
  %263 = vmatprep.mubr.f32.mxu0 0.0
  %264 = vmatmul.mubr.f32.gmra.mrb[0].mxu0 %v149
  %v265 = vpop.f32.mrb[0].mxu0
  %v266 = vadd.f32 0.0, %v265
  %v267 = vpop.f32.mrb[0].mxu0
  %268 = vmatprep.mubr.f32.mxu0 0.0
  %269 = vmatmul.mubr.f32.gmra.mrb[0].mxu0 %v151
  %v270 = vpop.f32.mrb[0].mxu0
  %v271 = vadd.f32 0.0, %v270
  %v272 = vpop.f32.mrb[0].mxu0
  %273 = vmatprep.mubr.f32.mxu0 0.0
  %274 = vmatmul.mubr.f32.gmra.mrb[0].mxu0 %v153
  %v275 = vpop.f32.mrb[0].mxu0
  %v276 = vadd.f32 0.0, %v275
  %v277 = vpop.f32.mrb[0].mxu0
  %278 = vmatprep.mubr.f32.mxu0 0.0
  %279 = vmatmul.mubr.f32.gmra.mrb[0].mxu0 %v155
  %v280 = vpop.f32.mrb[0].mxu0
  %v281 = vadd.f32 0.0, %v280
  %v282 = vpop.f32.mrb[0].mxu0
  %283 = vmatprep.mubr.f32.mxu0 0.0
  %284 = vmatmul.mubr.f32.gmra.mrb[0].mxu0 %v157
  %v285 = vpop.f32.mrb[0].mxu0
  %v286 = vadd.f32 0.0, %v285
  %v287 = vpop.f32.mrb[0].mxu0
  %288 = vmatprep.mubr.f32.mxu0 0.0
  %289 = vmatmul.mubr.f32.gmra.mrb[0].mxu0 %v159
  %v290 = vpop.f32.mrb[0].mxu0
  %v291 = vadd.f32 0.0, %v290
  %v292 = vpop.f32.mrb[0].mxu0
  %293 = vmatprep.mubr.f32.mxu0 0.0
  %294 = vmatmul.mubr.f32.gmra.mrb[0].mxu0 %v161
  %v295 = vpop.f32.mrb[0].mxu0
  %v296 = vadd.f32 0.0, %v295
  %v297 = vpop.f32.mrb[0].mxu0
  %298 = vmatprep.mubr.f32.mxu0 0.0
  %299 = vmatmul.mubr.f32.gmra.mrb[0].mxu0 %v163
  %v300 = vpop.f32.mrb[0].mxu0
  %v301 = vadd.f32 0.0, %v300
  %v302 = vpop.f32.mrb[0].mxu0
  %303 = vmatprep.mubr.f32.mxu0 0.0
  %304 = vmatmul.mubr.f32.gmra.mrb[0].mxu0 %v165
  %v305 = vpop.f32.mrb[0].mxu0
  %v306 = vadd.f32 0.0, %v305
  %v307 = vpop.f32.mrb[0].mxu0
  %308 = vmatprep.mubr.f32.mxu0 0.0
  %309 = vmatmul.mubr.f32.gmra.mrb[0].mxu0 %v167
  %v310 = vpop.f32.mrb[0].mxu0
  %v311 = vadd.f32 0.0, %v310
  %v312 = vpop.f32.mrb[0].mxu0
  %313 = vdwg.mxu0
  %v314 = vsel %vm136, %v14, 0
  %v316 = vsel %vm136, %v16, 0
  %v318 = vsel %vm136, %v18, 0
  %v320 = vsel %vm136, %v20, 0
  %v322 = vsel %vm136, %v22, 0
  %v324 = vsel %vm136, %v24, 0
  %v326 = vsel %vm136, %v26, 0
  %v328 = vsel %vm136, %v28, 0
  %v330 = vsel %vm136, %v30, 0
  %v332 = vsel %vm136, %v32, 0
  %v334 = vsel %vm136, %v34, 0
  %v336 = vsel %vm136, %v36, 0
  %v338 = vsel %vm136, %v38, 0
  %v340 = vsel %vm136, %v40, 0
  %v342 = vsel %vm136, %v42, 0
  %v344 = vsel %vm136, %v44, 0
  %346 = vmatprep.subr.mxu0 0.0
  %347 = vmatpush1.msra.mxu0 %v46
  %348 = vmatprep.subr.mxu0 0.0
  %349 = vmatpush1.msra.mxu0 %v47
  %350 = vmatprep.subr.mxu0 0.0
  %351 = vmatpush1.msra.mxu0 %v48
  %352 = vmatprep.subr.mxu0 0.0
  %353 = vmatpush1.msra.mxu0 %v49
  %354 = vmatprep.subr.mxu0 0.0
  %355 = vmatpush1.msra.mxu0 0.0
  %356 = vmatprep.subr.mxu0 0.0
  %357 = vmatpush1.msra.mxu0 0.0
  %358 = vmatprep.subr.mxu0 0.0
  %359 = vmatpush1.msra.mxu0 0.0
  %360 = vmatprep.subr.mxu0 0.0
  %361 = vmatpush1.msra.mxu0 0.0
  %362 = vmatprep.subr.mxu0 0.0
  %363 = vmatpush1.msra.mxu0 0.0
  %364 = vmatprep.subr.mxu0 0.0
  %365 = vmatpush1.msra.mxu0 0.0
  %366 = vmatprep.subr.mxu0 0.0
  %367 = vmatpush1.msra.mxu0 0.0
  %368 = vmatprep.subr.mxu0 0.0
  %369 = vmatpush1.msra.mxu0 0.0
  %370 = vmatprep.subr.mxu0 0.0
  %371 = vmatpush1.msra.mxu0 0.0
  %372 = vmatprep.subr.mxu0 0.0
  %373 = vmatpush1.msra.mxu0 0.0
  %374 = vmatprep.subr.mxu0 0.0
  %375 = vmatpush1.msra.mxu0 0.0
  %376 = vmatprep.subr.mxu0 0.0
  %377 = vmatpush1.msra.mxu0 0.0
  %378 = vmatprep.subr.mxu0 0.0
  %379 = vmatpush1.msra.mxu0 0.0
  %380 = vmatprep.subr.mxu0 0.0
  %381 = vmatpush1.msra.mxu0 0.0
  %382 = vmatprep.subr.mxu0 0.0
  %383 = vmatpush1.msra.mxu0 0.0
  %384 = vmatprep.subr.mxu0 0.0
  %385 = vmatpush1.msra.mxu0 0.0
  %386 = vmatprep.subr.mxu0 0.0
  %387 = vmatpush1.msra.mxu0 0.0
  %388 = vmatprep.subr.mxu0 0.0
  %389 = vmatpush1.msra.mxu0 0.0
  %390 = vmatprep.subr.mxu0 0.0
  %391 = vmatpush1.msra.mxu0 0.0
  %392 = vmatprep.subr.mxu0 0.0
  %393 = vmatpush1.msra.mxu0 0.0
  %394 = vmatprep.subr.mxu0 0.0
  %395 = vmatpush1.msra.mxu0 0.0
  %396 = vmatprep.subr.mxu0 0.0
  %397 = vmatpush1.msra.mxu0 0.0
  %398 = vmatprep.subr.mxu0 0.0
  %399 = vmatpush1.msra.mxu0 0.0
  %400 = vmatprep.subr.mxu0 0.0
  %401 = vmatpush1.msra.mxu0 0.0
  %402 = vmatprep.subr.mxu0 0.0
  %403 = vmatpush1.msra.mxu0 0.0
  %404 = vmatprep.subr.mxu0 0.0
  %405 = vmatpush1.msra.mxu0 0.0
  %406 = vmatprep.subr.mxu0 0.0
  %407 = vmatpush1.msra.mxu0 0.0
  %408 = vmatprep.subr.mxu0 0.0
  %409 = vmatpush1.msra.mxu0 0.0
  %410 = vmatprep.mubr.f32.mxu0 0.0
  %411 = vmatmul.mubr.f32.gmra.mrb[0].mxu0 %v314
  %v412 = vpop.f32.mrb[0].mxu0
  %v413 = vadd.f32 %v236, %v412
  %v414 = vpop.f32.mrb[0].mxu0
  %415 = vmatprep.mubr.f32.mxu0 0.0
  %416 = vmatmul.mubr.f32.gmra.mrb[0].mxu0 %v316
  %v417 = vpop.f32.mrb[0].mxu0
  %v418 = vadd.f32 %v241, %v417
  %v419 = vpop.f32.mrb[0].mxu0
  %420 = vmatprep.mubr.f32.mxu0 0.0
  %421 = vmatmul.mubr.f32.gmra.mrb[0].mxu0 %v318
  %v422 = vpop.f32.mrb[0].mxu0
  %v423 = vadd.f32 %v246, %v422
  %v424 = vpop.f32.mrb[0].mxu0
  %425 = vmatprep.mubr.f32.mxu0 0.0
  %426 = vmatmul.mubr.f32.gmra.mrb[0].mxu0 %v320
  %v427 = vpop.f32.mrb[0].mxu0
  %v428 = vadd.f32 %v251, %v427
  %v429 = vpop.f32.mrb[0].mxu0
  %430 = vmatprep.mubr.f32.mxu0 0.0
  %431 = vmatmul.mubr.f32.gmra.mrb[0].mxu0 %v322
  %v432 = vpop.f32.mrb[0].mxu0
  %v433 = vadd.f32 %v256, %v432
  %v434 = vpop.f32.mrb[0].mxu0
  %435 = vmatprep.mubr.f32.mxu0 0.0
  %436 = vmatmul.mubr.f32.gmra.mrb[0].mxu0 %v324
  %v437 = vpop.f32.mrb[0].mxu0
  %v438 = vadd.f32 %v261, %v437
  %v439 = vpop.f32.mrb[0].mxu0
  %440 = vmatprep.mubr.f32.mxu0 0.0
  %441 = vmatmul.mubr.f32.gmra.mrb[0].mxu0 %v326
  %v442 = vpop.f32.mrb[0].mxu0
  %v443 = vadd.f32 %v266, %v442
  %v444 = vpop.f32.mrb[0].mxu0
  %445 = vmatprep.mubr.f32.mxu0 0.0
  %446 = vmatmul.mubr.f32.gmra.mrb[0].mxu0 %v328
  %v447 = vpop.f32.mrb[0].mxu0
  %v448 = vadd.f32 %v271, %v447
  %v449 = vpop.f32.mrb[0].mxu0
  %450 = vmatprep.mubr.f32.mxu0 0.0
  %451 = vmatmul.mubr.f32.gmra.mrb[0].mxu0 %v330
  %v452 = vpop.f32.mrb[0].mxu0
  %v453 = vadd.f32 %v276, %v452
  %v454 = vpop.f32.mrb[0].mxu0
  %455 = vmatprep.mubr.f32.mxu0 0.0
  %456 = vmatmul.mubr.f32.gmra.mrb[0].mxu0 %v332
  %v457 = vpop.f32.mrb[0].mxu0
  %v458 = vadd.f32 %v281, %v457
  %v459 = vpop.f32.mrb[0].mxu0
  %460 = vmatprep.mubr.f32.mxu0 0.0
  %461 = vmatmul.mubr.f32.gmra.mrb[0].mxu0 %v334
  %v462 = vpop.f32.mrb[0].mxu0
  %v463 = vadd.f32 %v286, %v462
  %v464 = vpop.f32.mrb[0].mxu0
  %465 = vmatprep.mubr.f32.mxu0 0.0
  %466 = vmatmul.mubr.f32.gmra.mrb[0].mxu0 %v336
  %v467 = vpop.f32.mrb[0].mxu0
  %v468 = vadd.f32 %v291, %v467
  %v469 = vpop.f32.mrb[0].mxu0
  %470 = vmatprep.mubr.f32.mxu0 0.0
  %471 = vmatmul.mubr.f32.gmra.mrb[0].mxu0 %v338
  %v472 = vpop.f32.mrb[0].mxu0
  %v473 = vadd.f32 %v296, %v472
  %v474 = vpop.f32.mrb[0].mxu0
  %475 = vmatprep.mubr.f32.mxu0 0.0
  %476 = vmatmul.mubr.f32.gmra.mrb[0].mxu0 %v340
  %v477 = vpop.f32.mrb[0].mxu0
  %v478 = vadd.f32 %v301, %v477
  %v479 = vpop.f32.mrb[0].mxu0
  %480 = vmatprep.mubr.f32.mxu0 0.0
  %481 = vmatmul.mubr.f32.gmra.mrb[0].mxu0 %v342
  %v482 = vpop.f32.mrb[0].mxu0
  %v483 = vadd.f32 %v306, %v482
  %v484 = vpop.f32.mrb[0].mxu0
  %485 = vmatprep.mubr.f32.mxu0 0.0
  %486 = vmatmul.mubr.f32.gmra.mrb[0].mxu0 %v344
  %v487 = vpop.f32.mrb[0].mxu0
  %v488 = vadd.f32 %v311, %v487
  %v489 = vpop.f32.mrb[0].mxu0
  %490 = vdwg.mxu0
  %vm491 = vcmask 1045504
  %v492 = vrot.slane %v14, 2
  %v493 = vrot.slane %v15, 2
  %v494 = vsel %vm491, %v492, %v493
  %v495 = vrot.slane %v16, 2
  %v496 = vrot.slane %v17, 2
  %v497 = vsel %vm491, %v495, %v496
  %v498 = vrot.slane %v18, 2
  %v499 = vrot.slane %v19, 2
  %v500 = vsel %vm491, %v498, %v499
  %v501 = vrot.slane %v20, 2
  %v502 = vrot.slane %v21, 2
  %v503 = vsel %vm491, %v501, %v502
  %v504 = vrot.slane %v22, 2
  %v505 = vrot.slane %v23, 2
  %v506 = vsel %vm491, %v504, %v505
  %v507 = vrot.slane %v24, 2
  %v508 = vrot.slane %v25, 2
  %v509 = vsel %vm491, %v507, %v508
  %v510 = vrot.slane %v26, 2
  %v511 = vrot.slane %v27, 2
  %v512 = vsel %vm491, %v510, %v511
  %v513 = vrot.slane %v28, 2
  %v514 = vrot.slane %v29, 2
  %v515 = vsel %vm491, %v513, %v514
  %v516 = vrot.slane %v30, 2
  %v517 = vrot.slane %v31, 2
  %v518 = vsel %vm491, %v516, %v517
  %v519 = vrot.slane %v32, 2
  %v520 = vrot.slane %v33, 2
  %v521 = vsel %vm491, %v519, %v520
  %v522 = vrot.slane %v34, 2
  %v523 = vrot.slane %v35, 2
  %v524 = vsel %vm491, %v522, %v523
  %v525 = vrot.slane %v36, 2
  %v526 = vrot.slane %v37, 2
  %v527 = vsel %vm491, %v525, %v526
  %v528 = vrot.slane %v38, 2
  %v529 = vrot.slane %v39, 2
  %v530 = vsel %vm491, %v528, %v529
  %v531 = vrot.slane %v40, 2
  %v532 = vrot.slane %v41, 2
  %v533 = vsel %vm491, %v531, %v532
  %v534 = vrot.slane %v42, 2
  %v535 = vrot.slane %v43, 2
  %v536 = vsel %vm491, %v534, %v535
  %v537 = vrot.slane %v44, 2
  %v538 = vrot.slane %v45, 2
  %v539 = vsel %vm491, %v537, %v538
  %s540 = scalar_lea.vmem %s1, 64
  %v541 = vld [vmem:[%s540] sm:$0xff]
  %v542 = vld [vmem:[%s540 + $0x8] sm:$0xff]
  %v543 = vld [vmem:[%s540 + $0x10] sm:$0xff]
  %v544 = vld [vmem:[%s540 + $0x18] sm:$0xff]
  %v545 = vsel %vm136, %v494, 0
  %v547 = vsel %vm136, %v497, 0
  %v549 = vsel %vm136, %v500, 0
  %v551 = vsel %vm136, %v503, 0
  %v553 = vsel %vm136, %v506, 0
  %v555 = vsel %vm136, %v509, 0
  %v557 = vsel %vm136, %v512, 0
  %v559 = vsel %vm136, %v515, 0
  %v561 = vsel %vm136, %v518, 0
  %v563 = vsel %vm136, %v521, 0
  %v565 = vsel %vm136, %v524, 0
  %v567 = vsel %vm136, %v527, 0
  %v569 = vsel %vm136, %v530, 0
  %v571 = vsel %vm136, %v533, 0
  %v573 = vsel %vm136, %v536, 0
  %v575 = vsel %vm136, %v539, 0
  %577 = vmatprep.subr.mxu0 0.0
  %578 = vmatpush1.msra.mxu0 %v541
  %579 = vmatprep.subr.mxu0 0.0
  %580 = vmatpush1.msra.mxu0 %v542
  %581 = vmatprep.subr.mxu0 0.0
  %582 = vmatpush1.msra.mxu0 %v543
  %583 = vmatprep.subr.mxu0 0.0
  %584 = vmatpush1.msra.mxu0 %v544
  %585 = vmatprep.subr.mxu0 0.0
  %586 = vmatpush1.msra.mxu0 0.0
  %587 = vmatprep.subr.mxu0 0.0
  %588 = vmatpush1.msra.mxu0 0.0
  %589 = vmatprep.subr.mxu0 0.0
  %590 = vmatpush1.msra.mxu0 0.0
  %591 = vmatprep.subr.mxu0 0.0
  %592 = vmatpush1.msra.mxu0 0.0
  %593 = vmatprep.subr.mxu0 0.0
  %594 = vmatpush1.msra.mxu0 0.0
  %595 = vmatprep.subr.mxu0 0.0
  %596 = vmatpush1.msra.mxu0 0.0
  %597 = vmatprep.subr.mxu0 0.0
  %598 = vmatpush1.msra.mxu0 0.0
  %599 = vmatprep.subr.mxu0 0.0
  %600 = vmatpush1.msra.mxu0 0.0
  %601 = vmatprep.subr.mxu0 0.0
  %602 = vmatpush1.msra.mxu0 0.0
  %603 = vmatprep.subr.mxu0 0.0
  %604 = vmatpush1.msra.mxu0 0.0
  %605 = vmatprep.subr.mxu0 0.0
  %606 = vmatpush1.msra.mxu0 0.0
  %607 = vmatprep.subr.mxu0 0.0
  %608 = vmatpush1.msra.mxu0 0.0
  %609 = vmatprep.subr.mxu0 0.0
  %610 = vmatpush1.msra.mxu0 0.0
  %611 = vmatprep.subr.mxu0 0.0
  %612 = vmatpush1.msra.mxu0 0.0
  %613 = vmatprep.subr.mxu0 0.0
  %614 = vmatpush1.msra.mxu0 0.0
  %615 = vmatprep.subr.mxu0 0.0
  %616 = vmatpush1.msra.mxu0 0.0
  %617 = vmatprep.subr.mxu0 0.0
  %618 = vmatpush1.msra.mxu0 0.0
  %619 = vmatprep.subr.mxu0 0.0
  %620 = vmatpush1.msra.mxu0 0.0
  %621 = vmatprep.subr.mxu0 0.0
  %622 = vmatpush1.msra.mxu0 0.0
  %623 = vmatprep.subr.mxu0 0.0
  %624 = vmatpush1.msra.mxu0 0.0
  %625 = vmatprep.subr.mxu0 0.0
  %626 = vmatpush1.msra.mxu0 0.0
  %627 = vmatprep.subr.mxu0 0.0
  %628 = vmatpush1.msra.mxu0 0.0
  %629 = vmatprep.subr.mxu0 0.0
  %630 = vmatpush1.msra.mxu0 0.0
  %631 = vmatprep.subr.mxu0 0.0
  %632 = vmatpush1.msra.mxu0 0.0
  %633 = vmatprep.subr.mxu0 0.0
  %634 = vmatpush1.msra.mxu0 0.0
  %635 = vmatprep.subr.mxu0 0.0
  %636 = vmatpush1.msra.mxu0 0.0
  %637 = vmatprep.subr.mxu0 0.0
  %638 = vmatpush1.msra.mxu0 0.0
  %639 = vmatprep.subr.mxu0 0.0
  %640 = vmatpush1.msra.mxu0 0.0
  %641 = vmatprep.mubr.f32.mxu0 0.0
  %642 = vmatmul.mubr.f32.gmra.mrb[0].mxu0 %v545
  %v643 = vpop.f32.mrb[0].mxu0
  %v644 = vadd.f32 0.0, %v643
  %v645 = vpop.f32.mrb[0].mxu0
  %646 = vmatprep.mubr.f32.mxu0 0.0
  %647 = vmatmul.mubr.f32.gmra.mrb[0].mxu0 %v547
  %v648 = vpop.f32.mrb[0].mxu0
  %v649 = vadd.f32 0.0, %v648
  %v650 = vpop.f32.mrb[0].mxu0
  %651 = vmatprep.mubr.f32.mxu0 0.0
  %652 = vmatmul.mubr.f32.gmra.mrb[0].mxu0 %v549
  %v653 = vpop.f32.mrb[0].mxu0
  %v654 = vadd.f32 0.0, %v653
  %v655 = vpop.f32.mrb[0].mxu0
  %656 = vmatprep.mubr.f32.mxu0 0.0
  %657 = vmatmul.mubr.f32.gmra.mrb[0].mxu0 %v551
  %v658 = vpop.f32.mrb[0].mxu0
  %v659 = vadd.f32 0.0, %v658
  %v660 = vpop.f32.mrb[0].mxu0
  %661 = vmatprep.mubr.f32.mxu0 0.0
  %662 = vmatmul.mubr.f32.gmra.mrb[0].mxu0 %v553
  %v663 = vpop.f32.mrb[0].mxu0
  %v664 = vadd.f32 0.0, %v663
  %v665 = vpop.f32.mrb[0].mxu0
  %666 = vmatprep.mubr.f32.mxu0 0.0
  %667 = vmatmul.mubr.f32.gmra.mrb[0].mxu0 %v555
  %v668 = vpop.f32.mrb[0].mxu0
  %v669 = vadd.f32 0.0, %v668
  %v670 = vpop.f32.mrb[0].mxu0
  %671 = vmatprep.mubr.f32.mxu0 0.0
  %672 = vmatmul.mubr.f32.gmra.mrb[0].mxu0 %v557
  %v673 = vpop.f32.mrb[0].mxu0
  %v674 = vadd.f32 0.0, %v673
  %v675 = vpop.f32.mrb[0].mxu0
  %676 = vmatprep.mubr.f32.mxu0 0.0
  %677 = vmatmul.mubr.f32.gmra.mrb[0].mxu0 %v559
  %v678 = vpop.f32.mrb[0].mxu0
  %v679 = vadd.f32 0.0, %v678
  %v680 = vpop.f32.mrb[0].mxu0
  %681 = vmatprep.mubr.f32.mxu0 0.0
  %682 = vmatmul.mubr.f32.gmra.mrb[0].mxu0 %v561
  %v683 = vpop.f32.mrb[0].mxu0
  %v684 = vadd.f32 0.0, %v683
  %v685 = vpop.f32.mrb[0].mxu0
  %686 = vmatprep.mubr.f32.mxu0 0.0
  %687 = vmatmul.mubr.f32.gmra.mrb[0].mxu0 %v563
  %v688 = vpop.f32.mrb[0].mxu0
  %v689 = vadd.f32 0.0, %v688
  %v690 = vpop.f32.mrb[0].mxu0
  %691 = vmatprep.mubr.f32.mxu0 0.0
  %692 = vmatmul.mubr.f32.gmra.mrb[0].mxu0 %v565
  %v693 = vpop.f32.mrb[0].mxu0
  %v694 = vadd.f32 0.0, %v693
  %v695 = vpop.f32.mrb[0].mxu0
  %696 = vmatprep.mubr.f32.mxu0 0.0
  %697 = vmatmul.mubr.f32.gmra.mrb[0].mxu0 %v567
  %v698 = vpop.f32.mrb[0].mxu0
  %v699 = vadd.f32 0.0, %v698
  %v700 = vpop.f32.mrb[0].mxu0
  %701 = vmatprep.mubr.f32.mxu0 0.0
  %702 = vmatmul.mubr.f32.gmra.mrb[0].mxu0 %v569
  %v703 = vpop.f32.mrb[0].mxu0
  %v704 = vadd.f32 0.0, %v703
  %v705 = vpop.f32.mrb[0].mxu0
  %706 = vmatprep.mubr.f32.mxu0 0.0
  %707 = vmatmul.mubr.f32.gmra.mrb[0].mxu0 %v571
  %v708 = vpop.f32.mrb[0].mxu0
  %v709 = vadd.f32 0.0, %v708
  %v710 = vpop.f32.mrb[0].mxu0
  %711 = vmatprep.mubr.f32.mxu0 0.0
  %712 = vmatmul.mubr.f32.gmra.mrb[0].mxu0 %v573
  %v713 = vpop.f32.mrb[0].mxu0
  %v714 = vadd.f32 0.0, %v713
  %v715 = vpop.f32.mrb[0].mxu0
  %716 = vmatprep.mubr.f32.mxu0 0.0
  %717 = vmatmul.mubr.f32.gmra.mrb[0].mxu0 %v575
  %v718 = vpop.f32.mrb[0].mxu0
  %v719 = vadd.f32 0.0, %v718
  %v720 = vpop.f32.mrb[0].mxu0
  %721 = vdwg.mxu0
  %v722 = vadd.f32 %v413, %v644
  %v723 = vadd.f32 %v418, %v649
  %v724 = vadd.f32 %v423, %v654
  %v725 = vadd.f32 %v428, %v659
  %v726 = vadd.f32 %v433, %v664
  %v727 = vadd.f32 %v438, %v669
  %v728 = vadd.f32 %v443, %v674
  %v729 = vadd.f32 %v448, %v679
  %v730 = vadd.f32 %v453, %v684
  %v731 = vadd.f32 %v458, %v689
  %v732 = vadd.f32 %v463, %v694
  %v733 = vadd.f32 %v468, %v699
  %v734 = vadd.f32 %v473, %v704
  %v735 = vadd.f32 %v478, %v709
  %v736 = vadd.f32 %v483, %v714
  %v737 = vadd.f32 %v488, %v719
  %vm738 = vcmask 1044480
  %v739 = vrot.slane %v14, 3
  %v740 = vrot.slane %v15, 3
  %v741 = vsel %vm738, %v739, %v740
  %v742 = vrot.slane %v16, 3
  %v743 = vrot.slane %v17, 3
  %v744 = vsel %vm738, %v742, %v743
  %v745 = vrot.slane %v18, 3
  %v746 = vrot.slane %v19, 3
  %v747 = vsel %vm738, %v745, %v746
  %v748 = vrot.slane %v20, 3
  %v749 = vrot.slane %v21, 3
  %v750 = vsel %vm738, %v748, %v749
  %v751 = vrot.slane %v22, 3
  %v752 = vrot.slane %v23, 3
  %v753 = vsel %vm738, %v751, %v752
  %v754 = vrot.slane %v24, 3
  %v755 = vrot.slane %v25, 3
  %v756 = vsel %vm738, %v754, %v755
  %v757 = vrot.slane %v26, 3
  %v758 = vrot.slane %v27, 3
  %v759 = vsel %vm738, %v757, %v758
  %v760 = vrot.slane %v28, 3
  %v761 = vrot.slane %v29, 3
  %v762 = vsel %vm738, %v760, %v761
  %v763 = vrot.slane %v30, 3
  %v764 = vrot.slane %v31, 3
  %v765 = vsel %vm738, %v763, %v764
  %v766 = vrot.slane %v32, 3
  %v767 = vrot.slane %v33, 3
  %v768 = vsel %vm738, %v766, %v767
  %v769 = vrot.slane %v34, 3
  %v770 = vrot.slane %v35, 3
  %v771 = vsel %vm738, %v769, %v770
  %v772 = vrot.slane %v36, 3
  %v773 = vrot.slane %v37, 3
  %v774 = vsel %vm738, %v772, %v773
  %v775 = vrot.slane %v38, 3
  %v776 = vrot.slane %v39, 3
  %v777 = vsel %vm738, %v775, %v776
  %v778 = vrot.slane %v40, 3
  %v779 = vrot.slane %v41, 3
  %v780 = vsel %vm738, %v778, %v779
  %v781 = vrot.slane %v42, 3
  %v782 = vrot.slane %v43, 3
  %v783 = vsel %vm738, %v781, %v782
  %v784 = vrot.slane %v44, 3
  %v785 = vrot.slane %v45, 3
  %v786 = vsel %vm738, %v784, %v785
  %s787 = scalar_lea.vmem %s1, 96
  %v788 = vld [vmem:[%s787] sm:$0xff]
  %v789 = vld [vmem:[%s787 + $0x8] sm:$0xff]
  %v790 = vld [vmem:[%s787 + $0x10] sm:$0xff]
  %v791 = vld [vmem:[%s787 + $0x18] sm:$0xff]
  %v792 = vsel %vm136, %v741, 0
  %v794 = vsel %vm136, %v744, 0
  %v796 = vsel %vm136, %v747, 0
  %v798 = vsel %vm136, %v750, 0
  %v800 = vsel %vm136, %v753, 0
  %v802 = vsel %vm136, %v756, 0
  %v804 = vsel %vm136, %v759, 0
  %v806 = vsel %vm136, %v762, 0
  %v808 = vsel %vm136, %v765, 0
  %v810 = vsel %vm136, %v768, 0
  %v812 = vsel %vm136, %v771, 0
  %v814 = vsel %vm136, %v774, 0
  %v816 = vsel %vm136, %v777, 0
  %v818 = vsel %vm136, %v780, 0
  %v820 = vsel %vm136, %v783, 0
  %v822 = vsel %vm136, %v786, 0
  %824 = vmatprep.subr.mxu0 0.0
  %825 = vmatpush1.msra.mxu0 %v788
  %826 = vmatprep.subr.mxu0 0.0
  %827 = vmatpush1.msra.mxu0 %v789
  %828 = vmatprep.subr.mxu0 0.0
  %829 = vmatpush1.msra.mxu0 %v790
  %830 = vmatprep.subr.mxu0 0.0
  %831 = vmatpush1.msra.mxu0 %v791
  %832 = vmatprep.subr.mxu0 0.0
  %833 = vmatpush1.msra.mxu0 0.0
  %834 = vmatprep.subr.mxu0 0.0
  %835 = vmatpush1.msra.mxu0 0.0
  %836 = vmatprep.subr.mxu0 0.0
  %837 = vmatpush1.msra.mxu0 0.0
  %838 = vmatprep.subr.mxu0 0.0
  %839 = vmatpush1.msra.mxu0 0.0
  %840 = vmatprep.subr.mxu0 0.0
  %841 = vmatpush1.msra.mxu0 0.0
  %842 = vmatprep.subr.mxu0 0.0
  %843 = vmatpush1.msra.mxu0 0.0
  %844 = vmatprep.subr.mxu0 0.0
  %845 = vmatpush1.msra.mxu0 0.0
  %846 = vmatprep.subr.mxu0 0.0
  %847 = vmatpush1.msra.mxu0 0.0
  %848 = vmatprep.subr.mxu0 0.0
  %849 = vmatpush1.msra.mxu0 0.0
  %850 = vmatprep.subr.mxu0 0.0
  %851 = vmatpush1.msra.mxu0 0.0
  %852 = vmatprep.subr.mxu0 0.0
  %853 = vmatpush1.msra.mxu0 0.0
  %854 = vmatprep.subr.mxu0 0.0
  %855 = vmatpush1.msra.mxu0 0.0
  %856 = vmatprep.subr.mxu0 0.0
  %857 = vmatpush1.msra.mxu0 0.0
  %858 = vmatprep.subr.mxu0 0.0
  %859 = vmatpush1.msra.mxu0 0.0
  %860 = vmatprep.subr.mxu0 0.0
  %861 = vmatpush1.msra.mxu0 0.0
  %862 = vmatprep.subr.mxu0 0.0
  %863 = vmatpush1.msra.mxu0 0.0
  %864 = vmatprep.subr.mxu0 0.0
  %865 = vmatpush1.msra.mxu0 0.0
  %866 = vmatprep.subr.mxu0 0.0
  %867 = vmatpush1.msra.mxu0 0.0
  %868 = vmatprep.subr.mxu0 0.0
  %869 = vmatpush1.msra.mxu0 0.0
  %870 = vmatprep.subr.mxu0 0.0
  %871 = vmatpush1.msra.mxu0 0.0
  %872 = vmatprep.subr.mxu0 0.0
  %873 = vmatpush1.msra.mxu0 0.0
  %874 = vmatprep.subr.mxu0 0.0
  %875 = vmatpush1.msra.mxu0 0.0
  %876 = vmatprep.subr.mxu0 0.0
  %877 = vmatpush1.msra.mxu0 0.0
  %878 = vmatprep.subr.mxu0 0.0
  %879 = vmatpush1.msra.mxu0 0.0
  %880 = vmatprep.subr.mxu0 0.0
  %881 = vmatpush1.msra.mxu0 0.0
  %882 = vmatprep.subr.mxu0 0.0
  %883 = vmatpush1.msra.mxu0 0.0
  %884 = vmatprep.subr.mxu0 0.0
  %885 = vmatpush1.msra.mxu0 0.0
  %886 = vmatprep.subr.mxu0 0.0
  %887 = vmatpush1.msra.mxu0 0.0
  %888 = vmatprep.mubr.f32.mxu0 0.0
  %889 = vmatmul.mubr.f32.gmra.mrb[0].mxu0 %v792
  %v890 = vpop.f32.mrb[0].mxu0
  %v891 = vadd.f32 0.0, %v890
  %v892 = vpop.f32.mrb[0].mxu0
  %893 = vmatprep.mubr.f32.mxu0 0.0
  %894 = vmatmul.mubr.f32.gmra.mrb[0].mxu0 %v794
  %v895 = vpop.f32.mrb[0].mxu0
  %v896 = vadd.f32 0.0, %v895
  %v897 = vpop.f32.mrb[0].mxu0
  %898 = vmatprep.mubr.f32.mxu0 0.0
  %899 = vmatmul.mubr.f32.gmra.mrb[0].mxu0 %v796
  %v900 = vpop.f32.mrb[0].mxu0
  %v901 = vadd.f32 0.0, %v900
  %v902 = vpop.f32.mrb[0].mxu0
  %903 = vmatprep.mubr.f32.mxu0 0.0
  %904 = vmatmul.mubr.f32.gmra.mrb[0].mxu0 %v798
  %v905 = vpop.f32.mrb[0].mxu0
  %v906 = vadd.f32 0.0, %v905
  %v907 = vpop.f32.mrb[0].mxu0
  %908 = vmatprep.mubr.f32.mxu0 0.0
  %909 = vmatmul.mubr.f32.gmra.mrb[0].mxu0 %v800
  %v910 = vpop.f32.mrb[0].mxu0
  %v911 = vadd.f32 0.0, %v910
  %v912 = vpop.f32.mrb[0].mxu0
  %913 = vmatprep.mubr.f32.mxu0 0.0
  %914 = vmatmul.mubr.f32.gmra.mrb[0].mxu0 %v802
  %v915 = vpop.f32.mrb[0].mxu0
  %v916 = vadd.f32 0.0, %v915
  %v917 = vpop.f32.mrb[0].mxu0
  %918 = vmatprep.mubr.f32.mxu0 0.0
  %919 = vmatmul.mubr.f32.gmra.mrb[0].mxu0 %v804
  %v920 = vpop.f32.mrb[0].mxu0
  %v921 = vadd.f32 0.0, %v920
  %v922 = vpop.f32.mrb[0].mxu0
  %923 = vmatprep.mubr.f32.mxu0 0.0
  %924 = vmatmul.mubr.f32.gmra.mrb[0].mxu0 %v806
  %v925 = vpop.f32.mrb[0].mxu0
  %v926 = vadd.f32 0.0, %v925
  %v927 = vpop.f32.mrb[0].mxu0
  %928 = vmatprep.mubr.f32.mxu0 0.0
  %929 = vmatmul.mubr.f32.gmra.mrb[0].mxu0 %v808
  %v930 = vpop.f32.mrb[0].mxu0
  %v931 = vadd.f32 0.0, %v930
  %v932 = vpop.f32.mrb[0].mxu0
  %933 = vmatprep.mubr.f32.mxu0 0.0
  %934 = vmatmul.mubr.f32.gmra.mrb[0].mxu0 %v810
  %v935 = vpop.f32.mrb[0].mxu0
  %v936 = vadd.f32 0.0, %v935
  %v937 = vpop.f32.mrb[0].mxu0
  %938 = vmatprep.mubr.f32.mxu0 0.0
  %939 = vmatmul.mubr.f32.gmra.mrb[0].mxu0 %v812
  %v940 = vpop.f32.mrb[0].mxu0
  %v941 = vadd.f32 0.0, %v940
  %v942 = vpop.f32.mrb[0].mxu0
  %943 = vmatprep.mubr.f32.mxu0 0.0
  %944 = vmatmul.mubr.f32.gmra.mrb[0].mxu0 %v814
  %v945 = vpop.f32.mrb[0].mxu0
  %v946 = vadd.f32 0.0, %v945
  %v947 = vpop.f32.mrb[0].mxu0
  %948 = vmatprep.mubr.f32.mxu0 0.0
  %949 = vmatmul.mubr.f32.gmra.mrb[0].mxu0 %v816
  %v950 = vpop.f32.mrb[0].mxu0
  %v951 = vadd.f32 0.0, %v950
  %v952 = vpop.f32.mrb[0].mxu0
  %953 = vmatprep.mubr.f32.mxu0 0.0
  %954 = vmatmul.mubr.f32.gmra.mrb[0].mxu0 %v818
  %v955 = vpop.f32.mrb[0].mxu0
  %v956 = vadd.f32 0.0, %v955
  %v957 = vpop.f32.mrb[0].mxu0
  %958 = vmatprep.mubr.f32.mxu0 0.0
  %959 = vmatmul.mubr.f32.gmra.mrb[0].mxu0 %v820
  %v960 = vpop.f32.mrb[0].mxu0
  %v961 = vadd.f32 0.0, %v960
  %v962 = vpop.f32.mrb[0].mxu0
  %963 = vmatprep.mubr.f32.mxu0 0.0
  %964 = vmatmul.mubr.f32.gmra.mrb[0].mxu0 %v822
  %v965 = vpop.f32.mrb[0].mxu0
  %v966 = vadd.f32 0.0, %v965
  %v967 = vpop.f32.mrb[0].mxu0
  %968 = vdwg.mxu0
  %v969 = vadd.f32 %v722, %v891
  %v970 = vadd.f32 %v723, %v896
  %v971 = vadd.f32 %v724, %v901
  %v972 = vadd.f32 %v725, %v906
  %v973 = vadd.f32 %v726, %v911
  %v974 = vadd.f32 %v727, %v916
  %v975 = vadd.f32 %v728, %v921
  %v976 = vadd.f32 %v729, %v926
  %v977 = vadd.f32 %v730, %v931
  %v978 = vadd.f32 %v731, %v936
  %v979 = vadd.f32 %v732, %v941
  %v980 = vadd.f32 %v733, %v946
  %v981 = vadd.f32 %v734, %v951
  %v982 = vadd.f32 %v735, %v956
  %v983 = vadd.f32 %v736, %v961
  %v984 = vadd.f32 %v737, %v966
  %vm985 = vcmask 1043456
  %v986 = vrot.slane %v14, 4
  %v987 = vrot.slane %v15, 4
  %v988 = vsel %vm985, %v986, %v987
  %v989 = vrot.slane %v16, 4
  %v990 = vrot.slane %v17, 4
  %v991 = vsel %vm985, %v989, %v990
  %v992 = vrot.slane %v18, 4
  %v993 = vrot.slane %v19, 4
  %v994 = vsel %vm985, %v992, %v993
  %v995 = vrot.slane %v20, 4
  %v996 = vrot.slane %v21, 4
  %v997 = vsel %vm985, %v995, %v996
  %v998 = vrot.slane %v22, 4
  %v999 = vrot.slane %v23, 4
  %v1000 = vsel %vm985, %v998, %v999
  %v1001 = vrot.slane %v24, 4
  %v1002 = vrot.slane %v25, 4
  %v1003 = vsel %vm985, %v1001, %v1002
  %v1004 = vrot.slane %v26, 4
  %v1005 = vrot.slane %v27, 4
  %v1006 = vsel %vm985, %v1004, %v1005
  %v1007 = vrot.slane %v28, 4
  %v1008 = vrot.slane %v29, 4
  %v1009 = vsel %vm985, %v1007, %v1008
  %v1010 = vrot.slane %v30, 4
  %v1011 = vrot.slane %v31, 4
  %v1012 = vsel %vm985, %v1010, %v1011
  %v1013 = vrot.slane %v32, 4
  %v1014 = vrot.slane %v33, 4
  %v1015 = vsel %vm985, %v1013, %v1014
  %v1016 = vrot.slane %v34, 4
  %v1017 = vrot.slane %v35, 4
  %v1018 = vsel %vm985, %v1016, %v1017
  %v1019 = vrot.slane %v36, 4
  %v1020 = vrot.slane %v37, 4
  %v1021 = vsel %vm985, %v1019, %v1020
  %v1022 = vrot.slane %v38, 4
  %v1023 = vrot.slane %v39, 4
  %v1024 = vsel %vm985, %v1022, %v1023
  %v1025 = vrot.slane %v40, 4
  %v1026 = vrot.slane %v41, 4
  %v1027 = vsel %vm985, %v1025, %v1026
  %v1028 = vrot.slane %v42, 4
  %v1029 = vrot.slane %v43, 4
  %v1030 = vsel %vm985, %v1028, %v1029
  %v1031 = vrot.slane %v44, 4
  %v1032 = vrot.slane %v45, 4
  %v1033 = vsel %vm985, %v1031, %v1032
  %s1034 = scalar_lea.vmem %s1, 128
  %v1035 = vld [vmem:[%s1034] sm:$0xff]
  %v1036 = vld [vmem:[%s1034 + $0x8] sm:$0xff]
  %v1037 = vld [vmem:[%s1034 + $0x10] sm:$0xff]
  %v1038 = vld [vmem:[%s1034 + $0x18] sm:$0xff]
  %v1039 = vsel %vm136, %v988, 0
  %v1041 = vsel %vm136, %v991, 0
  %v1043 = vsel %vm136, %v994, 0
  %v1045 = vsel %vm136, %v997, 0
  %v1047 = vsel %vm136, %v1000, 0
  %v1049 = vsel %vm136, %v1003, 0
  %v1051 = vsel %vm136, %v1006, 0
  %v1053 = vsel %vm136, %v1009, 0
  %v1055 = vsel %vm136, %v1012, 0
  %v1057 = vsel %vm136, %v1015, 0
  %v1059 = vsel %vm136, %v1018, 0
  %v1061 = vsel %vm136, %v1021, 0
  %v1063 = vsel %vm136, %v1024, 0
  %v1065 = vsel %vm136, %v1027, 0
  %v1067 = vsel %vm136, %v1030, 0
  %v1069 = vsel %vm136, %v1033, 0
  %1071 = vmatprep.subr.mxu0 0.0
  %1072 = vmatpush1.msra.mxu0 %v1035
  %1073 = vmatprep.subr.mxu0 0.0
  %1074 = vmatpush1.msra.mxu0 %v1036
  %1075 = vmatprep.subr.mxu0 0.0
  %1076 = vmatpush1.msra.mxu0 %v1037
  %1077 = vmatprep.subr.mxu0 0.0
  %1078 = vmatpush1.msra.mxu0 %v1038
  %1079 = vmatprep.subr.mxu0 0.0
  %1080 = vmatpush1.msra.mxu0 0.0
  %1081 = vmatprep.subr.mxu0 0.0
  %1082 = vmatpush1.msra.mxu0 0.0
  %1083 = vmatprep.subr.mxu0 0.0
  %1084 = vmatpush1.msra.mxu0 0.0
  %1085 = vmatprep.subr.mxu0 0.0
  %1086 = vmatpush1.msra.mxu0 0.0
  %1087 = vmatprep.subr.mxu0 0.0
  %1088 = vmatpush1.msra.mxu0 0.0
  %1089 = vmatprep.subr.mxu0 0.0
  %1090 = vmatpush1.msra.mxu0 0.0
  %1091 = vmatprep.subr.mxu0 0.0
  %1092 = vmatpush1.msra.mxu0 0.0
  %1093 = vmatprep.subr.mxu0 0.0
  %1094 = vmatpush1.msra.mxu0 0.0
  %1095 = vmatprep.subr.mxu0 0.0
  %1096 = vmatpush1.msra.mxu0 0.0
  %1097 = vmatprep.subr.mxu0 0.0
  %1098 = vmatpush1.msra.mxu0 0.0
  %1099 = vmatprep.subr.mxu0 0.0
  %1100 = vmatpush1.msra.mxu0 0.0
  %1101 = vmatprep.subr.mxu0 0.0
  %1102 = vmatpush1.msra.mxu0 0.0
  %1103 = vmatprep.subr.mxu0 0.0
  %1104 = vmatpush1.msra.mxu0 0.0
  %1105 = vmatprep.subr.mxu0 0.0
  %1106 = vmatpush1.msra.mxu0 0.0
  %1107 = vmatprep.subr.mxu0 0.0
  %1108 = vmatpush1.msra.mxu0 0.0
  %1109 = vmatprep.subr.mxu0 0.0
  %1110 = vmatpush1.msra.mxu0 0.0
  %1111 = vmatprep.subr.mxu0 0.0
  %1112 = vmatpush1.msra.mxu0 0.0
  %1113 = vmatprep.subr.mxu0 0.0
  %1114 = vmatpush1.msra.mxu0 0.0
  %1115 = vmatprep.subr.mxu0 0.0
  %1116 = vmatpush1.msra.mxu0 0.0
  %1117 = vmatprep.subr.mxu0 0.0
  %1118 = vmatpush1.msra.mxu0 0.0
  %1119 = vmatprep.subr.mxu0 0.0
  %1120 = vmatpush1.msra.mxu0 0.0
  %1121 = vmatprep.subr.mxu0 0.0
  %1122 = vmatpush1.msra.mxu0 0.0
  %1123 = vmatprep.subr.mxu0 0.0
  %1124 = vmatpush1.msra.mxu0 0.0
  %1125 = vmatprep.subr.mxu0 0.0
  %1126 = vmatpush1.msra.mxu0 0.0
  %1127 = vmatprep.subr.mxu0 0.0
  %1128 = vmatpush1.msra.mxu0 0.0
  %1129 = vmatprep.subr.mxu0 0.0
  %1130 = vmatpush1.msra.mxu0 0.0
  %1131 = vmatprep.subr.mxu0 0.0
  %1132 = vmatpush1.msra.mxu0 0.0
  %1133 = vmatprep.subr.mxu0 0.0
  %1134 = vmatpush1.msra.mxu0 0.0
  %1135 = vmatprep.mubr.f32.mxu0 0.0
  %1136 = vmatmul.mubr.f32.gmra.mrb[0].mxu0 %v1039
  %v1137 = vpop.f32.mrb[0].mxu0
  %v1138 = vadd.f32 0.0, %v1137
  %v1139 = vpop.f32.mrb[0].mxu0
  %1140 = vmatprep.mubr.f32.mxu0 0.0
  %1141 = vmatmul.mubr.f32.gmra.mrb[0].mxu0 %v1041
  %v1142 = vpop.f32.mrb[0].mxu0
  %v1143 = vadd.f32 0.0, %v1142
  %v1144 = vpop.f32.mrb[0].mxu0
  %1145 = vmatprep.mubr.f32.mxu0 0.0
  %1146 = vmatmul.mubr.f32.gmra.mrb[0].mxu0 %v1043
  %v1147 = vpop.f32.mrb[0].mxu0
  %v1148 = vadd.f32 0.0, %v1147
  %v1149 = vpop.f32.mrb[0].mxu0
  %1150 = vmatprep.mubr.f32.mxu0 0.0
  %1151 = vmatmul.mubr.f32.gmra.mrb[0].mxu0 %v1045
  %v1152 = vpop.f32.mrb[0].mxu0
  %v1153 = vadd.f32 0.0, %v1152
  %v1154 = vpop.f32.mrb[0].mxu0
  %1155 = vmatprep.mubr.f32.mxu0 0.0
  %1156 = vmatmul.mubr.f32.gmra.mrb[0].mxu0 %v1047
  %v1157 = vpop.f32.mrb[0].mxu0
  %v1158 = vadd.f32 0.0, %v1157
  %v1159 = vpop.f32.mrb[0].mxu0
  %1160 = vmatprep.mubr.f32.mxu0 0.0
  %1161 = vmatmul.mubr.f32.gmra.mrb[0].mxu0 %v1049
  %v1162 = vpop.f32.mrb[0].mxu0
  %v1163 = vadd.f32 0.0, %v1162
  %v1164 = vpop.f32.mrb[0].mxu0
  %1165 = vmatprep.mubr.f32.mxu0 0.0
  %1166 = vmatmul.mubr.f32.gmra.mrb[0].mxu0 %v1051
  %v1167 = vpop.f32.mrb[0].mxu0
  %v1168 = vadd.f32 0.0, %v1167
  %v1169 = vpop.f32.mrb[0].mxu0
  %1170 = vmatprep.mubr.f32.mxu0 0.0
  %1171 = vmatmul.mubr.f32.gmra.mrb[0].mxu0 %v1053
  %v1172 = vpop.f32.mrb[0].mxu0
  %v1173 = vadd.f32 0.0, %v1172
  %v1174 = vpop.f32.mrb[0].mxu0
  %1175 = vmatprep.mubr.f32.mxu0 0.0
  %1176 = vmatmul.mubr.f32.gmra.mrb[0].mxu0 %v1055
  %v1177 = vpop.f32.mrb[0].mxu0
  %v1178 = vadd.f32 0.0, %v1177
  %v1179 = vpop.f32.mrb[0].mxu0
  %1180 = vmatprep.mubr.f32.mxu0 0.0
  %1181 = vmatmul.mubr.f32.gmra.mrb[0].mxu0 %v1057
  %v1182 = vpop.f32.mrb[0].mxu0
  %v1183 = vadd.f32 0.0, %v1182
  %v1184 = vpop.f32.mrb[0].mxu0
  %1185 = vmatprep.mubr.f32.mxu0 0.0
  %1186 = vmatmul.mubr.f32.gmra.mrb[0].mxu0 %v1059
  %v1187 = vpop.f32.mrb[0].mxu0
  %v1188 = vadd.f32 0.0, %v1187
  %v1189 = vpop.f32.mrb[0].mxu0
  %1190 = vmatprep.mubr.f32.mxu0 0.0
  %1191 = vmatmul.mubr.f32.gmra.mrb[0].mxu0 %v1061
  %v1192 = vpop.f32.mrb[0].mxu0
  %v1193 = vadd.f32 0.0, %v1192
  %v1194 = vpop.f32.mrb[0].mxu0
  %1195 = vmatprep.mubr.f32.mxu0 0.0
  %1196 = vmatmul.mubr.f32.gmra.mrb[0].mxu0 %v1063
  %v1197 = vpop.f32.mrb[0].mxu0
  %v1198 = vadd.f32 0.0, %v1197
  %v1199 = vpop.f32.mrb[0].mxu0
  %1200 = vmatprep.mubr.f32.mxu0 0.0
  %1201 = vmatmul.mubr.f32.gmra.mrb[0].mxu0 %v1065
  %v1202 = vpop.f32.mrb[0].mxu0
  %v1203 = vadd.f32 0.0, %v1202
  %v1204 = vpop.f32.mrb[0].mxu0
  %1205 = vmatprep.mubr.f32.mxu0 0.0
  %1206 = vmatmul.mubr.f32.gmra.mrb[0].mxu0 %v1067
  %v1207 = vpop.f32.mrb[0].mxu0
  %v1208 = vadd.f32 0.0, %v1207
  %v1209 = vpop.f32.mrb[0].mxu0
  %1210 = vmatprep.mubr.f32.mxu0 0.0
  %1211 = vmatmul.mubr.f32.gmra.mrb[0].mxu0 %v1069
  %v1212 = vpop.f32.mrb[0].mxu0
  %v1213 = vadd.f32 0.0, %v1212
  %v1214 = vpop.f32.mrb[0].mxu0
  %1215 = vdwg.mxu0
  %v1216 = vadd.f32 %v969, %v1138
  %v1217 = vadd.f32 %v970, %v1143
  %v1218 = vadd.f32 %v971, %v1148
  %v1219 = vadd.f32 %v972, %v1153
  %v1220 = vadd.f32 %v973, %v1158
  %v1221 = vadd.f32 %v974, %v1163
  %v1222 = vadd.f32 %v975, %v1168
  %v1223 = vadd.f32 %v976, %v1173
  %v1224 = vadd.f32 %v977, %v1178
  %v1225 = vadd.f32 %v978, %v1183
  %v1226 = vadd.f32 %v979, %v1188
  %v1227 = vadd.f32 %v980, %v1193
  %v1228 = vadd.f32 %v981, %v1198
  %v1229 = vadd.f32 %v982, %v1203
  %v1230 = vadd.f32 %v983, %v1208
  %v1231 = vadd.f32 %v984, %v1213
  %v1232 = vld [vmem:[%s2] sm:$0x1]
  %v1234 = vlaneseq
  %v1235 = vshrl.u32 %v1234, 7
  %v1236 = vsub.s32 0, %v1235
  %v1237 = vrot.slane %v1232, %v1236
  %v1239 = vadd.f32 %v1216, %v1237
  %v1240 = vadd.f32 %v1217, %v1237
  %v1241 = vadd.f32 %v1218, %v1237
  %v1242 = vadd.f32 %v1219, %v1237
  %v1243 = vadd.f32 %v1220, %v1237
  %v1244 = vadd.f32 %v1221, %v1237
  %v1245 = vadd.f32 %v1222, %v1237
  %v1246 = vadd.f32 %v1223, %v1237
  %v1247 = vadd.f32 %v1224, %v1237
  %v1248 = vadd.f32 %v1225, %v1237
  %v1249 = vadd.f32 %v1226, %v1237
  %v1250 = vadd.f32 %v1227, %v1237
  %v1251 = vadd.f32 %v1228, %v1237
  %v1252 = vadd.f32 %v1229, %v1237
  %v1253 = vadd.f32 %v1230, %v1237
  %v1254 = vadd.f32 %v1231, %v1237
  %v1255 = vsel %vm136, %v1239, -inf
  %v1256 = vrot.slane %v1255, 4
  %v1257 = vmax.f32 %v1255, %v1256
  %v1258 = vrot.slane %v1257, 2
  %v1259 = vmax.f32 %v1257, %v1258
  %v1260 = vrot.slane %v1259, 1
  %v1261 = vmax.f32 %v1259, %v1260
  %v1262 = vsel %vm136, %v1240, -inf
  %v1263 = vrot.slane %v1262, 4
  %v1264 = vmax.f32 %v1262, %v1263
  %v1265 = vrot.slane %v1264, 2
  %v1266 = vmax.f32 %v1264, %v1265
  %v1267 = vrot.slane %v1266, 1
  %v1268 = vmax.f32 %v1266, %v1267
  %v1269 = vsel %vm136, %v1241, -inf
  %v1270 = vrot.slane %v1269, 4
  %v1271 = vmax.f32 %v1269, %v1270
  %v1272 = vrot.slane %v1271, 2
  %v1273 = vmax.f32 %v1271, %v1272
  %v1274 = vrot.slane %v1273, 1
  %v1275 = vmax.f32 %v1273, %v1274
  %v1276 = vsel %vm136, %v1242, -inf
  %v1277 = vrot.slane %v1276, 4
  %v1278 = vmax.f32 %v1276, %v1277
  %v1279 = vrot.slane %v1278, 2
  %v1280 = vmax.f32 %v1278, %v1279
  %v1281 = vrot.slane %v1280, 1
  %v1282 = vmax.f32 %v1280, %v1281
  %v1283 = vsel %vm136, %v1243, -inf
  %v1284 = vrot.slane %v1283, 4
  %v1285 = vmax.f32 %v1283, %v1284
  %v1286 = vrot.slane %v1285, 2
  %v1287 = vmax.f32 %v1285, %v1286
  %v1288 = vrot.slane %v1287, 1
  %v1289 = vmax.f32 %v1287, %v1288
  %v1290 = vsel %vm136, %v1244, -inf
  %v1291 = vrot.slane %v1290, 4
  %v1292 = vmax.f32 %v1290, %v1291
  %v1293 = vrot.slane %v1292, 2
  %v1294 = vmax.f32 %v1292, %v1293
  %v1295 = vrot.slane %v1294, 1
  %v1296 = vmax.f32 %v1294, %v1295
  %v1297 = vsel %vm136, %v1245, -inf
  %v1298 = vrot.slane %v1297, 4
  %v1299 = vmax.f32 %v1297, %v1298
  %v1300 = vrot.slane %v1299, 2
  %v1301 = vmax.f32 %v1299, %v1300
  %v1302 = vrot.slane %v1301, 1
  %v1303 = vmax.f32 %v1301, %v1302
  %v1304 = vsel %vm136, %v1246, -inf
  %v1305 = vrot.slane %v1304, 4
  %v1306 = vmax.f32 %v1304, %v1305
  %v1307 = vrot.slane %v1306, 2
  %v1308 = vmax.f32 %v1306, %v1307
  %v1309 = vrot.slane %v1308, 1
  %v1310 = vmax.f32 %v1308, %v1309
  %v1311 = vsel %vm136, %v1247, -inf
  %v1312 = vrot.slane %v1311, 4
  %v1313 = vmax.f32 %v1311, %v1312
  %v1314 = vrot.slane %v1313, 2
  %v1315 = vmax.f32 %v1313, %v1314
  %v1316 = vrot.slane %v1315, 1
  %v1317 = vmax.f32 %v1315, %v1316
  %v1318 = vsel %vm136, %v1248, -inf
  %v1319 = vrot.slane %v1318, 4
  %v1320 = vmax.f32 %v1318, %v1319
  %v1321 = vrot.slane %v1320, 2
  %v1322 = vmax.f32 %v1320, %v1321
  %v1323 = vrot.slane %v1322, 1
  %v1324 = vmax.f32 %v1322, %v1323
  %v1325 = vsel %vm136, %v1249, -inf
  %v1326 = vrot.slane %v1325, 4
  %v1327 = vmax.f32 %v1325, %v1326
  %v1328 = vrot.slane %v1327, 2
  %v1329 = vmax.f32 %v1327, %v1328
  %v1330 = vrot.slane %v1329, 1
  %v1331 = vmax.f32 %v1329, %v1330
  %v1332 = vsel %vm136, %v1250, -inf
  %v1333 = vrot.slane %v1332, 4
  %v1334 = vmax.f32 %v1332, %v1333
  %v1335 = vrot.slane %v1334, 2
  %v1336 = vmax.f32 %v1334, %v1335
  %v1337 = vrot.slane %v1336, 1
  %v1338 = vmax.f32 %v1336, %v1337
  %v1339 = vsel %vm136, %v1251, -inf
  %v1340 = vrot.slane %v1339, 4
  %v1341 = vmax.f32 %v1339, %v1340
  %v1342 = vrot.slane %v1341, 2
  %v1343 = vmax.f32 %v1341, %v1342
  %v1344 = vrot.slane %v1343, 1
  %v1345 = vmax.f32 %v1343, %v1344
  %v1346 = vsel %vm136, %v1252, -inf
  %v1347 = vrot.slane %v1346, 4
  %v1348 = vmax.f32 %v1346, %v1347
  %v1349 = vrot.slane %v1348, 2
  %v1350 = vmax.f32 %v1348, %v1349
  %v1351 = vrot.slane %v1350, 1
  %v1352 = vmax.f32 %v1350, %v1351
  %v1353 = vsel %vm136, %v1253, -inf
  %v1354 = vrot.slane %v1353, 4
  %v1355 = vmax.f32 %v1353, %v1354
  %v1356 = vrot.slane %v1355, 2
  %v1357 = vmax.f32 %v1355, %v1356
  %v1358 = vrot.slane %v1357, 1
  %v1359 = vmax.f32 %v1357, %v1358
  %v1360 = vsel %vm136, %v1254, -inf
  %v1361 = vrot.slane %v1360, 4
  %v1362 = vmax.f32 %v1360, %v1361
  %v1363 = vrot.slane %v1362, 2
  %v1364 = vmax.f32 %v1362, %v1363
  %v1365 = vrot.slane %v1364, 1
  %v1366 = vmax.f32 %v1364, %v1365
  %vm1383 = vcmask 1041409
  %v1384 = vsel %vm1383, %v1268, %v1261
  %vm1385 = vcmask 1042434
  %v1386 = vsel %vm1385, %v1275, %v1384
  %vm1387 = vcmask 1043459
  %v1388 = vsel %vm1387, %v1282, %v1386
  %vm1389 = vcmask 1044484
  %v1390 = vsel %vm1389, %v1289, %v1388
  %vm1391 = vcmask 1045509
  %v1392 = vsel %vm1391, %v1296, %v1390
  %vm1393 = vcmask 1046534
  %v1394 = vsel %vm1393, %v1303, %v1392
  %vm1395 = vcmask 1047559
  %v1396 = vsel %vm1395, %v1310, %v1394
  %v1397 = vsel %vm1383, %v1324, %v1317
  %v1398 = vsel %vm1385, %v1331, %v1397
  %v1399 = vsel %vm1387, %v1338, %v1398
  %v1400 = vsel %vm1389, %v1345, %v1399
  %v1401 = vsel %vm1391, %v1352, %v1400
  %v1402 = vsel %vm1393, %v1359, %v1401
  %v1403 = vsel %vm1395, %v1366, %v1402
  %1406 = vst.msk [vmem:[%s3] sm:$0xff] %vm136, %v1396
  %1407 = vst.msk [vmem:[%s3 + $0x8] sm:$0xff] %vm136, %v1403
  // Predicated region
  $region14: #{model_forward.3} parent=0 // pred_check
    _
  $region15: #{model_forward.3} parent=0 // pred_check_branch
    %1409 = sbr.rel (0) target = $region17
  $region16: #{model_forward.3} parent=0 // pred_region
    _
  $region17: #{model_forward.3} parent=0 // pred_fallthru
    _
  // Predicated region
  $region18: #{model_forward.3} parent=0 // pred_check
    _
  $region19: #{model_forward.3} parent=0 // pred_check_branch
    %1411 = sbr.rel (0) target = $region21
  $region20: #{model_forward.3} parent=0 // pred_region
    _
  $region21: #{model_forward.3} parent=0 // pred_fallthru
    _

// kernel: model_forward.4
$region0: #{model_forward.4}
  #allocation0 [shape = 'u32[]', space=smem, size = 0x4, offset = 0x4, fixed_abs, tag = 'smem constant byte address 0x4 - core index']
  #allocation1 [shape = 'u32[144,128]{1,0:T(1,128)}', space=vmem, size = 0x12000, scoped, tag = 'internal scratch']
  #allocation2 [shape = 'f32[2,8,32]{2,1,0:T(8,128)}', space=vmem, size = 0x2000, scoped, tag = 'scratch operand']
  #allocation3 [shape = 'f32[2,8,32]{2,1,0:T(8,128)}', space=vmem, size = 0x2000, scoped, tag = 'scratch operand']
  %s0 = inlined_call_operand.vmem [shape: f32[2,8,8,128], index: 0, kind: input, shape index: {}]
  %s1 = inlined_call_operand.vmem [shape: f32[8,1], index: 1, kind: input, shape index: {}]
  %s2 = inlined_call_operand.vmem [shape: f32[2,32,128], index: 2, kind: input, shape index: {}]
  %s3 = inlined_call_operand.vmem [shape: f32[2,8,8,32], index: 3, kind: output, shape index: {}]
  %s4 = sld [smem:[#allocation0]]
  $region56: #{model_forward.4} parent=0
    _
  %s6 = ssub.s32 1, %s4
  %s7 = scalar_select 0, %s6, %s4
  loop: start=0, step=1, limit=4
  $region2: #{model_forward.4} parent=0 // loop_pre_header
    _
  $region3: #{model_forward.4} parent=0 // loop_header
    %s9 = sphi 0, %s13
    %p10 = scmp.ge.s32.totalorder %s9, 4
    %s16 = sphi 0, %s28
    %s17 = sphi 0, %s24
    %s18 = sphi 0, %s16
    %s19 = sphi 0, %s17
    %s20 = sphi 0, %s18
    %s21 = sphi 0, %s19
    %s43 = sphi 0, %s45
    %s46 = sphi 0, %s43
    %s47 = sphi 0, %s46
    %s63 = sphi 0, %s47
    %s67 = sphi 0, %s67
    %s69 = sphi 0, %s67
    %s70 = sphi 0, %s69
    %s84 = sphi 0, %s70
    %s90 = sphi 0, %s92
    %s93 = sphi 0, %s90
    %s94 = sphi 0, %s93
    %s110 = sphi 0, %s94
    %s128 = sphi 0, %s130
    %s131 = sphi 0, %s128
    %s132 = sphi 0, %s131
    %s148 = sphi 0, %s132
  $region4: #{model_forward.4} parent=0 // loop_header_branch
    %12 = sbr.rel (%p10) target = $region8
  $region5: #{model_forward.4} parent=0 // loop_body
    %s14 = ssub.s32 %s9, 1
    %s15 = ssub.s32 %s9, 2
    %s22 = sadd.s32 1, %s17
    %p23 = scmp.ge.s32.totalorder %s22, 1
    %s24 = scalar_select %p23, 0, %s22
    %s25 = sadd.s32 1, %s16
    %s26 = scalar_select %p23, %s25, %s16
    %p27 = scmp.ge.s32.totalorder %s26, 2
    %s28 = scalar_select %p27, 0, %s26
    %s29 = ssub.s32 0, %s17
    %s30 = smul.u32 %s16, %s29
    %s31 = ssub.s32 1, %s16
    %s32 = smul.u32 %s31, %s17
    %s33 = sadd.s32 %s30, %s32
    %s34 = ssub.s32 0, %s24
    %s35 = smul.u32 %s28, %s34
    %s36 = ssub.s32 1, %s28
    %s37 = smul.u32 %s36, %s24
    %s38 = sadd.s32 %s35, %s37
    %s39 = ssub.s32 %s16, %s28
    %s40 = ssub.s32 %s33, %s38
    %s41 = sor.u32 %s39, %s40
    %p42 = scmp.eq.s32.totalorder %s41, 0
    %s44 = sadd.s32 %s43, 1
    %s45 = scalar_select %p42, %s43, %s44
    %p48 = pneg %p42
    %p49 = scmp.eq.s32.totalorder %s9, 1
    %p50 = por %p48, %p49
    %p51 = scmp.ne.s32.totalorder %s43, %s46
    %p52 = scmp.eq.s32.totalorder %s9, 0
    %p53 = por %p51, %p52
    %p54 = scmp.ne.s32.totalorder %s43, %s46
    %p55 = scmp.eq.s32.totalorder %s14, 1
    %p56 = por %p54, %p55
    %p57 = scmp.ne.s32.totalorder %s46, %s47
    %p58 = scmp.eq.s32.totalorder %s14, 0
    %p59 = por %p57, %p58
    %p60 = scmp.ne.s32.totalorder %s46, %s47
    %p61 = scmp.eq.s32.totalorder %s15, 1
    %p62 = por %p60, %p61
    %p64 = scmp.ne.s32.totalorder %s47, %s63
    %p65 = scmp.eq.s32.totalorder %s15, 0
    %p66 = por %p64, %p65
    %s68 = sadd.s32 %s67, 1
    %p71 = scmp.eq.s32.totalorder %s9, 1
    %p72 = scmp.ne.s32.totalorder %s67, %s69
    %p73 = scmp.eq.s32.totalorder %s9, 0
    %p74 = por %p72, %p73
    %p75 = scmp.ne.s32.totalorder %s67, %s69
    %p76 = scmp.eq.s32.totalorder %s14, 1
    %p77 = por %p75, %p76
    %p78 = scmp.ne.s32.totalorder %s69, %s70
    %p79 = scmp.eq.s32.totalorder %s14, 0
    %p80 = por %p78, %p79
    %p81 = scmp.ne.s32.totalorder %s69, %s70
    %p82 = scmp.eq.s32.totalorder %s15, 1
    %p83 = por %p81, %p82
    %p85 = scmp.ne.s32.totalorder %s70, %s84
    %p86 = scmp.eq.s32.totalorder %s15, 0
    %p87 = por %p85, %p86
    %s88 = ssub.s32 %s16, %s28
    %p89 = scmp.eq.s32.totalorder %s88, 0
    %s91 = sadd.s32 %s90, 1
    %s92 = scalar_select %p89, %s90, %s91
    %p95 = pneg %p89
    %p96 = scmp.eq.s32.totalorder %s9, 1
    %p97 = por %p95, %p96
    %p98 = scmp.ne.s32.totalorder %s90, %s93
    %p99 = scmp.eq.s32.totalorder %s9, 0
    %p100 = por %p98, %p99
    %p101 = scmp.ne.s32.totalorder %s90, %s93
    %p102 = scmp.eq.s32.totalorder %s14, 1
    %p103 = por %p101, %p102
    %p104 = scmp.ne.s32.totalorder %s93, %s94
    %p105 = scmp.eq.s32.totalorder %s14, 0
    %p106 = por %p104, %p105
    %p107 = scmp.ne.s32.totalorder %s93, %s94
    %p108 = scmp.eq.s32.totalorder %s15, 1
    %p109 = por %p107, %p108
    %p111 = scmp.ne.s32.totalorder %s94, %s110
    %p112 = scmp.eq.s32.totalorder %s15, 0
    %p113 = por %p111, %p112
    %s114 = ssub.s32 0, %s17
    %s115 = smul.u32 %s16, %s114
    %s116 = ssub.s32 1, %s16
    %s117 = smul.u32 %s116, %s17
    %s118 = sadd.s32 %s115, %s117
    %s119 = ssub.s32 0, %s24
    %s120 = smul.u32 %s28, %s119
    %s121 = ssub.s32 1, %s28
    %s122 = smul.u32 %s121, %s24
    %s123 = sadd.s32 %s120, %s122
    %s124 = ssub.s32 %s16, %s28
    %s125 = ssub.s32 %s118, %s123
    %s126 = sor.u32 %s124, %s125
    %p127 = scmp.eq.s32.totalorder %s126, 0
    %s129 = sadd.s32 %s128, 1
    %s130 = scalar_select %p127, %s128, %s129
    %p133 = pneg %p127
    %p134 = scmp.eq.s32.totalorder %s9, 1
    %p135 = por %p133, %p134
    %p136 = scmp.ne.s32.totalorder %s128, %s131
    %p137 = scmp.eq.s32.totalorder %s9, 0
    %p138 = por %p136, %p137
    %p139 = scmp.ne.s32.totalorder %s128, %s131
    %p140 = scmp.eq.s32.totalorder %s14, 1
    %p141 = por %p139, %p140
    %p142 = scmp.ne.s32.totalorder %s131, %s132
    %p143 = scmp.eq.s32.totalorder %s14, 0
    %p144 = por %p142, %p143
    %p145 = scmp.ne.s32.totalorder %s131, %s132
    %p146 = scmp.eq.s32.totalorder %s15, 1
    %p147 = por %p145, %p146
    %p149 = scmp.ne.s32.totalorder %s132, %s148
    %p150 = scmp.eq.s32.totalorder %s15, 0
    %p151 = por %p149, %p150
    %p152 = scmp.le.s32.totalorder 1, %s9
    %p153 = scmp.lt.s32.totalorder %s9, 3
    %p154 = pnand %p152, %p153
    %p155 = pneg %p154
    // Predicated region
    $region9: #{model_forward.4} parent=5 // pred_check
      _
    $region10: #{model_forward.4} parent=5 // pred_check_branch
      %157 = sbr.rel (%p154) target = $region12
    $region11: #{model_forward.4} parent=5 // pred_region
      %s158 = ssub.s32 %s9, 1
      // Predicated region
      $region13: #{model_forward.4} parent=11 // pred_check
        %p159 = pneg %p80
      $region14: #{model_forward.4} parent=11 // pred_check_branch
        %161 = sbr.rel (%p159) target = $region16
      $region15: #{model_forward.4} parent=11 // pred_region
        _
      $region16: #{model_forward.4} parent=11 // pred_fallthru
        _
    $region12: #{model_forward.4} parent=5 // pred_fallthru
      _
    %p162 = scmp.lt.s32.totalorder %s9, 2
    // Predicated region
    $region17: #{model_forward.4} parent=5 // pred_check
      %p163 = pneg %p162
    $region18: #{model_forward.4} parent=5 // pred_check_branch
      %165 = sbr.rel (%p163) target = $region20
    $region19: #{model_forward.4} parent=5 // pred_region
      // Predicated region
      $region21: #{model_forward.4} parent=19 // pred_check
        %p166 = pneg %p53
      $region22: #{model_forward.4} parent=19 // pred_check_branch
        %168 = sbr.rel (%p166) target = $region24
      $region23: #{model_forward.4} parent=19 // pred_region
        %s169 = ssub.s32 0, %s17
        %s170 = smul.u32 %s16, %s169
        %s171 = ssub.s32 1, %s16
        %s172 = smul.u32 %s171, %s17
        %s173 = sadd.s32 %s170, %s172
        %s174 = smul.u32 8, %s173
        %p175 = scmp.lt.s32.totalorder %s16, 1
        %s176 = scalar_select %p175, %s16, 1
        %p177 = scmp.lt.s32.totalorder %s174, 7
        %s178 = scalar_select %p177, %s174, 7
        %s179 = smul.addr %s176, 8
        %s180 = sadd.s32 %s178, %s179
        %s181 = smul.addr %s180, 8
        %s182 = scalar_lea.vmem %s0, %s181
        %s183 = ssub.s32 0, %s17
        %s184 = smul.u32 %s16, %s183
        %s185 = ssub.s32 1, %s16
        %s186 = smul.u32 %s185, %s17
        %s187 = sadd.s32 %s184, %s186
        %s188 = smul.u32 8, %s187
      $region24: #{model_forward.4} parent=19 // pred_fallthru
        _
      // Predicated region
      $region25: #{model_forward.4} parent=19 // pred_check
        %p189 = pneg %p100
      $region26: #{model_forward.4} parent=19 // pred_check_branch
        %191 = sbr.rel (%p189) target = $region28
      $region27: #{model_forward.4} parent=19 // pred_region
        %p192 = scmp.lt.s32.totalorder %s16, 1
        %s193 = scalar_select %p192, %s16, 1
        %s194 = smul.addr %s193, 4
        %s195 = smul.addr %s194, 8
        %s196 = scalar_lea.vmem %s2, %s195
      $region28: #{model_forward.4} parent=19 // pred_fallthru
        _
    $region20: #{model_forward.4} parent=5 // pred_fallthru
      _
    %p197 = scmp.le.s32.totalorder 1, %s9
    %p198 = scmp.lt.s32.totalorder %s9, 3
    %p199 = pnand %p197, %p198
    %p200 = pneg %p199
    // Predicated region
    $region29: #{model_forward.4} parent=5 // pred_check
      _
    $region30: #{model_forward.4} parent=5 // pred_check_branch
      %202 = sbr.rel (%p199) target = $region32
    $region31: #{model_forward.4} parent=5 // pred_region
      %s203 = ssub.s32 %s9, 1
      %s204 = ssub.s32 0, %s19
      %s205 = smul.u32 %s18, %s204
      %s206 = ssub.s32 1, %s18
      %s207 = smul.u32 %s206, %s19
      %s208 = sadd.s32 %s205, %s207
      %s209 = smul.u32 8, %s208
      %p210 = scmp.lt.s32.totalorder %s18, 1
      %s211 = scalar_select %p210, %s18, 1
      %p212 = scmp.lt.s32.totalorder %s209, 7
      %s213 = scalar_select %p212, %s209, 7
      %s214 = smul.addr %s211, 8
      %s215 = sadd.s32 %s213, %s214
      %s216 = smul.addr %s215, 8
      %s217 = scalar_lea.vmem %s0, %s216
      %p218 = pneg %p59
      %p219 = pneg %p56
      %p220 = pneg %p80
      %p221 = pneg %p77
      %p222 = scmp.lt.s32.totalorder %s18, 1
      %s223 = scalar_select %p222, %s18, 1
      %s224 = smul.addr %s223, 4
      %s225 = smul.addr %s224, 8
      %s226 = scalar_lea.vmem %s2, %s225
      %p227 = pneg %p106
      %p228 = pneg %p103
      %p229 = pneg %p144
      %p230 = pneg %p141
      %s231 = ssub.s32 0, %s19
      %s232 = smul.u32 %s18, %s231
      %s233 = ssub.s32 1, %s18
      %s234 = smul.u32 %s233, %s19
      %s235 = sadd.s32 %s232, %s234
      %s236 = smul.u32 8, %s235
      %p237 = scmp.lt.s32.totalorder %s18, 1
      %s238 = scalar_select %p237, %s18, 1
      %p239 = scmp.lt.s32.totalorder %s236, 7
      %s240 = scalar_select %p239, %s236, 7
      %s241 = smul.addr %s238, 8
      %s242 = sadd.s32 %s240, %s241
      %s243 = smul.addr %s242, 8
      %s244 = scalar_lea.vmem %s3, %s243
      %s245 = ssub.s32 0, %s19
      %s246 = smul.u32 %s18, %s245
      %s247 = ssub.s32 1, %s18
      %s248 = smul.u32 %s247, %s19
      %s249 = sadd.s32 %s246, %s248
      %s250 = smul.u32 8, %s249
      %p251 = scmp.lt.s32.totalorder %s18, 1
      %s252 = scalar_select %p251, %s18, 1
      %p253 = scmp.lt.s32.totalorder %s250, 7
      %s254 = scalar_select %p253, %s250, 7
      %s255 = smul.addr %s252, 8
      %s256 = sadd.s32 %s254, %s255
      %s257 = smul.addr %s256, 8
      %s258 = scalar_lea.vmem %s0, %s257
      %s259 = ssub.s32 0, %s19
      %s260 = smul.u32 %s18, %s259
      %s261 = ssub.s32 1, %s18
      %s262 = smul.u32 %s261, %s19
      %s263 = sadd.s32 %s260, %s262
      %s264 = smul.u32 8, %s263
      %p265 = scmp.lt.s32.totalorder %s18, 1
      %s266 = scalar_select %p265, %s18, 1
      %s267 = smul.addr %s266, 4
      %s268 = smul.addr %s267, 8
      %s269 = scalar_lea.vmem %s2, %s268
      %s270 = ssub.s32 0, %s19
      %s271 = smul.u32 %s18, %s270
      %s272 = ssub.s32 1, %s18
      %s273 = smul.u32 %s272, %s19
      %s274 = sadd.s32 %s271, %s273
      %s275 = smul.u32 8, %s274
      %p276 = scmp.lt.s32.totalorder %s18, 1
      %s277 = scalar_select %p276, %s18, 1
      %p278 = scmp.lt.s32.totalorder %s275, 7
      %s279 = scalar_select %p278, %s275, 7
      %s280 = smul.addr %s277, 8
      %s281 = sadd.s32 %s279, %s280
      %s282 = smul.addr %s281, 8
      %s283 = scalar_lea.vmem %s3, %s282
      %s284 = ssub.s32 0, %s19
      %s285 = smul.u32 %s18, %s284
      %s286 = ssub.s32 1, %s18
      %s287 = smul.u32 %s286, %s19
      %s288 = sadd.s32 %s285, %s287
      %s289 = smul.u32 8, %s288
      %p290 = scmp.eq.s32.totalorder %s19, 0
      // Predicated region
      $region33: #{model_forward.4} parent=31 // pred_check
        %p291 = pneg %p290
      $region34: #{model_forward.4} parent=31 // pred_check_branch
        %293 = sbr.rel (%p291) target = $region36
      $region35: #{model_forward.4} parent=31 // pred_region
        %s294 = smul.u32 %s18, 8
        %s295 = scalar_lea.vmem [#allocation2], %s294
        %vm296 = vcmask 261120
        %297 = vst.msk [vmem:[%s295] sm:$0xff] %vm296, 0.0
        %s298 = scalar_lea.vmem [#allocation3], %s294
        %299 = vst.msk [vmem:[%s298] sm:$0xff] %vm296, 0.0
      $region36: #{model_forward.4} parent=31 // pred_fallthru
        _
      %v300 = vld [vmem:[%s1] sm:$0xff]
      %v301 = vld [vmem:[%s269] sm:$0xff]
      %v302 = vld [vmem:[%s269 + $0x8] sm:$0xff]
      %v303 = vld [vmem:[%s269 + $0x10] sm:$0xff]
      %v304 = vld [vmem:[%s269 + $0x18] sm:$0xff]
      %s305 = smul.u32 %s18, 8
      %s306 = scalar_lea.vmem [#allocation2], %s305
      %v307 = vld [vmem:[%s306] sm:$0xff]
      %s308 = scalar_lea.vmem [#allocation3], %s305
      %v309 = vld [vmem:[%s308] sm:$0xff]
      loop: start=0, step=1, limit=8
      $region37: #{model_forward.4} parent=31 // loop_pre_header
        _
      $region38: #{model_forward.4} parent=31 // loop_header
        %s311 = sphi 0, %s315
        %p312 = scmp.ge.s32.totalorder %s311, 8
        %v316 = vphi %v307, %v470
        %v317 = vphi %v309, %v474
      $region39: #{model_forward.4} parent=31 // loop_header_branch
        %314 = sbr.rel (%p312) target = $region43
      $region40: #{model_forward.4} parent=31 // loop_body
        %p318 = scmp.eq.s32.totalorder %s18, 0
        %s319 = ssub.s32 7, %s311
        %s320 = scalar_select %p318, %s311, %s319
        %s321 = smul.u32 %s19, 8
        %s322 = sadd.s32 %s321, %s311
        %s323 = ssub.s32 7, %s322
        %s324 = scalar_select %p318, %s322, %s323
        %s325 = smul.u32 %s320, 8
        %s326 = scalar_lea.vmem %s258, %s325
        %v327 = vld [vmem:[%s326] sm:$0xff]
        %vm328 = vcmask 261120
        %v330 = vsel %vm328, %v316, 0
        %332 = vmatprep.subr.mxu0 0.0
        %333 = vmatpush1.msra.mxu0 %v301
        %334 = vmatprep.subr.mxu0 0.0
        %335 = vmatpush1.msra.mxu0 %v302
        %336 = vmatprep.subr.mxu0 0.0
        %337 = vmatpush1.msra.mxu0 %v303
        %338 = vmatprep.subr.mxu0 0.0
        %339 = vmatpush1.msra.mxu0 %v304
        %340 = vmatprep.subr.mxu0 0.0
        %341 = vmatpush1.msra.mxu0 0.0
        %342 = vmatprep.subr.mxu0 0.0
        %343 = vmatpush1.msra.mxu0 0.0
        %344 = vmatprep.subr.mxu0 0.0
        %345 = vmatpush1.msra.mxu0 0.0
        %346 = vmatprep.subr.mxu0 0.0
        %347 = vmatpush1.msra.mxu0 0.0
        %348 = vmatprep.subr.mxu0 0.0
        %349 = vmatpush1.msra.mxu0 0.0
        %350 = vmatprep.subr.mxu0 0.0
        %351 = vmatpush1.msra.mxu0 0.0
        %352 = vmatprep.subr.mxu0 0.0
        %353 = vmatpush1.msra.mxu0 0.0
        %354 = vmatprep.subr.mxu0 0.0
        %355 = vmatpush1.msra.mxu0 0.0
        %356 = vmatprep.subr.mxu0 0.0
        %357 = vmatpush1.msra.mxu0 0.0
        %358 = vmatprep.subr.mxu0 0.0
        %359 = vmatpush1.msra.mxu0 0.0
        %360 = vmatprep.subr.mxu0 0.0
        %361 = vmatpush1.msra.mxu0 0.0
        %362 = vmatprep.subr.mxu0 0.0
        %363 = vmatpush1.msra.mxu0 0.0
        %364 = vmatprep.subr.mxu0 0.0
        %365 = vmatpush1.msra.mxu0 0.0
        %366 = vmatprep.subr.mxu0 0.0
        %367 = vmatpush1.msra.mxu0 0.0
        %368 = vmatprep.subr.mxu0 0.0
        %369 = vmatpush1.msra.mxu0 0.0
        %370 = vmatprep.subr.mxu0 0.0
        %371 = vmatpush1.msra.mxu0 0.0
        %372 = vmatprep.subr.mxu0 0.0
        %373 = vmatpush1.msra.mxu0 0.0
        %374 = vmatprep.subr.mxu0 0.0
        %375 = vmatpush1.msra.mxu0 0.0
        %376 = vmatprep.subr.mxu0 0.0
        %377 = vmatpush1.msra.mxu0 0.0
        %378 = vmatprep.subr.mxu0 0.0
        %379 = vmatpush1.msra.mxu0 0.0
        %380 = vmatprep.subr.mxu0 0.0
        %381 = vmatpush1.msra.mxu0 0.0
        %382 = vmatprep.subr.mxu0 0.0
        %383 = vmatpush1.msra.mxu0 0.0
        %384 = vmatprep.subr.mxu0 0.0
        %385 = vmatpush1.msra.mxu0 0.0
        %386 = vmatprep.subr.mxu0 0.0
        %387 = vmatpush1.msra.mxu0 0.0
        %388 = vmatprep.subr.mxu0 0.0
        %389 = vmatpush1.msra.mxu0 0.0
        %390 = vmatprep.subr.mxu0 0.0
        %391 = vmatpush1.msra.mxu0 0.0
        %392 = vmatprep.subr.mxu0 0.0
        %393 = vmatpush1.msra.mxu0 0.0
        %394 = vmatprep.subr.mxu0 0.0
        %395 = vmatpush1.msra.mxu0 0.0
        %396 = vmatprep.mubr.f32.mxu0 0.0
        %397 = vmatmul.mubr.f32.gmra.mrb[0].mxu0 %v330
        %v398 = vpop.f32.mrb[0].mxu0
        %v399 = vadd.f32 0.0, %v398
        %v400 = vpop.f32.mrb[0].mxu0
        %401 = vdwg.mxu0
        %v402 = vadd.f32 %v327, %v399
        %v403 = vxor.u32 %v402, 2147483648
        %v404 = vmul.f32 %v403, 1.442695
        %v405 = vpow.pop %v404
        %v406 = vadd.f32 %v405, 1.0
        %v407 = vrcp.pop %v406
        %v408 = vmul.f32 1.0, %v407
        %v409 = vtanh.pop %v402
        %411 = vrot.lane.b32.xlu0 %v317, 32
        %v412 = vpop.permute.xlu0 %411
        %v414 = vmul.f32 %v408, %v412
        %416 = vrot.lane.b32.xlu0 %v409, 64
        %v417 = vpop.permute.xlu0 %416
        %v419 = vmul.f32 %v408, %v417
        %421 = vrot.lane.b32.xlu0 %v419, 32
        %v422 = vpop.permute.xlu0 %421
        %v424 = vadd.f32 %v414, %v422
        %v425 = vtanh.pop %v424
        %427 = vrot.lane.b32.xlu0 %v425, 64
        %v428 = vpop.permute.xlu0 %427
        %v430 = vmul.f32 %v408, %v428
        %s431 = scvt.s32.f32 %s324
        %v432 = vstv %s431
        %vm433 = vcmp.gt.f32.partialorder %v300, %v432
        %v434 = vsel %vm433, 1, 0
        %v435 = vcvt.s32.f32 %v434
        %437 = vset.pattern.permute.xlu0 0
        %438 = vperm.xlu0 %437, %v435
        %v439 = vpop.permute.xlu0 %438
        %v441 = vmul.f32 %v439, %v424
        %v442 = vsub.f32 1.0, %v435
        %444 = vset.pattern.permute.xlu0 0
        %445 = vperm.xlu0 %444, %v442
        %v446 = vpop.permute.xlu0 %445
        %v448 = vmul.f32 %v446, %v317
        %450 = vrot.lane.b32.xlu0 %v448, 32
        %v451 = vpop.permute.xlu0 %450
        %v453 = vadd.f32 %v441, %v451
        %v454 = vmul.f32 %v439, %v430
        %v455 = vmul.f32 %v446, %v316
        %457 = vrot.lane.b32.xlu0 %v455, 96
        %v458 = vpop.permute.xlu0 %457
        %v460 = vadd.f32 %v454, %v458
        %v461 = vmul.f32 %v460, %v439
        %463 = vrot.lane.b32.xlu0 %v461, 32
        %v464 = vpop.permute.xlu0 %463
        %s466 = scalar_lea.vmem %s283, %s325
        %467 = vst.msk [vmem:[%s466] sm:$0xff] %vm328, %v464
        %469 = vrot.lane.b32.xlu0 %v460, 32
        %v470 = vpop.permute.xlu0 %469
        %473 = vrot.lane.b32.xlu0 %v453, 96
        %v474 = vpop.permute.xlu0 %473
      $region41: #{model_forward.4} parent=31 // loop_footer
        %s315 = sadd.s32 1, %s311
      $region42: #{model_forward.4} parent=31 // loop_footer_branch
        %310 = sbr.rel target = $region38
      $region43: #{model_forward.4} parent=31 // loop_exit
        _
      %vm476 = vcmask 261120
      %477 = vst.msk [vmem:[%s306] sm:$0xff] %vm476, %v316
      %478 = vst.msk [vmem:[%s308] sm:$0xff] %vm476, %v317
      %s479 = ssub.s32 0, %s19
      %s480 = smul.u32 %s18, %s479
      %s481 = ssub.s32 1, %s18
      %s482 = smul.u32 %s481, %s19
      %s483 = sadd.s32 %s480, %s482
      %s484 = smul.u32 8, %s483
      %p485 = scmp.lt.s32.totalorder %s18, 1
      %s486 = scalar_select %p485, %s18, 1
      %p487 = scmp.lt.s32.totalorder %s484, 7
      %s488 = scalar_select %p487, %s484, 7
      %s489 = smul.addr %s486, 8
      %s490 = sadd.s32 %s488, %s489
      %s491 = smul.addr %s490, 8
      %s492 = scalar_lea.vmem %s3, %s491
      // Predicated region
      $region44: #{model_forward.4} parent=31 // pred_check
        %p493 = pneg %p141
      $region45: #{model_forward.4} parent=31 // pred_check_branch
        %495 = sbr.rel (%p493) target = $region47
      $region46: #{model_forward.4} parent=31 // pred_region
        %s496 = ssub.s32 0, %s19
        %s497 = smul.u32 %s18, %s496
        %s498 = ssub.s32 1, %s18
        %s499 = smul.u32 %s498, %s19
        %s500 = sadd.s32 %s497, %s499
        %s501 = smul.u32 8, %s500
      $region47: #{model_forward.4} parent=31 // pred_fallthru
        _
    $region32: #{model_forward.4} parent=5 // pred_fallthru
      _
    %p502 = scmp.le.s32.totalorder 2, %s9
    // Predicated region
    $region48: #{model_forward.4} parent=5 // pred_check
      %p503 = pneg %p502
    $region49: #{model_forward.4} parent=5 // pred_check_branch
      %505 = sbr.rel (%p503) target = $region51
    $region50: #{model_forward.4} parent=5 // pred_region
      %s506 = ssub.s32 %s9, 2
      // Predicated region
      $region52: #{model_forward.4} parent=50 // pred_check
        %p507 = pneg %p147
      $region53: #{model_forward.4} parent=50 // pred_check_branch
        %509 = sbr.rel (%p507) target = $region55
      $region54: #{model_forward.4} parent=50 // pred_region
        %s510 = ssub.s32 0, %s21
        %s511 = smul.u32 %s20, %s510
        %s512 = ssub.s32 1, %s20
        %s513 = smul.u32 %s512, %s21
        %s514 = sadd.s32 %s511, %s513
        %s515 = smul.u32 8, %s514
        %p516 = scmp.lt.s32.totalorder %s20, 1
        %s517 = scalar_select %p516, %s20, 1
        %p518 = scmp.lt.s32.totalorder %s515, 7
        %s519 = scalar_select %p518, %s515, 7
        %s520 = smul.addr %s517, 8
        %s521 = sadd.s32 %s519, %s520
        %s522 = smul.addr %s521, 8
        %s523 = scalar_lea.vmem %s3, %s522
      $region55: #{model_forward.4} parent=50 // pred_fallthru
        _
    $region51: #{model_forward.4} parent=5 // pred_fallthru
      _
  $region6: #{model_forward.4} parent=0 // loop_footer
    %s13 = sadd.s32 1, %s9
  $region7: #{model_forward.4} parent=0 // loop_footer_branch
    %8 = sbr.rel target = $region3
  $region8: #{model_forward.4} parent=0 // loop_exit
    _

// kernel: model_forward.5
$region0: #{model_forward.5}
  #allocation0 [shape = 'u32[]', space=smem, size = 0x4, offset = 0x4, fixed_abs, tag = 'smem constant byte address 0x4 - core index']
  #allocation1 [shape = 'u32[144,128]{1,0:T(1,128)}', space=vmem, size = 0x12000, scoped, tag = 'internal scratch']
  %s0 = inlined_call_operand.vmem [shape: f32[4,4], index: 0, kind: input, shape index: {}]
  %s1 = inlined_call_operand.vmem [shape: f32[4], index: 1, kind: input, shape index: {}]
  %s2 = inlined_call_operand.vmem [shape: f32[4], index: 2, kind: input, shape index: {}]
  %s3 = inlined_call_operand.vmem [shape: f32[8,4,8], index: 3, kind: input, shape index: {}]
  %s4 = inlined_call_operand.vmem [shape: f32[8,4,8], index: 4, kind: input, shape index: {}]
  %s5 = inlined_call_operand.vmem [shape: f32[1,8], index: 5, kind: input, shape index: {}]
  %s6 = inlined_call_operand.hbm [shape: f32[1,1,1], index: 6, kind: output, shape index: {}]
  %s7 = sld [smem:[#allocation0]]
  $region53: #{model_forward.5} parent=0
    _
  %s9 = ssub.s32 1, %s7
  %s10 = scalar_select 0, %s9, %s7
  $region1: #{model_forward.5} parent=0
    #allocation2 [shape = 'u8[2048]{0}', space=smem, size = 0x800, scoped, tag = 'input window, operand 0, single buffered']
    #allocation3 [shape = 's32[1]{0}', space=sflag, size = 0x4, scoped, tag = 'scoped memory for model_forward.5']
    #allocation4 [shape = 's32[1]{0}', space=sflag, size = 0x4, scoped, tag = 'scoped memory for model_forward.5']
    #allocation5 [shape = 'u8[512]{0}', space=smem, size = 0x200, scoped, tag = 'input window, operand 1, single buffered']
    #allocation6 [shape = 's32[1]{0}', space=sflag, size = 0x4, scoped, tag = 'scoped memory for model_forward.5']
    #allocation7 [shape = 'u8[512]{0}', space=smem, size = 0x200, scoped, tag = 'input window, operand 2, single buffered']
    #allocation8 [shape = 'u8[512]{0}', space=vmem, size = 0x400, scoped, tag = 'output window, operand 0, single buffered']
    %11 = vsyncpa [#allocation4], 0
    %12 = vsyncpa [#allocation6], 0
    %13 = vsyncpa [#allocation3], 0
    // Predicated region
    $region2: #{model_forward.5} parent=1 // pred_check
      _
    $region3: #{model_forward.5} parent=1 // pred_check_branch
      %15 = sbr.rel (0) target = $region5
    $region4: #{model_forward.5} parent=1 // pred_region
      %s17 = ssub.s32 64, 64
      %18 = vsyncadd [#allocation4], %s17
      %s20 = sshll.u32 %s0, 4
      %s21 = int_to_ptr.vmem [resolvable:$true] %s20
      %23 = dma.vmem_to_smem %s21, 64, [#allocation2], [#allocation4]
    $region5: #{model_forward.5} parent=1 // pred_fallthru
      _
    // Predicated region
    $region6: #{model_forward.5} parent=1 // pred_check
      _
    $region7: #{model_forward.5} parent=1 // pred_check_branch
      %25 = sbr.rel (0) target = $region9
    $region8: #{model_forward.5} parent=1 // pred_region
      %s27 = ssub.s32 16, 16
      %28 = vsyncadd [#allocation6], %s27
      %s30 = sshll.u32 %s1, 4
      %s31 = int_to_ptr.vmem [resolvable:$true] %s30
      %33 = dma.vmem_to_smem %s31, 16, [#allocation5], [#allocation6]
    $region9: #{model_forward.5} parent=1 // pred_fallthru
      _
    // Predicated region
    $region10: #{model_forward.5} parent=1 // pred_check
      _
    $region11: #{model_forward.5} parent=1 // pred_check_branch
      %35 = sbr.rel (0) target = $region13
    $region12: #{model_forward.5} parent=1 // pred_region
      %s37 = ssub.s32 16, 16
      %38 = vsyncadd [#allocation6], %s37
      %s40 = sshll.u32 %s2, 4
      %s41 = int_to_ptr.vmem [resolvable:$true] %s40
      %43 = dma.vmem_to_smem %s41, 16, [#allocation7], [#allocation6]
    $region13: #{model_forward.5} parent=1 // pred_fallthru
      _
    // Predicated region
    $region14: #{model_forward.5} parent=1 // pred_check
      _
    $region15: #{model_forward.5} parent=1 // pred_check_branch
      %45 = sbr.rel (0) target = $region17
    $region16: #{model_forward.5} parent=1 // pred_region
      _
    $region17: #{model_forward.5} parent=1 // pred_fallthru
      _
    // Predicated region
    $region18: #{model_forward.5} parent=1 // pred_check
      _
    $region19: #{model_forward.5} parent=1 // pred_check_branch
      %47 = sbr.rel (0) target = $region21
    $region20: #{model_forward.5} parent=1 // pred_region
      _
    $region21: #{model_forward.5} parent=1 // pred_fallthru
      _
    // Predicated region
    $region22: #{model_forward.5} parent=1 // pred_check
      _
    $region23: #{model_forward.5} parent=1 // pred_check_branch
      %49 = sbr.rel (0) target = $region25
    $region24: #{model_forward.5} parent=1 // pred_region
      _
    $region25: #{model_forward.5} parent=1 // pred_fallthru
      _
    // Predicated region
    $region26: #{model_forward.5} parent=1 // pred_check
      _
    $region27: #{model_forward.5} parent=1 // pred_check_branch
      %51 = sbr.rel (0) target = $region29
    $region28: #{model_forward.5} parent=1 // pred_region
      %52 = dma.done [#allocation4], 64
    $region29: #{model_forward.5} parent=1 // pred_fallthru
      _
    // Predicated region
    $region30: #{model_forward.5} parent=1 // pred_check
      _
    $region31: #{model_forward.5} parent=1 // pred_check_branch
      %54 = sbr.rel (0) target = $region33
    $region32: #{model_forward.5} parent=1 // pred_region
      %55 = dma.done [#allocation6], 16
    $region33: #{model_forward.5} parent=1 // pred_fallthru
      _
    // Predicated region
    $region34: #{model_forward.5} parent=1 // pred_check
      _
    $region35: #{model_forward.5} parent=1 // pred_check_branch
      %57 = sbr.rel (0) target = $region37
    $region36: #{model_forward.5} parent=1 // pred_region
      %58 = dma.done [#allocation6], 16
    $region37: #{model_forward.5} parent=1 // pred_fallthru
      _
    %59 = sfence
    %s60 = sld [smem:[#allocation2]]
    %s61 = sld [smem:[#allocation2 + $0x1]]
    %s62 = sld [smem:[#allocation2 + $0x2]]
    %s63 = sld [smem:[#allocation2 + $0x3]]
    %s64 = sld [smem:[#allocation2 + $0x80]]
    %s65 = sld [smem:[#allocation2 + $0x81]]
    %s66 = sld [smem:[#allocation2 + $0x82]]
    %s67 = sld [smem:[#allocation2 + $0x83]]
    %s68 = sld [smem:[#allocation2 + $0x100]]
    %s69 = sld [smem:[#allocation2 + $0x101]]
    %s70 = sld [smem:[#allocation2 + $0x102]]
    %s71 = sld [smem:[#allocation2 + $0x103]]
    %s72 = sld [smem:[#allocation2 + $0x180]]
    %s73 = sld [smem:[#allocation2 + $0x181]]
    %s74 = sld [smem:[#allocation2 + $0x182]]
    %s75 = sld [smem:[#allocation2 + $0x183]]
    %s76 = sld [smem:[#allocation5]]
    %s77 = sld [smem:[#allocation5 + $0x1]]
    %s78 = sld [smem:[#allocation5 + $0x2]]
    %s79 = sld [smem:[#allocation5 + $0x3]]
    %s80 = sld [smem:[#allocation7]]
    %s81 = sld [smem:[#allocation7 + $0x1]]
    %s82 = sld [smem:[#allocation7 + $0x2]]
    %s83 = sld [smem:[#allocation7 + $0x3]]
    %v84 = vld [vmem:[%s5] sm:$0x1]
    %vm85 = vcmp.gt.f32.partialorder %v84, 0.0
    %v86 = vsel %vm85, 1, 0
    %v87 = vcvt.s32.f32 %v86
    %v88 = vld [vmem:[%s3] sm:$0xf]
    %v89 = vld [vmem:[%s4] sm:$0xf]
    %v90 = vstv %s76
    %v91 = vadd.f32 %v90, %v88
    %v92 = vstv %s77
    %v93 = vadd.f32 %v92, %v88
    %v94 = vstv %s78
    %v95 = vadd.f32 %v94, %v88
    %v96 = vstv %s79
    %v97 = vadd.f32 %v96, %v88
    %v98 = vmul.f32 %v91, %v89
    %v99 = vmul.f32 %v93, %v89
    %v101 = vrot.slane %v99, 1
    %v103 = vadd.f32 %v98, %v101
    %v104 = vmul.f32 %v95, %v89
    %v106 = vrot.slane %v104, 2
    %v108 = vadd.f32 %v103, %v106
    %v109 = vmul.f32 %v97, %v89
    %v111 = vrot.slane %v109, 3
    %v113 = vadd.f32 %v108, %v111
    %v115 = vrot.slane %v93, 1
    %v118 = vrot.slane %v95, 2
    %v121 = vrot.slane %v97, 3
    %v124 = vrot.slane %v89, 1
    %v126 = vrot.slane %v89, 2
    %v128 = vrot.slane %v89, 3
    loop: start=1, step=1, limit=8
    $region38: #{model_forward.5} parent=1 // loop_pre_header
      _
    $region39: #{model_forward.5} parent=1 // loop_header
      %s131 = sphi 1, %s135
      %p132 = scmp.ge.s32.totalorder %s131, 8
      %v136 = vphi %v91, %v283
      %v137 = vphi %v115, %v284
      %v138 = vphi %v118, %v285
      %v139 = vphi %v121, %v286
      %v140 = vphi %v113, %v356
      %v141 = vphi %v89, %v357
      %v142 = vphi %v124, %v381
      %v143 = vphi %v126, %v384
      %v144 = vphi %v128, %v387
    $region40: #{model_forward.5} parent=1 // loop_header_branch
      %134 = sbr.rel (%p132) target = $region44
    $region41: #{model_forward.5} parent=1 // loop_body
      %s145 = smul.u32 %s131, 4
      %s146 = scalar_lea.vmem %s3, %s145
      %v147 = vld [vmem:[%s146] sm:$0xf]
      %s148 = scalar_lea.vmem %s4, %s145
      %v149 = vld [vmem:[%s148] sm:$0xf]
      %s150 = scvt.s32.f32 %s131
      %v151 = vstv %s150
      %vm152 = vcmp.gt.f32.partialorder %v84, %v151
      %v153 = vsel %vm152, 1, 0
      %v154 = vcvt.s32.f32 %v153
      %vm155 = vcmp.gt.f32.partialorder %v154, 0.0
      %v156 = vstv %s60
      %v157 = vadd.f32 %v136, %v156
      %v158 = vstv %s64
      %v159 = vadd.f32 %v137, %v158
      %v160 = vstv %s68
      %v161 = vadd.f32 %v138, %v160
      %v162 = vstv %s72
      %v163 = vadd.f32 %v139, %v162
      %v164 = vmax.f32 %v157, %v159
      %v165 = vmax.f32 %v164, %v161
      %v166 = vmax.f32 %v165, %v163
      %v167 = vsub.f32 %v157, %v166
      %v168 = vmul.f32 %v167, 1.442695
      %v169 = vpow.pop %v168
      %v170 = vsub.f32 %v159, %v166
      %v171 = vmul.f32 %v170, 1.442695
      %v172 = vpow.pop %v171
      %v173 = vadd.f32 %v169, %v172
      %v174 = vsub.f32 %v161, %v166
      %v175 = vmul.f32 %v174, 1.442695
      %v176 = vpow.pop %v175
      %v177 = vadd.f32 %v173, %v176
      %v178 = vsub.f32 %v163, %v166
      %v179 = vmul.f32 %v178, 1.442695
      %v180 = vpow.pop %v179
      %v181 = vadd.f32 %v177, %v180
      %v182 = vlog2.pop %v181
      %v183 = vmul.f32 %v182, 0.6931472
      %v184 = vadd.f32 %v166, %v183
      %v185 = vadd.f32 %v184, %v147
      %v186 = vstv %s61
      %v187 = vadd.f32 %v136, %v186
      %v188 = vstv %s65
      %v189 = vadd.f32 %v137, %v188
      %v190 = vstv %s69
      %v191 = vadd.f32 %v138, %v190
      %v192 = vstv %s73
      %v193 = vadd.f32 %v139, %v192
      %v194 = vmax.f32 %v187, %v189
      %v195 = vmax.f32 %v194, %v191
      %v196 = vmax.f32 %v195, %v193
      %v197 = vsub.f32 %v187, %v196
      %v198 = vmul.f32 %v197, 1.442695
      %v199 = vpow.pop %v198
      %v200 = vsub.f32 %v189, %v196
      %v201 = vmul.f32 %v200, 1.442695
      %v202 = vpow.pop %v201
      %v203 = vadd.f32 %v199, %v202
      %v204 = vsub.f32 %v191, %v196
      %v205 = vmul.f32 %v204, 1.442695
      %v206 = vpow.pop %v205
      %v207 = vadd.f32 %v203, %v206
      %v208 = vsub.f32 %v193, %v196
      %v209 = vmul.f32 %v208, 1.442695
      %v210 = vpow.pop %v209
      %v211 = vadd.f32 %v207, %v210
      %v212 = vlog2.pop %v211
      %v213 = vmul.f32 %v212, 0.6931472
      %v214 = vadd.f32 %v196, %v213
      %v216 = vrot.slane %v147, 1
      %v218 = vadd.f32 %v214, %v216
      %v219 = vstv %s62
      %v220 = vadd.f32 %v136, %v219
      %v221 = vstv %s66
      %v222 = vadd.f32 %v137, %v221
      %v223 = vstv %s70
      %v224 = vadd.f32 %v138, %v223
      %v225 = vstv %s74
      %v226 = vadd.f32 %v139, %v225
      %v227 = vmax.f32 %v220, %v222
      %v228 = vmax.f32 %v227, %v224
      %v229 = vmax.f32 %v228, %v226
      %v230 = vsub.f32 %v220, %v229
      %v231 = vmul.f32 %v230, 1.442695
      %v232 = vpow.pop %v231
      %v233 = vsub.f32 %v222, %v229
      %v234 = vmul.f32 %v233, 1.442695
      %v235 = vpow.pop %v234
      %v236 = vadd.f32 %v232, %v235
      %v237 = vsub.f32 %v224, %v229
      %v238 = vmul.f32 %v237, 1.442695
      %v239 = vpow.pop %v238
      %v240 = vadd.f32 %v236, %v239
      %v241 = vsub.f32 %v226, %v229
      %v242 = vmul.f32 %v241, 1.442695
      %v243 = vpow.pop %v242
      %v244 = vadd.f32 %v240, %v243
      %v245 = vlog2.pop %v244
      %v246 = vmul.f32 %v245, 0.6931472
      %v247 = vadd.f32 %v229, %v246
      %v248 = vrot.slane %v147, 2
      %v250 = vadd.f32 %v247, %v248
      %v251 = vstv %s63
      %v252 = vadd.f32 %v136, %v251
      %v253 = vstv %s67
      %v254 = vadd.f32 %v137, %v253
      %v255 = vstv %s71
      %v256 = vadd.f32 %v138, %v255
      %v257 = vstv %s75
      %v258 = vadd.f32 %v139, %v257
      %v259 = vmax.f32 %v252, %v254
      %v260 = vmax.f32 %v259, %v256
      %v261 = vmax.f32 %v260, %v258
      %v262 = vsub.f32 %v252, %v261
      %v263 = vmul.f32 %v262, 1.442695
      %v264 = vpow.pop %v263
      %v265 = vsub.f32 %v254, %v261
      %v266 = vmul.f32 %v265, 1.442695
      %v267 = vpow.pop %v266
      %v268 = vadd.f32 %v264, %v267
      %v269 = vsub.f32 %v256, %v261
      %v270 = vmul.f32 %v269, 1.442695
      %v271 = vpow.pop %v270
      %v272 = vadd.f32 %v268, %v271
      %v273 = vsub.f32 %v258, %v261
      %v274 = vmul.f32 %v273, 1.442695
      %v275 = vpow.pop %v274
      %v276 = vadd.f32 %v272, %v275
      %v277 = vlog2.pop %v276
      %v278 = vmul.f32 %v277, 0.6931472
      %v279 = vadd.f32 %v261, %v278
      %v280 = vrot.slane %v147, 3
      %v282 = vadd.f32 %v279, %v280
      %v283 = vsel %vm155, %v185, %v136
      %v284 = vsel %vm155, %v218, %v137
      %v285 = vsel %vm155, %v250, %v138
      %v286 = vsel %vm155, %v282, %v139
      %v287 = vmul.f32 %v156, %v141
      %v288 = vmul.f32 %v287, %v149
      %v289 = vadd.f32 %v288, 0.0
      %v290 = vmul.f32 %v186, %v141
      %v292 = vrot.slane %v149, 1
      %v294 = vmul.f32 %v290, %v292
      %v295 = vadd.f32 %v289, %v294
      %v296 = vmul.f32 %v219, %v141
      %v297 = vrot.slane %v149, 2
      %v299 = vmul.f32 %v296, %v297
      %v300 = vadd.f32 %v295, %v299
      %v301 = vmul.f32 %v251, %v141
      %v302 = vrot.slane %v149, 3
      %v304 = vmul.f32 %v301, %v302
      %v305 = vadd.f32 %v300, %v304
      %v306 = vmul.f32 %v158, %v142
      %v307 = vmul.f32 %v306, %v149
      %v308 = vadd.f32 %v305, %v307
      %v309 = vmul.f32 %v188, %v142
      %v310 = vmul.f32 %v309, %v292
      %v311 = vadd.f32 %v308, %v310
      %v312 = vmul.f32 %v221, %v142
      %v313 = vmul.f32 %v312, %v297
      %v314 = vadd.f32 %v311, %v313
      %v315 = vmul.f32 %v253, %v142
      %v316 = vmul.f32 %v315, %v302
      %v317 = vadd.f32 %v314, %v316
      %v318 = vmul.f32 %v160, %v143
      %v319 = vmul.f32 %v318, %v149
      %v320 = vadd.f32 %v317, %v319
      %v321 = vmul.f32 %v190, %v143
      %v322 = vmul.f32 %v321, %v292
      %v323 = vadd.f32 %v320, %v322
      %v324 = vmul.f32 %v223, %v143
      %v325 = vmul.f32 %v324, %v297
      %v326 = vadd.f32 %v323, %v325
      %v327 = vmul.f32 %v255, %v143
      %v328 = vmul.f32 %v327, %v302
      %v329 = vadd.f32 %v326, %v328
      %v330 = vmul.f32 %v162, %v144
      %v331 = vmul.f32 %v330, %v149
      %v332 = vadd.f32 %v329, %v331
      %v333 = vmul.f32 %v192, %v144
      %v334 = vmul.f32 %v333, %v292
      %v335 = vadd.f32 %v332, %v334
      %v336 = vmul.f32 %v225, %v144
      %v337 = vmul.f32 %v336, %v297
      %v338 = vadd.f32 %v335, %v337
      %v339 = vmul.f32 %v257, %v144
      %v340 = vmul.f32 %v339, %v302
      %v341 = vadd.f32 %v338, %v340
      %v342 = vmul.f32 %v147, %v149
      %v343 = vadd.f32 %v342, 0.0
      %v345 = vrot.slane %v342, 1
      %v347 = vadd.f32 %v343, %v345
      %v348 = vrot.slane %v342, 2
      %v350 = vadd.f32 %v347, %v348
      %v351 = vrot.slane %v342, 3
      %v353 = vadd.f32 %v350, %v351
      %v354 = vadd.f32 %v341, %v353
      %v355 = vmul.f32 %v154, %v354
      %v356 = vadd.f32 %v140, %v355
      %v357 = vsel %vm155, %v149, %v141
      %v359 = vunpack.c.l.s4 1966171168
      %v360 = vunpack.c.0.s8 %v359
      %v361 = vlaneseq
      %v362 = vshrl.u32 %v361, 7
      %v363 = vsub.s32 %v360, %v362
      %v364 = vrot.slane %v149, %v363
      %v365 = vcombine.high %v364, %v364
      %v367 = vunpack.c.l.s4 1966171168
      %v368 = vunpack.c.0.s8 %v367
      %v369 = vlaneseq
      %v370 = vshrl.u32 %v369, 7
      %v371 = vsub.s32 %v368, %v370
      %v372 = vrot.slane %v364, %v371
      %v374 = vunpack.c.l.s4 1966171168
      %v375 = vunpack.c.0.s8 %v374
      %v376 = vlaneseq
      %v377 = vshrl.u32 %v376, 7
      %v378 = vsub.s32 %v375, %v377
      %v379 = vrot.slane %v365, %v378
      %v381 = vsel %vm155, %v379, %v142
      %v382 = vcombine.high %v372, %v372
      %v384 = vsel %vm155, %v382, %v143
      %v385 = vcombine.high %v379, %v379
      %v387 = vsel %vm155, %v385, %v144
    $region42: #{model_forward.5} parent=1 // loop_footer
      %s135 = sadd.s32 1, %s131
    $region43: #{model_forward.5} parent=1 // loop_footer_branch
      %130 = sbr.rel target = $region39
    $region44: #{model_forward.5} parent=1 // loop_exit
      _
    %v388 = vstv %s80
    %v389 = vadd.f32 %v136, %v388
    %v390 = vstv %s81
    %v391 = vadd.f32 %v137, %v390
    %v392 = vstv %s82
    %v393 = vadd.f32 %v138, %v392
    %v394 = vstv %s83
    %v395 = vadd.f32 %v139, %v394
    %v396 = vmax.f32 %v389, %v391
    %v397 = vmax.f32 %v396, %v393
    %v398 = vmax.f32 %v397, %v395
    %v399 = vsub.f32 %v389, %v398
    %v400 = vmul.f32 %v399, 1.442695
    %v401 = vpow.pop %v400
    %v402 = vsub.f32 %v391, %v398
    %v403 = vmul.f32 %v402, 1.442695
    %v404 = vpow.pop %v403
    %v405 = vadd.f32 %v401, %v404
    %v406 = vsub.f32 %v393, %v398
    %v407 = vmul.f32 %v406, 1.442695
    %v408 = vpow.pop %v407
    %v409 = vadd.f32 %v405, %v408
    %v410 = vsub.f32 %v395, %v398
    %v411 = vmul.f32 %v410, 1.442695
    %v412 = vpow.pop %v411
    %v413 = vadd.f32 %v409, %v412
    %v414 = vlog2.pop %v413
    %v415 = vmul.f32 %v414, 0.6931472
    %v416 = vadd.f32 %v398, %v415
    %v417 = vmul.f32 %v388, %v141
    %v418 = vadd.f32 %v140, %v417
    %v419 = vmul.f32 %v390, %v142
    %v420 = vadd.f32 %v418, %v419
    %v421 = vmul.f32 %v392, %v143
    %v422 = vadd.f32 %v420, %v421
    %v423 = vmul.f32 %v394, %v144
    %v424 = vadd.f32 %v422, %v423
    %v425 = vsub.f32 %v416, %v424
    %v426 = vmul.f32 %v425, %v87
    %vm427 = vcmask 57344
    %v428 = vsel %vm427, %v426, 0.0
    %429 = vadd.xlane.f32.xlu0 %v428
    %v430 = vpop.xlane.xlu0 %429
    %vm431 = vcmask 0
    %432 = vst.msk [vmem:[#allocation8] sm:$0x1] %vm431, %v430
    // Predicated region
    $region45: #{model_forward.5} parent=1 // pred_check
      _
    $region46: #{model_forward.5} parent=1 // pred_check_branch
      %434 = sbr.rel (0) target = $region48
    $region47: #{model_forward.5} parent=1 // pred_region
      %s436 = ssub.s32 16, 16
      %437 = vsyncadd [#allocation3], %s436
      %s439 = sshll.u32 [#allocation8], 4
      %s440 = int_to_ptr.vmem [resolvable:$true] %s439
      %442 = dma.vmem_to_hbm [thread:$0]  %s440, 16, %s6, [#allocation3]
    $region48: #{model_forward.5} parent=1 // pred_fallthru
      _
    // Predicated region
    $region49: #{model_forward.5} parent=1 // pred_check
      _
    $region50: #{model_forward.5} parent=1 // pred_check_branch
      %444 = sbr.rel (0) target = $region52
    $region51: #{model_forward.5} parent=1 // pred_region
      %445 = dma.done [#allocation3], 16
    $region52: #{model_forward.5} parent=1 // pred_fallthru
      _
    %446 = vsyncpa [#allocation3], 1
    %447 = vsyncpa [#allocation4], 1
    %448 = vsyncpa [#allocation6], 1

</llo_original>
